<compile_context>
chip_gen: v7x
topology: tpu7x:2x2x1
jax: 0.10.0
libtpu: 0.0.40
codegen_flags: <defaults>
</compile_context>

<pallas_src>
import functools

import jax
import jax.numpy as jnp
from jax.experimental import pallas as pl
from jax.experimental.pallas import tpu as pltpu


def _round_up(v, m):
    return ((v + m - 1) // m) * m


def _pad_to(arr, shape):
    return jnp.pad(arr, [(0, t - s) for s, t in zip(arr.shape, shape)])


# ------------------------------ fused kernel ------------------------------- #

def _fused_ir_kernel(
        x_hbm,                       # (N, H+2, W+2, Cin_p)   HBM (pl.ANY)
        w_exp_ref, s1_ref, b1_ref,   # (Cin_p, Hid_p), (1, Hid_p), (1, Hid_p)
        w_dw_ref, s2_ref, b2_ref,    # (3, 3, Hid_p),  (1, Hid_p), (1, Hid_p)
        w_proj_ref, s3_ref, b3_ref,  # (Hid_p, Cout_p), (1, Cout_p), (1, Cout_p)
        o_ref,                       # (1, TB, Wout, Cout_p)  VMEM block
        xband, hid, dma_sem,         # scratch
        *, stride, tb, h, w, expand, use_res):
    b = pl.program_id(0)
    r = pl.program_id(1)

    rows_in, wp2, _ = xband.shape    # rows_in = (tb-1)*stride + 3, wp2 = w + 2
    hid_p = hid.shape[-1]
    wout = o_ref.shape[2]

    # ---- fetch this band's input rows (incl. 1-row halo) from HBM ---------
    row0 = r * (tb * stride)
    if (tb * stride) % 8 == 0:
        row0 = pl.multiple_of(row0, 8)
    cp = pltpu.make_async_copy(x_hbm.at[b, pl.ds(row0, rows_in)], xband,
                               dma_sem.at[0])
    cp.start()
    cp.wait()

    # ---- stage 1: 1x1 expand conv + BN + ReLU6, kept in VMEM ---------------
    # The depthwise stage needs *zero* padding of the hidden activation, and
    # expand(0) != 0 because of the folded BN bias, so the border pixels of
    # the image are explicitly masked to zero.
    col = jax.lax.broadcasted_iota(jnp.int32, (wp2, 1), 0)
    col_ok = (col >= 1) & (col <= w)
    if expand:
        w_exp = w_exp_ref[...]
        s1 = s1_ref[...]
        b1 = b1_ref[...]
    # Per-row 2-D matmuls keep the lane (channel) axis untouched and avoid
    # in-kernel reshapes of non-tile-aligned 3-D values.
    for i in range(rows_in):
        row_ok = ((row0 + i) >= 1) & ((row0 + i) <= h)
        xrow = xband[i]                                        # (wp2, Cin_p)
        if expand:
            hrow = jnp.dot(xrow.astype(w_exp.dtype), w_exp,
                           preferred_element_type=jnp.float32)
            hrow = jnp.clip(hrow * s1 + b1, 0.0, 6.0)
        else:
            hrow = xrow.astype(jnp.float32)
        hid[i] = jnp.where(col_ok & row_ok, hrow, 0.0)

    # ---- stage 2: 3x3 depthwise conv + BN + ReLU6 --------------------------
    acc = jnp.zeros((tb, wout, hid_p), jnp.float32)
    for ki in range(3):
        for kj in range(3):
            if stride == 1:
                patch = hid[pl.ds(ki, tb), pl.ds(kj, wout), :]
            else:
                # TODO(synk): stride=2 uses sublane-strided loads; an even/odd
                # column decomposition would keep the vld slot cooler.
                patch = hid[pl.ds(ki, tb, stride=stride),
                            pl.ds(kj, wout, stride=stride), :]
            acc = acc + patch * w_dw_ref[ki, kj:kj + 1, :]
    ydw = jnp.clip(acc * s2_ref[...] + b2_ref[...], 0.0, 6.0)

    # ---- stage 3: 1x1 project conv + BN (+ residual from the same band) ----
    w_proj = w_proj_ref[...]
    s3 = s3_ref[...]
    b3 = b3_ref[...]
    for oi in range(tb):
        prow = jnp.dot(ydw[oi].astype(w_proj.dtype), w_proj,
                       preferred_element_type=jnp.float32)     # (Wout, Cout_p)
        prow = prow * s3 + b3
        if use_res:
            # residual rows/cols are already resident in the xband scratch
            prow = prow + xband[1 + oi, pl.ds(1, w), :].astype(jnp.float32)
        o_ref[0, oi] = prow.astype(o_ref.dtype)


# ------------------------------ module wrapper ------------------------------ #

def inverted_residual(x_nchw, params, *, inp, oup, stride, expand_ratio,
                      band_rows=8):
    assert stride in (1, 2)
    hidden = int(round(inp * expand_ratio))
    expand = expand_ratio != 1
    use_res = (stride == 1) and (inp == oup)

    n, cin, h, w = x_nchw.shape
    assert cin == inp

    lane = 128
    cin_p = _round_up(inp, lane)
    hid_p = _round_up(hidden, lane)
    cout_p = _round_up(oup, lane)

    h_out = (h + 2 - 3) // stride + 1
    w_out = (w + 2 - 3) // stride + 1

    # Largest band size <= band_rows that divides the output height.
    tb = min(band_rows, h_out)
    while h_out % tb:
        tb -= 1
    n_bands = h_out // tb
    rows_in = (tb - 1) * stride + 3
    wp2 = w + 2

    # NCHW -> NHWC; zero-pad channels to a lane multiple and the spatial dims
    # by the 1-pixel depthwise halo.  (Only the small *input* tensor is padded;
    # the expanded hidden tensor never exists in HBM.)
    dt = x_nchw.dtype
    x = jnp.transpose(x_nchw, (0, 2, 3, 1))
    x = jnp.pad(x, ((0, 0), (1, 1), (1, 1), (0, cin_p - inp)))

    # Zero-padded folded parameters (padded scale/bias lanes MUST be zero so
    # the padded channels stay exactly zero through every stage).
    if expand:
        w_exp = _pad_to(params["w_exp"].astype(dt), (cin_p, hid_p))
        s1 = _pad_to(params["s1"].reshape(1, hidden).astype(jnp.float32), (1, hid_p))
        b1 = _pad_to(params["b1"].reshape(1, hidden).astype(jnp.float32), (1, hid_p))
    else:
        w_exp = jnp.zeros((cin_p, hid_p), dt)
        s1 = jnp.zeros((1, hid_p), jnp.float32)
        b1 = jnp.zeros((1, hid_p), jnp.float32)
    w_dw = _pad_to(params["w_dw"].astype(jnp.float32), (3, 3, hid_p))
    s2 = _pad_to(params["s2"].reshape(1, hidden).astype(jnp.float32), (1, hid_p))
    b2 = _pad_to(params["b2"].reshape(1, hidden).astype(jnp.float32), (1, hid_p))
    w_proj = _pad_to(params["w_proj"].astype(dt), (hid_p, cout_p))
    s3 = _pad_to(params["s3"].reshape(1, oup).astype(jnp.float32), (1, cout_p))
    b3 = _pad_to(params["b3"].reshape(1, oup).astype(jnp.float32), (1, cout_p))

    kernel = functools.partial(
        _fused_ir_kernel,
        stride=stride, tb=tb, h=h, w=w, expand=expand, use_res=use_res)

    const2 = lambda bi, ri: (0, 0)
    const3 = lambda bi, ri: (0, 0, 0)

    out = pl.pallas_call(
        kernel,
        out_shape=jax.ShapeDtypeStruct((n, h_out, w_out, cout_p), dt),
        grid=(n, n_bands),
        in_specs=[
            pl.BlockSpec(memory_space=pl.ANY),        # x stays in HBM
            pl.BlockSpec((cin_p, hid_p), const2),     # w_exp   (resident)
            pl.BlockSpec((1, hid_p), const2),         # s1
            pl.BlockSpec((1, hid_p), const2),         # b1
            pl.BlockSpec((3, 3, hid_p), const3),      # w_dw
            pl.BlockSpec((1, hid_p), const2),         # s2
            pl.BlockSpec((1, hid_p), const2),         # b2
            pl.BlockSpec((hid_p, cout_p), const2),    # w_proj
            pl.BlockSpec((1, cout_p), const2),        # s3
            pl.BlockSpec((1, cout_p), const2),        # b3
        ],
        out_specs=pl.BlockSpec((1, tb, w_out, cout_p),
                               lambda bi, ri: (bi, ri, 0, 0)),
        scratch_shapes=[
            pltpu.VMEM((rows_in, wp2, cin_p), dt),          # input band + halo
            pltpu.VMEM((rows_in, wp2, hid_p), jnp.float32),  # hidden band
            pltpu.SemaphoreType.DMA((1,)),
        ],
        compiler_params=pltpu.CompilerParams(
            dimension_semantics=("parallel", "parallel")),
    )(x, w_exp, s1, b1, w_dw, s2, b2, w_proj, s3, b3)

    out = out[..., :oup]                      # drop lane-padding channels
    return jnp.transpose(out, (0, 3, 1, 2))   # NHWC -> NCHW


# --------------------------- deterministic params --------------------------- #

def init_params(key, inp, oup, expand_ratio):
    hidden = int(round(inp * expand_ratio))
    eps = 1e-5
    keys = jax.random.split(key, 16)

    def fold_bn(kg, kb, km, kv, c):
        gamma = 1.0 + 0.1 * jax.random.normal(kg, (c,), jnp.float32)
        beta = 0.1 * jax.random.normal(kb, (c,), jnp.float32)
        mean = 0.1 * jax.random.normal(km, (c,), jnp.float32)
        var = jax.random.uniform(kv, (c,), jnp.float32, 0.5, 1.5)
        scale = gamma / jnp.sqrt(var + eps)
        bias = beta - mean * scale
        return scale, bias

    p = {}
    # expand 1x1 conv (PyTorch weight (hidden, inp, 1, 1)) -> (inp, hidden)
    w_exp = 0.1 * jax.random.normal(keys[0], (hidden, inp, 1, 1), jnp.float32)
    p["w_exp"] = jnp.transpose(w_exp[:, :, 0, 0], (1, 0))
    p["s1"], p["b1"] = fold_bn(keys[1], keys[2], keys[3], keys[4], hidden)
    # depthwise 3x3 conv (PyTorch weight (hidden, 1, 3, 3)) -> (3, 3, hidden)
    w_dw = 0.1 * jax.random.normal(keys[5], (hidden, 1, 3, 3), jnp.float32)
    p["w_dw"] = jnp.transpose(w_dw[:, 0, :, :], (1, 2, 0))
    p["s2"], p["b2"] = fold_bn(keys[6], keys[7], keys[8], keys[9], hidden)
    # project 1x1 conv (PyTorch weight (oup, hidden, 1, 1)) -> (hidden, oup)
    w_proj = 0.1 * jax.random.normal(keys[10], (oup, hidden, 1, 1), jnp.float32)
    p["w_proj"] = jnp.transpose(w_proj[:, :, 0, 0], (1, 0))
    p["s3"], p["b3"] = fold_bn(keys[11], keys[12], keys[13], keys[14], oup)
    return p


# ------------------------------- pure-JAX ref ------------------------------- #

def ref_forward(x_nhwc, p, stride, expand_ratio, use_res):
    h = x_nhwc
    if expand_ratio != 1:
        h = jnp.einsum("nhwc,cd->nhwd", h, p["w_exp"])
        h = jnp.clip(h * p["s1"] + p["b1"], 0.0, 6.0)
    c = h.shape[-1]
    dw = p["w_dw"].reshape(3, 3, 1, c)
    h = jax.lax.conv_general_dilated(
        h, dw, window_strides=(stride, stride), padding=((1, 1), (1, 1)),
        dimension_numbers=("NHWC", "HWIO", "NHWC"), feature_group_count=c)
    h = jnp.clip(h * p["s2"] + p["b2"], 0.0, 6.0)
    y = jnp.einsum("nhwc,cd->nhwd", h, p["w_proj"])
    y = y * p["s3"] + p["b3"]
    if use_res:
        y = y + x_nhwc
    return y


# ----------------------------------- main ----------------------------------- #

if __name__ == "__main__":
    key = jax.random.PRNGKey(0)
    k_x, k_p = jax.random.split(key)

    N, INP, H, W = 2, 4, 16, 16
    OUP, STRIDE, EXPAND = 4, 1, 4  # use_res_connect = True

    x_nchw = jax.random.normal(k_x, (N, INP, H, W), dtype=jnp.float32)
    params = init_params(k_p, INP, OUP, EXPAND)

    out = inverted_residual(x_nchw, params, inp=INP, oup=OUP,
                            stride=STRIDE, expand_ratio=EXPAND)
    out = jax.block_until_ready(out)

    # correctness check against a pure-JAX reference
    x_nhwc = jnp.transpose(x_nchw, (0, 2, 3, 1))
    ref = ref_forward(x_nhwc, params, STRIDE, EXPAND,
                      use_res=(STRIDE == 1 and INP == OUP))
    ref = jnp.transpose(ref, (0, 3, 1, 2))

    assert out.shape == (N, OUP, H, W)
    assert jnp.allclose(out, ref, atol=1e-4, rtol=1e-4), "mismatch vs reference"
    print("KERNEL_OK")
</pallas_src>

<mosaic_0001>
module attributes {stable_mosaic.version = 11 : i64} {
  func.func @_fused_ir_kernel(%arg0: i32, %arg1: i32, %arg2: memref<2x18x18x128xf32, #tpu.memory_space<any>>, %arg3: memref<128x128xf32, #tpu.memory_space<vmem>>, %arg4: memref<1x128xf32, #tpu.memory_space<vmem>>, %arg5: memref<1x128xf32, #tpu.memory_space<vmem>>, %arg6: memref<3x3x128xf32, #tpu.memory_space<vmem>>, %arg7: memref<1x128xf32, #tpu.memory_space<vmem>>, %arg8: memref<1x128xf32, #tpu.memory_space<vmem>>, %arg9: memref<128x128xf32, #tpu.memory_space<vmem>>, %arg10: memref<1x128xf32, #tpu.memory_space<vmem>>, %arg11: memref<1x128xf32, #tpu.memory_space<vmem>>, %arg12: memref<1x8x16x128xf32, #tpu.memory_space<vmem>>, %arg13: memref<10x18x128xf32, #tpu.memory_space<vmem>>, %arg14: memref<10x18x128xf32, #tpu.memory_space<vmem>>, %arg15: memref<1x!tpu.dma_semaphore, #tpu.memory_space<semaphore_mem>>) attributes {dimension_semantics = [#tpu.dimension_semantics<parallel>, #tpu.dimension_semantics<parallel>], iteration_bounds = array<i64: 2, 2>, scalar_prefetch = 0 : i64, scratch_operands = 3 : i64, tpu.core_type = #tpu.core_type<tc>, window_params = [{}, {pipeline_mode = #tpu.pipeline_mode<synchronous>, transform_indices = @transform_1, window_bounds = array<i64: 128, 128>}, {pipeline_mode = #tpu.pipeline_mode<synchronous>, transform_indices = @transform_2, window_bounds = array<i64: 1, 128>}, {pipeline_mode = #tpu.pipeline_mode<synchronous>, transform_indices = @transform_3, window_bounds = array<i64: 1, 128>}, {pipeline_mode = #tpu.pipeline_mode<synchronous>, transform_indices = @transform_4, window_bounds = array<i64: 3, 3, 128>}, {pipeline_mode = #tpu.pipeline_mode<synchronous>, transform_indices = @transform_5, window_bounds = array<i64: 1, 128>}, {pipeline_mode = #tpu.pipeline_mode<synchronous>, transform_indices = @transform_6, window_bounds = array<i64: 1, 128>}, {pipeline_mode = #tpu.pipeline_mode<synchronous>, transform_indices = @transform_7, window_bounds = array<i64: 128, 128>}, {pipeline_mode = #tpu.pipeline_mode<synchronous>, transform_indices = @transform_8, window_bounds = array<i64: 1, 128>}, {pipeline_mode = #tpu.pipeline_mode<synchronous>, transform_indices = @transform_9, window_bounds = array<i64: 1, 128>}, {transform_indices = @transform_10, window_bounds = array<i64: 1, 8, 16, 128>}]} {
    %c8_i32 = arith.constant 8 : i32
    %0 = arith.muli %arg1, %c8_i32 : i32
    %1 = tpu.assume_multiple %0, 8 : i32
    %c0_i32 = arith.constant 0 : i32
    %c0_i32_0 = arith.constant 0 : i32
    %c0_i32_1 = arith.constant 0 : i32
    %2 = tpu.memref_slice %arg2[%arg0, %1, %c0_i32_0, %c0_i32_1] : memref<2x18x18x128xf32, #tpu.memory_space<any>> -> memref<1x10x18x128xf32, #tpu.memory_space<any>>
    %3 = tpu.memref_squeeze %2 : memref<1x10x18x128xf32, #tpu.memory_space<any>> -> memref<10x18x128xf32, #tpu.memory_space<any>>
    %4 = tpu.memref_slice %arg15[%c0_i32] : memref<1x!tpu.dma_semaphore, #tpu.memory_space<semaphore_mem>> -> memref<1x!tpu.dma_semaphore, #tpu.memory_space<semaphore_mem>>
    %5 = tpu.memref_squeeze %4 : memref<1x!tpu.dma_semaphore, #tpu.memory_space<semaphore_mem>> -> memref<!tpu.dma_semaphore, #tpu.memory_space<semaphore_mem>>
    tpu.enqueue_dma source(%3 : memref<10x18x128xf32, #tpu.memory_space<any>>) target(%arg13 : memref<10x18x128xf32, #tpu.memory_space<vmem>>) target_semaphore(%5 : memref<!tpu.dma_semaphore, #tpu.memory_space<semaphore_mem>>)
    %c0_i32_2 = arith.constant 0 : i32
    %c0_i32_3 = arith.constant 0 : i32
    %c0_i32_4 = arith.constant 0 : i32
    %6 = tpu.memref_slice %arg2[%arg0, %1, %c0_i32_3, %c0_i32_4] : memref<2x18x18x128xf32, #tpu.memory_space<any>> -> memref<1x10x18x128xf32, #tpu.memory_space<any>>
    %7 = tpu.memref_squeeze %6 : memref<1x10x18x128xf32, #tpu.memory_space<any>> -> memref<10x18x128xf32, #tpu.memory_space<any>>
    %8 = tpu.memref_slice %arg15[%c0_i32_2] : memref<1x!tpu.dma_semaphore, #tpu.memory_space<semaphore_mem>> -> memref<1x!tpu.dma_semaphore, #tpu.memory_space<semaphore_mem>>
    %9 = tpu.memref_squeeze %8 : memref<1x!tpu.dma_semaphore, #tpu.memory_space<semaphore_mem>> -> memref<!tpu.dma_semaphore, #tpu.memory_space<semaphore_mem>>
    tpu.wait_dma2 semaphore(%9 : memref<!tpu.dma_semaphore, #tpu.memory_space<semaphore_mem>>) src(%7 : memref<10x18x128xf32, #tpu.memory_space<any>>) dst(%arg13 : memref<10x18x128xf32, #tpu.memory_space<vmem>>)
    %10 = tpu.iota {dimensions = array<i32: 0>} : vector<18x1xi32>
    %c1_i32 = arith.constant 1 : i32
    %11 = vector.broadcast %c1_i32 : i32 to vector<18x1xi32>
    %12 = arith.cmpi sge, %10, %11 : vector<18x1xi32>
    %c16_i32 = arith.constant 16 : i32
    %13 = vector.broadcast %c16_i32 : i32 to vector<18x1xi32>
    %14 = arith.cmpi sle, %10, %13 : vector<18x1xi32>
    %15 = arith.andi %12, %14 : vector<18x1xi1>
    %c0 = arith.constant 0 : index
    %c0_5 = arith.constant 0 : index
    %16 = vector.load %arg3[%c0, %c0_5] : memref<128x128xf32, #tpu.memory_space<vmem>>, vector<128x128xf32>
    %c0_6 = arith.constant 0 : index
    %c0_7 = arith.constant 0 : index
    %17 = vector.load %arg4[%c0_6, %c0_7] : memref<1x128xf32, #tpu.memory_space<vmem>>, vector<1x128xf32>
    %c0_8 = arith.constant 0 : index
    %c0_9 = arith.constant 0 : index
    %18 = vector.load %arg5[%c0_8, %c0_9] : memref<1x128xf32, #tpu.memory_space<vmem>>, vector<1x128xf32>
    %c0_i32_10 = arith.constant 0 : i32
    %19 = arith.addi %1, %c0_i32_10 : i32
    %c1_i32_11 = arith.constant 1 : i32
    %20 = arith.cmpi sge, %19, %c1_i32_11 : i32
    %c0_i32_12 = arith.constant 0 : i32
    %21 = arith.addi %1, %c0_i32_12 : i32
    %c16_i32_13 = arith.constant 16 : i32
    %22 = arith.cmpi sle, %21, %c16_i32_13 : i32
    %23 = arith.andi %20, %22 : i1
    %c0_14 = arith.constant 0 : index
    %c0_15 = arith.constant 0 : index
    %c0_16 = arith.constant 0 : index
    %24 = vector.load %arg13[%c0_14, %c0_15, %c0_16] : memref<10x18x128xf32, #tpu.memory_space<vmem>>, vector<1x18x128xf32>
    %25 = vector.shape_cast %24 : vector<1x18x128xf32> to vector<18x128xf32>
    %cst = arith.constant dense<0.000000e+00> : vector<18x128xf32>
    %26 = tpu.matmul %25, %16, %cst {dimension_numbers = #tpu.dot_dimension_numbers<[1], [0], [0], [1], [0, 0, 1, 1], [], []>} : vector<18x128xf32>, vector<128x128xf32>, vector<18x128xf32> -> vector<18x128xf32>
    %27 = vector.broadcast %17 : vector<1x128xf32> to vector<18x128xf32>
    %28 = arith.mulf %26, %27 : vector<18x128xf32>
    %29 = vector.broadcast %18 : vector<1x128xf32> to vector<18x128xf32>
    %30 = arith.addf %28, %29 : vector<18x128xf32>
    %cst_17 = arith.constant 0.000000e+00 : f32
    %cst_18 = arith.constant 6.000000e+00 : f32
    %31 = vector.broadcast %cst_17 : f32 to vector<18x128xf32>
    %32 = arith.maximumf %31, %30 : vector<18x128xf32>
    %33 = vector.broadcast %cst_18 : f32 to vector<18x128xf32>
    %34 = arith.minimumf %33, %32 : vector<18x128xf32>
    %35 = vector.broadcast %23 : i1 to vector<18x1xi1>
    %36 = arith.andi %15, %35 : vector<18x1xi1>
    %cst_19 = arith.constant 0.000000e+00 : f32
    %37 = vector.shape_cast %36 : vector<18x1xi1> to vector<18x1xi1>
    %38 = vector.broadcast %37 : vector<18x1xi1> to vector<18x128xi1>
    %39 = vector.broadcast %cst_19 : f32 to vector<18x128xf32>
    %40 = arith.select %38, %34, %39 : vector<18x128xi1>, vector<18x128xf32>
    %c0_20 = arith.constant 0 : index
    %c0_21 = arith.constant 0 : index
    %c0_22 = arith.constant 0 : index
    %41 = vector.load %arg14[%c0_20, %c0_21, %c0_22] : memref<10x18x128xf32, #tpu.memory_space<vmem>>, vector<1x18x128xf32>
    %42 = vector.shape_cast %41 : vector<1x18x128xf32> to vector<18x128xf32>
    %43 = vector.shape_cast %40 : vector<18x128xf32> to vector<1x18x128xf32>
    tpu.vector_store %arg14[%c0_20, %c0_21, %c0_22], %43 {strides = array<i32>} : memref<10x18x128xf32, #tpu.memory_space<vmem>>, vector<1x18x128xf32>,
    %c1_i32_23 = arith.constant 1 : i32
    %44 = arith.addi %1, %c1_i32_23 : i32
    %c1_i32_24 = arith.constant 1 : i32
    %45 = arith.cmpi sge, %44, %c1_i32_24 : i32
    %c1_i32_25 = arith.constant 1 : i32
    %46 = arith.addi %1, %c1_i32_25 : i32
    %c16_i32_26 = arith.constant 16 : i32
    %47 = arith.cmpi sle, %46, %c16_i32_26 : i32
    %48 = arith.andi %45, %47 : i1
    %c1 = arith.constant 1 : index
    %c0_27 = arith.constant 0 : index
    %c0_28 = arith.constant 0 : index
    %49 = vector.load %arg13[%c1, %c0_27, %c0_28] : memref<10x18x128xf32, #tpu.memory_space<vmem>>, vector<1x18x128xf32>
    %50 = vector.shape_cast %49 : vector<1x18x128xf32> to vector<18x128xf32>
    %cst_29 = arith.constant dense<0.000000e+00> : vector<18x128xf32>
    %51 = tpu.matmul %50, %16, %cst_29 {dimension_numbers = #tpu.dot_dimension_numbers<[1], [0], [0], [1], [0, 0, 1, 1], [], []>} : vector<18x128xf32>, vector<128x128xf32>, vector<18x128xf32> -> vector<18x128xf32>
    %52 = vector.broadcast %17 : vector<1x128xf32> to vector<18x128xf32>
    %53 = arith.mulf %51, %52 : vector<18x128xf32>
    %54 = vector.broadcast %18 : vector<1x128xf32> to vector<18x128xf32>
    %55 = arith.addf %53, %54 : vector<18x128xf32>
    %cst_30 = arith.constant 0.000000e+00 : f32
    %cst_31 = arith.constant 6.000000e+00 : f32
    %56 = vector.broadcast %cst_30 : f32 to vector<18x128xf32>
    %57 = arith.maximumf %56, %55 : vector<18x128xf32>
    %58 = vector.broadcast %cst_31 : f32 to vector<18x128xf32>
    %59 = arith.minimumf %58, %57 : vector<18x128xf32>
    %60 = vector.broadcast %48 : i1 to vector<18x1xi1>
    %61 = arith.andi %15, %60 : vector<18x1xi1>
    %cst_32 = arith.constant 0.000000e+00 : f32
    %62 = vector.shape_cast %61 : vector<18x1xi1> to vector<18x1xi1>
    %63 = vector.broadcast %62 : vector<18x1xi1> to vector<18x128xi1>
    %64 = vector.broadcast %cst_32 : f32 to vector<18x128xf32>
    %65 = arith.select %63, %59, %64 : vector<18x128xi1>, vector<18x128xf32>
    %c1_33 = arith.constant 1 : index
    %c0_34 = arith.constant 0 : index
    %c0_35 = arith.constant 0 : index
    %66 = vector.load %arg14[%c1_33, %c0_34, %c0_35] : memref<10x18x128xf32, #tpu.memory_space<vmem>>, vector<1x18x128xf32>
    %67 = vector.shape_cast %66 : vector<1x18x128xf32> to vector<18x128xf32>
    %68 = vector.shape_cast %65 : vector<18x128xf32> to vector<1x18x128xf32>
    tpu.vector_store %arg14[%c1_33, %c0_34, %c0_35], %68 {strides = array<i32>} : memref<10x18x128xf32, #tpu.memory_space<vmem>>, vector<1x18x128xf32>,
    %c2_i32 = arith.constant 2 : i32
    %69 = arith.addi %1, %c2_i32 : i32
    %c1_i32_36 = arith.constant 1 : i32
    %70 = arith.cmpi sge, %69, %c1_i32_36 : i32
    %c2_i32_37 = arith.constant 2 : i32
    %71 = arith.addi %1, %c2_i32_37 : i32
    %c16_i32_38 = arith.constant 16 : i32
    %72 = arith.cmpi sle, %71, %c16_i32_38 : i32
    %73 = arith.andi %70, %72 : i1
    %c2 = arith.constant 2 : index
    %c0_39 = arith.constant 0 : index
    %c0_40 = arith.constant 0 : index
    %74 = vector.load %arg13[%c2, %c0_39, %c0_40] : memref<10x18x128xf32, #tpu.memory_space<vmem>>, vector<1x18x128xf32>
    %75 = vector.shape_cast %74 : vector<1x18x128xf32> to vector<18x128xf32>
    %cst_41 = arith.constant dense<0.000000e+00> : vector<18x128xf32>
    %76 = tpu.matmul %75, %16, %cst_41 {dimension_numbers = #tpu.dot_dimension_numbers<[1], [0], [0], [1], [0, 0, 1, 1], [], []>} : vector<18x128xf32>, vector<128x128xf32>, vector<18x128xf32> -> vector<18x128xf32>
    %77 = vector.broadcast %17 : vector<1x128xf32> to vector<18x128xf32>
    %78 = arith.mulf %76, %77 : vector<18x128xf32>
    %79 = vector.broadcast %18 : vector<1x128xf32> to vector<18x128xf32>
    %80 = arith.addf %78, %79 : vector<18x128xf32>
    %cst_42 = arith.constant 0.000000e+00 : f32
    %cst_43 = arith.constant 6.000000e+00 : f32
    %81 = vector.broadcast %cst_42 : f32 to vector<18x128xf32>
    %82 = arith.maximumf %81, %80 : vector<18x128xf32>
    %83 = vector.broadcast %cst_43 : f32 to vector<18x128xf32>
    %84 = arith.minimumf %83, %82 : vector<18x128xf32>
    %85 = vector.broadcast %73 : i1 to vector<18x1xi1>
    %86 = arith.andi %15, %85 : vector<18x1xi1>
    %cst_44 = arith.constant 0.000000e+00 : f32
    %87 = vector.shape_cast %86 : vector<18x1xi1> to vector<18x1xi1>
    %88 = vector.broadcast %87 : vector<18x1xi1> to vector<18x128xi1>
    %89 = vector.broadcast %cst_44 : f32 to vector<18x128xf32>
    %90 = arith.select %88, %84, %89 : vector<18x128xi1>, vector<18x128xf32>
    %c2_45 = arith.constant 2 : index
    %c0_46 = arith.constant 0 : index
    %c0_47 = arith.constant 0 : index
    %91 = vector.load %arg14[%c2_45, %c0_46, %c0_47] : memref<10x18x128xf32, #tpu.memory_space<vmem>>, vector<1x18x128xf32>
    %92 = vector.shape_cast %91 : vector<1x18x128xf32> to vector<18x128xf32>
    %93 = vector.shape_cast %90 : vector<18x128xf32> to vector<1x18x128xf32>
    tpu.vector_store %arg14[%c2_45, %c0_46, %c0_47], %93 {strides = array<i32>} : memref<10x18x128xf32, #tpu.memory_space<vmem>>, vector<1x18x128xf32>,
    %c3_i32 = arith.constant 3 : i32
    %94 = arith.addi %1, %c3_i32 : i32
    %c1_i32_48 = arith.constant 1 : i32
    %95 = arith.cmpi sge, %94, %c1_i32_48 : i32
    %c3_i32_49 = arith.constant 3 : i32
    %96 = arith.addi %1, %c3_i32_49 : i32
    %c16_i32_50 = arith.constant 16 : i32
    %97 = arith.cmpi sle, %96, %c16_i32_50 : i32
    %98 = arith.andi %95, %97 : i1
    %c3 = arith.constant 3 : index
    %c0_51 = arith.constant 0 : index
    %c0_52 = arith.constant 0 : index
    %99 = vector.load %arg13[%c3, %c0_51, %c0_52] : memref<10x18x128xf32, #tpu.memory_space<vmem>>, vector<1x18x128xf32>
    %100 = vector.shape_cast %99 : vector<1x18x128xf32> to vector<18x128xf32>
    %cst_53 = arith.constant dense<0.000000e+00> : vector<18x128xf32>
    %101 = tpu.matmul %100, %16, %cst_53 {dimension_numbers = #tpu.dot_dimension_numbers<[1], [0], [0], [1], [0, 0, 1, 1], [], []>} : vector<18x128xf32>, vector<128x128xf32>, vector<18x128xf32> -> vector<18x128xf32>
    %102 = vector.broadcast %17 : vector<1x128xf32> to vector<18x128xf32>
    %103 = arith.mulf %101, %102 : vector<18x128xf32>
    %104 = vector.broadcast %18 : vector<1x128xf32> to vector<18x128xf32>
    %105 = arith.addf %103, %104 : vector<18x128xf32>
    %cst_54 = arith.constant 0.000000e+00 : f32
    %cst_55 = arith.constant 6.000000e+00 : f32
    %106 = vector.broadcast %cst_54 : f32 to vector<18x128xf32>
    %107 = arith.maximumf %106, %105 : vector<18x128xf32>
    %108 = vector.broadcast %cst_55 : f32 to vector<18x128xf32>
    %109 = arith.minimumf %108, %107 : vector<18x128xf32>
    %110 = vector.broadcast %98 : i1 to vector<18x1xi1>
    %111 = arith.andi %15, %110 : vector<18x1xi1>
    %cst_56 = arith.constant 0.000000e+00 : f32
    %112 = vector.shape_cast %111 : vector<18x1xi1> to vector<18x1xi1>
    %113 = vector.broadcast %112 : vector<18x1xi1> to vector<18x128xi1>
    %114 = vector.broadcast %cst_56 : f32 to vector<18x128xf32>
    %115 = arith.select %113, %109, %114 : vector<18x128xi1>, vector<18x128xf32>
    %c3_57 = arith.constant 3 : index
    %c0_58 = arith.constant 0 : index
    %c0_59 = arith.constant 0 : index
    %116 = vector.load %arg14[%c3_57, %c0_58, %c0_59] : memref<10x18x128xf32, #tpu.memory_space<vmem>>, vector<1x18x128xf32>
    %117 = vector.shape_cast %116 : vector<1x18x128xf32> to vector<18x128xf32>
    %118 = vector.shape_cast %115 : vector<18x128xf32> to vector<1x18x128xf32>
    tpu.vector_store %arg14[%c3_57, %c0_58, %c0_59], %118 {strides = array<i32>} : memref<10x18x128xf32, #tpu.memory_space<vmem>>, vector<1x18x128xf32>,
    %c4_i32 = arith.constant 4 : i32
    %119 = arith.addi %1, %c4_i32 : i32
    %c1_i32_60 = arith.constant 1 : i32
    %120 = arith.cmpi sge, %119, %c1_i32_60 : i32
    %c4_i32_61 = arith.constant 4 : i32
    %121 = arith.addi %1, %c4_i32_61 : i32
    %c16_i32_62 = arith.constant 16 : i32
    %122 = arith.cmpi sle, %121, %c16_i32_62 : i32
    %123 = arith.andi %120, %122 : i1
    %c4 = arith.constant 4 : index
    %c0_63 = arith.constant 0 : index
    %c0_64 = arith.constant 0 : index
    %124 = vector.load %arg13[%c4, %c0_63, %c0_64] : memref<10x18x128xf32, #tpu.memory_space<vmem>>, vector<1x18x128xf32>
    %125 = vector.shape_cast %124 : vector<1x18x128xf32> to vector<18x128xf32>
    %cst_65 = arith.constant dense<0.000000e+00> : vector<18x128xf32>
    %126 = tpu.matmul %125, %16, %cst_65 {dimension_numbers = #tpu.dot_dimension_numbers<[1], [0], [0], [1], [0, 0, 1, 1], [], []>} : vector<18x128xf32>, vector<128x128xf32>, vector<18x128xf32> -> vector<18x128xf32>
    %127 = vector.broadcast %17 : vector<1x128xf32> to vector<18x128xf32>
    %128 = arith.mulf %126, %127 : vector<18x128xf32>
    %129 = vector.broadcast %18 : vector<1x128xf32> to vector<18x128xf32>
    %130 = arith.addf %128, %129 : vector<18x128xf32>
    %cst_66 = arith.constant 0.000000e+00 : f32
    %cst_67 = arith.constant 6.000000e+00 : f32
    %131 = vector.broadcast %cst_66 : f32 to vector<18x128xf32>
    %132 = arith.maximumf %131, %130 : vector<18x128xf32>
    %133 = vector.broadcast %cst_67 : f32 to vector<18x128xf32>
    %134 = arith.minimumf %133, %132 : vector<18x128xf32>
    %135 = vector.broadcast %123 : i1 to vector<18x1xi1>
    %136 = arith.andi %15, %135 : vector<18x1xi1>
    %cst_68 = arith.constant 0.000000e+00 : f32
    %137 = vector.shape_cast %136 : vector<18x1xi1> to vector<18x1xi1>
    %138 = vector.broadcast %137 : vector<18x1xi1> to vector<18x128xi1>
    %139 = vector.broadcast %cst_68 : f32 to vector<18x128xf32>
    %140 = arith.select %138, %134, %139 : vector<18x128xi1>, vector<18x128xf32>
    %c4_69 = arith.constant 4 : index
    %c0_70 = arith.constant 0 : index
    %c0_71 = arith.constant 0 : index
    %141 = vector.load %arg14[%c4_69, %c0_70, %c0_71] : memref<10x18x128xf32, #tpu.memory_space<vmem>>, vector<1x18x128xf32>
    %142 = vector.shape_cast %141 : vector<1x18x128xf32> to vector<18x128xf32>
    %143 = vector.shape_cast %140 : vector<18x128xf32> to vector<1x18x128xf32>
    tpu.vector_store %arg14[%c4_69, %c0_70, %c0_71], %143 {strides = array<i32>} : memref<10x18x128xf32, #tpu.memory_space<vmem>>, vector<1x18x128xf32>,
    %c5_i32 = arith.constant 5 : i32
    %144 = arith.addi %1, %c5_i32 : i32
    %c1_i32_72 = arith.constant 1 : i32
    %145 = arith.cmpi sge, %144, %c1_i32_72 : i32
    %c5_i32_73 = arith.constant 5 : i32
    %146 = arith.addi %1, %c5_i32_73 : i32
    %c16_i32_74 = arith.constant 16 : i32
    %147 = arith.cmpi sle, %146, %c16_i32_74 : i32
    %148 = arith.andi %145, %147 : i1
    %c5 = arith.constant 5 : index
    %c0_75 = arith.constant 0 : index
    %c0_76 = arith.constant 0 : index
    %149 = vector.load %arg13[%c5, %c0_75, %c0_76] : memref<10x18x128xf32, #tpu.memory_space<vmem>>, vector<1x18x128xf32>
    %150 = vector.shape_cast %149 : vector<1x18x128xf32> to vector<18x128xf32>
    %cst_77 = arith.constant dense<0.000000e+00> : vector<18x128xf32>
    %151 = tpu.matmul %150, %16, %cst_77 {dimension_numbers = #tpu.dot_dimension_numbers<[1], [0], [0], [1], [0, 0, 1, 1], [], []>} : vector<18x128xf32>, vector<128x128xf32>, vector<18x128xf32> -> vector<18x128xf32>
    %152 = vector.broadcast %17 : vector<1x128xf32> to vector<18x128xf32>
    %153 = arith.mulf %151, %152 : vector<18x128xf32>
    %154 = vector.broadcast %18 : vector<1x128xf32> to vector<18x128xf32>
    %155 = arith.addf %153, %154 : vector<18x128xf32>
    %cst_78 = arith.constant 0.000000e+00 : f32
    %cst_79 = arith.constant 6.000000e+00 : f32
    %156 = vector.broadcast %cst_78 : f32 to vector<18x128xf32>
    %157 = arith.maximumf %156, %155 : vector<18x128xf32>
    %158 = vector.broadcast %cst_79 : f32 to vector<18x128xf32>
    %159 = arith.minimumf %158, %157 : vector<18x128xf32>
    %160 = vector.broadcast %148 : i1 to vector<18x1xi1>
    %161 = arith.andi %15, %160 : vector<18x1xi1>
    %cst_80 = arith.constant 0.000000e+00 : f32
    %162 = vector.shape_cast %161 : vector<18x1xi1> to vector<18x1xi1>
    %163 = vector.broadcast %162 : vector<18x1xi1> to vector<18x128xi1>
    %164 = vector.broadcast %cst_80 : f32 to vector<18x128xf32>
    %165 = arith.select %163, %159, %164 : vector<18x128xi1>, vector<18x128xf32>
    %c5_81 = arith.constant 5 : index
    %c0_82 = arith.constant 0 : index
    %c0_83 = arith.constant 0 : index
    %166 = vector.load %arg14[%c5_81, %c0_82, %c0_83] : memref<10x18x128xf32, #tpu.memory_space<vmem>>, vector<1x18x128xf32>
    %167 = vector.shape_cast %166 : vector<1x18x128xf32> to vector<18x128xf32>
    %168 = vector.shape_cast %165 : vector<18x128xf32> to vector<1x18x128xf32>
    tpu.vector_store %arg14[%c5_81, %c0_82, %c0_83], %168 {strides = array<i32>} : memref<10x18x128xf32, #tpu.memory_space<vmem>>, vector<1x18x128xf32>,
    %c6_i32 = arith.constant 6 : i32
    %169 = arith.addi %1, %c6_i32 : i32
    %c1_i32_84 = arith.constant 1 : i32
    %170 = arith.cmpi sge, %169, %c1_i32_84 : i32
    %c6_i32_85 = arith.constant 6 : i32
    %171 = arith.addi %1, %c6_i32_85 : i32
    %c16_i32_86 = arith.constant 16 : i32
    %172 = arith.cmpi sle, %171, %c16_i32_86 : i32
    %173 = arith.andi %170, %172 : i1
    %c6 = arith.constant 6 : index
    %c0_87 = arith.constant 0 : index
    %c0_88 = arith.constant 0 : index
    %174 = vector.load %arg13[%c6, %c0_87, %c0_88] : memref<10x18x128xf32, #tpu.memory_space<vmem>>, vector<1x18x128xf32>
    %175 = vector.shape_cast %174 : vector<1x18x128xf32> to vector<18x128xf32>
    %cst_89 = arith.constant dense<0.000000e+00> : vector<18x128xf32>
    %176 = tpu.matmul %175, %16, %cst_89 {dimension_numbers = #tpu.dot_dimension_numbers<[1], [0], [0], [1], [0, 0, 1, 1], [], []>} : vector<18x128xf32>, vector<128x128xf32>, vector<18x128xf32> -> vector<18x128xf32>
    %177 = vector.broadcast %17 : vector<1x128xf32> to vector<18x128xf32>
    %178 = arith.mulf %176, %177 : vector<18x128xf32>
    %179 = vector.broadcast %18 : vector<1x128xf32> to vector<18x128xf32>
    %180 = arith.addf %178, %179 : vector<18x128xf32>
    %cst_90 = arith.constant 0.000000e+00 : f32
    %cst_91 = arith.constant 6.000000e+00 : f32
    %181 = vector.broadcast %cst_90 : f32 to vector<18x128xf32>
    %182 = arith.maximumf %181, %180 : vector<18x128xf32>
    %183 = vector.broadcast %cst_91 : f32 to vector<18x128xf32>
    %184 = arith.minimumf %183, %182 : vector<18x128xf32>
    %185 = vector.broadcast %173 : i1 to vector<18x1xi1>
    %186 = arith.andi %15, %185 : vector<18x1xi1>
    %cst_92 = arith.constant 0.000000e+00 : f32
    %187 = vector.shape_cast %186 : vector<18x1xi1> to vector<18x1xi1>
    %188 = vector.broadcast %187 : vector<18x1xi1> to vector<18x128xi1>
    %189 = vector.broadcast %cst_92 : f32 to vector<18x128xf32>
    %190 = arith.select %188, %184, %189 : vector<18x128xi1>, vector<18x128xf32>
    %c6_93 = arith.constant 6 : index
    %c0_94 = arith.constant 0 : index
    %c0_95 = arith.constant 0 : index
    %191 = vector.load %arg14[%c6_93, %c0_94, %c0_95] : memref<10x18x128xf32, #tpu.memory_space<vmem>>, vector<1x18x128xf32>
    %192 = vector.shape_cast %191 : vector<1x18x128xf32> to vector<18x128xf32>
    %193 = vector.shape_cast %190 : vector<18x128xf32> to vector<1x18x128xf32>
    tpu.vector_store %arg14[%c6_93, %c0_94, %c0_95], %193 {strides = array<i32>} : memref<10x18x128xf32, #tpu.memory_space<vmem>>, vector<1x18x128xf32>,
    %c7_i32 = arith.constant 7 : i32
    %194 = arith.addi %1, %c7_i32 : i32
    %c1_i32_96 = arith.constant 1 : i32
    %195 = arith.cmpi sge, %194, %c1_i32_96 : i32
    %c7_i32_97 = arith.constant 7 : i32
    %196 = arith.addi %1, %c7_i32_97 : i32
    %c16_i32_98 = arith.constant 16 : i32
    %197 = arith.cmpi sle, %196, %c16_i32_98 : i32
    %198 = arith.andi %195, %197 : i1
    %c7 = arith.constant 7 : index
    %c0_99 = arith.constant 0 : index
    %c0_100 = arith.constant 0 : index
    %199 = vector.load %arg13[%c7, %c0_99, %c0_100] : memref<10x18x128xf32, #tpu.memory_space<vmem>>, vector<1x18x128xf32>
    %200 = vector.shape_cast %199 : vector<1x18x128xf32> to vector<18x128xf32>
    %cst_101 = arith.constant dense<0.000000e+00> : vector<18x128xf32>
    %201 = tpu.matmul %200, %16, %cst_101 {dimension_numbers = #tpu.dot_dimension_numbers<[1], [0], [0], [1], [0, 0, 1, 1], [], []>} : vector<18x128xf32>, vector<128x128xf32>, vector<18x128xf32> -> vector<18x128xf32>
    %202 = vector.broadcast %17 : vector<1x128xf32> to vector<18x128xf32>
    %203 = arith.mulf %201, %202 : vector<18x128xf32>
    %204 = vector.broadcast %18 : vector<1x128xf32> to vector<18x128xf32>
    %205 = arith.addf %203, %204 : vector<18x128xf32>
    %cst_102 = arith.constant 0.000000e+00 : f32
    %cst_103 = arith.constant 6.000000e+00 : f32
    %206 = vector.broadcast %cst_102 : f32 to vector<18x128xf32>
    %207 = arith.maximumf %206, %205 : vector<18x128xf32>
    %208 = vector.broadcast %cst_103 : f32 to vector<18x128xf32>
    %209 = arith.minimumf %208, %207 : vector<18x128xf32>
    %210 = vector.broadcast %198 : i1 to vector<18x1xi1>
    %211 = arith.andi %15, %210 : vector<18x1xi1>
    %cst_104 = arith.constant 0.000000e+00 : f32
    %212 = vector.shape_cast %211 : vector<18x1xi1> to vector<18x1xi1>
    %213 = vector.broadcast %212 : vector<18x1xi1> to vector<18x128xi1>
    %214 = vector.broadcast %cst_104 : f32 to vector<18x128xf32>
    %215 = arith.select %213, %209, %214 : vector<18x128xi1>, vector<18x128xf32>
    %c7_105 = arith.constant 7 : index
    %c0_106 = arith.constant 0 : index
    %c0_107 = arith.constant 0 : index
    %216 = vector.load %arg14[%c7_105, %c0_106, %c0_107] : memref<10x18x128xf32, #tpu.memory_space<vmem>>, vector<1x18x128xf32>
    %217 = vector.shape_cast %216 : vector<1x18x128xf32> to vector<18x128xf32>
    %218 = vector.shape_cast %215 : vector<18x128xf32> to vector<1x18x128xf32>
    tpu.vector_store %arg14[%c7_105, %c0_106, %c0_107], %218 {strides = array<i32>} : memref<10x18x128xf32, #tpu.memory_space<vmem>>, vector<1x18x128xf32>,
    %c8_i32_108 = arith.constant 8 : i32
    %219 = arith.addi %1, %c8_i32_108 : i32
    %c1_i32_109 = arith.constant 1 : i32
    %220 = arith.cmpi sge, %219, %c1_i32_109 : i32
    %c8_i32_110 = arith.constant 8 : i32
    %221 = arith.addi %1, %c8_i32_110 : i32
    %c16_i32_111 = arith.constant 16 : i32
    %222 = arith.cmpi sle, %221, %c16_i32_111 : i32
    %223 = arith.andi %220, %222 : i1
    %c8 = arith.constant 8 : index
    %c0_112 = arith.constant 0 : index
    %c0_113 = arith.constant 0 : index
    %224 = vector.load %arg13[%c8, %c0_112, %c0_113] : memref<10x18x128xf32, #tpu.memory_space<vmem>>, vector<1x18x128xf32>
    %225 = vector.shape_cast %224 : vector<1x18x128xf32> to vector<18x128xf32>
    %cst_114 = arith.constant dense<0.000000e+00> : vector<18x128xf32>
    %226 = tpu.matmul %225, %16, %cst_114 {dimension_numbers = #tpu.dot_dimension_numbers<[1], [0], [0], [1], [0, 0, 1, 1], [], []>} : vector<18x128xf32>, vector<128x128xf32>, vector<18x128xf32> -> vector<18x128xf32>
    %227 = vector.broadcast %17 : vector<1x128xf32> to vector<18x128xf32>
    %228 = arith.mulf %226, %227 : vector<18x128xf32>
    %229 = vector.broadcast %18 : vector<1x128xf32> to vector<18x128xf32>
    %230 = arith.addf %228, %229 : vector<18x128xf32>
    %cst_115 = arith.constant 0.000000e+00 : f32
    %cst_116 = arith.constant 6.000000e+00 : f32
    %231 = vector.broadcast %cst_115 : f32 to vector<18x128xf32>
    %232 = arith.maximumf %231, %230 : vector<18x128xf32>
    %233 = vector.broadcast %cst_116 : f32 to vector<18x128xf32>
    %234 = arith.minimumf %233, %232 : vector<18x128xf32>
    %235 = vector.broadcast %223 : i1 to vector<18x1xi1>
    %236 = arith.andi %15, %235 : vector<18x1xi1>
    %cst_117 = arith.constant 0.000000e+00 : f32
    %237 = vector.shape_cast %236 : vector<18x1xi1> to vector<18x1xi1>
    %238 = vector.broadcast %237 : vector<18x1xi1> to vector<18x128xi1>
    %239 = vector.broadcast %cst_117 : f32 to vector<18x128xf32>
    %240 = arith.select %238, %234, %239 : vector<18x128xi1>, vector<18x128xf32>
    %c8_118 = arith.constant 8 : index
    %c0_119 = arith.constant 0 : index
    %c0_120 = arith.constant 0 : index
    %241 = vector.load %arg14[%c8_118, %c0_119, %c0_120] : memref<10x18x128xf32, #tpu.memory_space<vmem>>, vector<1x18x128xf32>
    %242 = vector.shape_cast %241 : vector<1x18x128xf32> to vector<18x128xf32>
    %243 = vector.shape_cast %240 : vector<18x128xf32> to vector<1x18x128xf32>
    tpu.vector_store %arg14[%c8_118, %c0_119, %c0_120], %243 {strides = array<i32>} : memref<10x18x128xf32, #tpu.memory_space<vmem>>, vector<1x18x128xf32>,
    %c9_i32 = arith.constant 9 : i32
    %244 = arith.addi %1, %c9_i32 : i32
    %c1_i32_121 = arith.constant 1 : i32
    %245 = arith.cmpi sge, %244, %c1_i32_121 : i32
    %c9_i32_122 = arith.constant 9 : i32
    %246 = arith.addi %1, %c9_i32_122 : i32
    %c16_i32_123 = arith.constant 16 : i32
    %247 = arith.cmpi sle, %246, %c16_i32_123 : i32
    %248 = arith.andi %245, %247 : i1
    %c9 = arith.constant 9 : index
    %c0_124 = arith.constant 0 : index
    %c0_125 = arith.constant 0 : index
    %249 = vector.load %arg13[%c9, %c0_124, %c0_125] : memref<10x18x128xf32, #tpu.memory_space<vmem>>, vector<1x18x128xf32>
    %250 = vector.shape_cast %249 : vector<1x18x128xf32> to vector<18x128xf32>
    %cst_126 = arith.constant dense<0.000000e+00> : vector<18x128xf32>
    %251 = tpu.matmul %250, %16, %cst_126 {dimension_numbers = #tpu.dot_dimension_numbers<[1], [0], [0], [1], [0, 0, 1, 1], [], []>} : vector<18x128xf32>, vector<128x128xf32>, vector<18x128xf32> -> vector<18x128xf32>
    %252 = vector.broadcast %17 : vector<1x128xf32> to vector<18x128xf32>
    %253 = arith.mulf %251, %252 : vector<18x128xf32>
    %254 = vector.broadcast %18 : vector<1x128xf32> to vector<18x128xf32>
    %255 = arith.addf %253, %254 : vector<18x128xf32>
    %cst_127 = arith.constant 0.000000e+00 : f32
    %cst_128 = arith.constant 6.000000e+00 : f32
    %256 = vector.broadcast %cst_127 : f32 to vector<18x128xf32>
    %257 = arith.maximumf %256, %255 : vector<18x128xf32>
    %258 = vector.broadcast %cst_128 : f32 to vector<18x128xf32>
    %259 = arith.minimumf %258, %257 : vector<18x128xf32>
    %260 = vector.broadcast %248 : i1 to vector<18x1xi1>
    %261 = arith.andi %15, %260 : vector<18x1xi1>
    %cst_129 = arith.constant 0.000000e+00 : f32
    %262 = vector.shape_cast %261 : vector<18x1xi1> to vector<18x1xi1>
    %263 = vector.broadcast %262 : vector<18x1xi1> to vector<18x128xi1>
    %264 = vector.broadcast %cst_129 : f32 to vector<18x128xf32>
    %265 = arith.select %263, %259, %264 : vector<18x128xi1>, vector<18x128xf32>
    %c9_130 = arith.constant 9 : index
    %c0_131 = arith.constant 0 : index
    %c0_132 = arith.constant 0 : index
    %266 = vector.load %arg14[%c9_130, %c0_131, %c0_132] : memref<10x18x128xf32, #tpu.memory_space<vmem>>, vector<1x18x128xf32>
    %267 = vector.shape_cast %266 : vector<1x18x128xf32> to vector<18x128xf32>
    %268 = vector.shape_cast %265 : vector<18x128xf32> to vector<1x18x128xf32>
    tpu.vector_store %arg14[%c9_130, %c0_131, %c0_132], %268 {strides = array<i32>} : memref<10x18x128xf32, #tpu.memory_space<vmem>>, vector<1x18x128xf32>,
    %cst_133 = arith.constant 0.000000e+00 : f32
    %269 = vector.broadcast %cst_133 : f32 to vector<8x16x128xf32>
    %c0_134 = arith.constant 0 : index
    %c0_135 = arith.constant 0 : index
    %c0_136 = arith.constant 0 : index
    %270 = vector.load %arg14[%c0_134, %c0_135, %c0_136] : memref<10x18x128xf32, #tpu.memory_space<vmem>>, vector<8x16x128xf32>
    %c0_137 = arith.constant 0 : index
    %c0_138 = arith.constant 0 : index
    %c0_139 = arith.constant 0 : index
    %271 = vector.load %arg6[%c0_137, %c0_138, %c0_139] : memref<3x3x128xf32, #tpu.memory_space<vmem>>, vector<1x1x128xf32>
    %272 = vector.shape_cast %271 : vector<1x1x128xf32> to vector<1x128xf32>
    %273 = vector.shape_cast %272 : vector<1x128xf32> to vector<1x1x128xf32>
    %274 = vector.broadcast %273 : vector<1x1x128xf32> to vector<8x16x128xf32>
    %275 = arith.mulf %270, %274 : vector<8x16x128xf32>
    %276 = arith.addf %269, %275 : vector<8x16x128xf32>
    %c0_140 = arith.constant 0 : index
    %c1_141 = arith.constant 1 : index
    %c0_142 = arith.constant 0 : index
    %277 = vector.load %arg14[%c0_140, %c1_141, %c0_142] : memref<10x18x128xf32, #tpu.memory_space<vmem>>, vector<8x16x128xf32>
    %c0_143 = arith.constant 0 : index
    %c1_144 = arith.constant 1 : index
    %c0_145 = arith.constant 0 : index
    %278 = vector.load %arg6[%c0_143, %c1_144, %c0_145] : memref<3x3x128xf32, #tpu.memory_space<vmem>>, vector<1x1x128xf32>
    %279 = vector.shape_cast %278 : vector<1x1x128xf32> to vector<1x128xf32>
    %280 = vector.shape_cast %279 : vector<1x128xf32> to vector<1x1x128xf32>
    %281 = vector.broadcast %280 : vector<1x1x128xf32> to vector<8x16x128xf32>
    %282 = arith.mulf %277, %281 : vector<8x16x128xf32>
    %283 = arith.addf %276, %282 : vector<8x16x128xf32>
    %c0_146 = arith.constant 0 : index
    %c2_147 = arith.constant 2 : index
    %c0_148 = arith.constant 0 : index
    %284 = vector.load %arg14[%c0_146, %c2_147, %c0_148] : memref<10x18x128xf32, #tpu.memory_space<vmem>>, vector<8x16x128xf32>
    %c0_149 = arith.constant 0 : index
    %c2_150 = arith.constant 2 : index
    %c0_151 = arith.constant 0 : index
    %285 = vector.load %arg6[%c0_149, %c2_150, %c0_151] : memref<3x3x128xf32, #tpu.memory_space<vmem>>, vector<1x1x128xf32>
    %286 = vector.shape_cast %285 : vector<1x1x128xf32> to vector<1x128xf32>
    %287 = vector.shape_cast %286 : vector<1x128xf32> to vector<1x1x128xf32>
    %288 = vector.broadcast %287 : vector<1x1x128xf32> to vector<8x16x128xf32>
    %289 = arith.mulf %284, %288 : vector<8x16x128xf32>
    %290 = arith.addf %283, %289 : vector<8x16x128xf32>
    %c1_152 = arith.constant 1 : index
    %c0_153 = arith.constant 0 : index
    %c0_154 = arith.constant 0 : index
    %291 = vector.load %arg14[%c1_152, %c0_153, %c0_154] : memref<10x18x128xf32, #tpu.memory_space<vmem>>, vector<8x16x128xf32>
    %c1_155 = arith.constant 1 : index
    %c0_156 = arith.constant 0 : index
    %c0_157 = arith.constant 0 : index
    %292 = vector.load %arg6[%c1_155, %c0_156, %c0_157] : memref<3x3x128xf32, #tpu.memory_space<vmem>>, vector<1x1x128xf32>
    %293 = vector.shape_cast %292 : vector<1x1x128xf32> to vector<1x128xf32>
    %294 = vector.shape_cast %293 : vector<1x128xf32> to vector<1x1x128xf32>
    %295 = vector.broadcast %294 : vector<1x1x128xf32> to vector<8x16x128xf32>
    %296 = arith.mulf %291, %295 : vector<8x16x128xf32>
    %297 = arith.addf %290, %296 : vector<8x16x128xf32>
    %c1_158 = arith.constant 1 : index
    %c1_159 = arith.constant 1 : index
    %c0_160 = arith.constant 0 : index
    %298 = vector.load %arg14[%c1_158, %c1_159, %c0_160] : memref<10x18x128xf32, #tpu.memory_space<vmem>>, vector<8x16x128xf32>
    %c1_161 = arith.constant 1 : index
    %c1_162 = arith.constant 1 : index
    %c0_163 = arith.constant 0 : index
    %299 = vector.load %arg6[%c1_161, %c1_162, %c0_163] : memref<3x3x128xf32, #tpu.memory_space<vmem>>, vector<1x1x128xf32>
    %300 = vector.shape_cast %299 : vector<1x1x128xf32> to vector<1x128xf32>
    %301 = vector.shape_cast %300 : vector<1x128xf32> to vector<1x1x128xf32>
    %302 = vector.broadcast %301 : vector<1x1x128xf32> to vector<8x16x128xf32>
    %303 = arith.mulf %298, %302 : vector<8x16x128xf32>
    %304 = arith.addf %297, %303 : vector<8x16x128xf32>
    %c1_164 = arith.constant 1 : index
    %c2_165 = arith.constant 2 : index
    %c0_166 = arith.constant 0 : index
    %305 = vector.load %arg14[%c1_164, %c2_165, %c0_166] : memref<10x18x128xf32, #tpu.memory_space<vmem>>, vector<8x16x128xf32>
    %c1_167 = arith.constant 1 : index
    %c2_168 = arith.constant 2 : index
    %c0_169 = arith.constant 0 : index
    %306 = vector.load %arg6[%c1_167, %c2_168, %c0_169] : memref<3x3x128xf32, #tpu.memory_space<vmem>>, vector<1x1x128xf32>
    %307 = vector.shape_cast %306 : vector<1x1x128xf32> to vector<1x128xf32>
    %308 = vector.shape_cast %307 : vector<1x128xf32> to vector<1x1x128xf32>
    %309 = vector.broadcast %308 : vector<1x1x128xf32> to vector<8x16x128xf32>
    %310 = arith.mulf %305, %309 : vector<8x16x128xf32>
    %311 = arith.addf %304, %310 : vector<8x16x128xf32>
    %c2_170 = arith.constant 2 : index
    %c0_171 = arith.constant 0 : index
    %c0_172 = arith.constant 0 : index
    %312 = vector.load %arg14[%c2_170, %c0_171, %c0_172] : memref<10x18x128xf32, #tpu.memory_space<vmem>>, vector<8x16x128xf32>
    %c2_173 = arith.constant 2 : index
    %c0_174 = arith.constant 0 : index
    %c0_175 = arith.constant 0 : index
    %313 = vector.load %arg6[%c2_173, %c0_174, %c0_175] : memref<3x3x128xf32, #tpu.memory_space<vmem>>, vector<1x1x128xf32>
    %314 = vector.shape_cast %313 : vector<1x1x128xf32> to vector<1x128xf32>
    %315 = vector.shape_cast %314 : vector<1x128xf32> to vector<1x1x128xf32>
    %316 = vector.broadcast %315 : vector<1x1x128xf32> to vector<8x16x128xf32>
    %317 = arith.mulf %312, %316 : vector<8x16x128xf32>
    %318 = arith.addf %311, %317 : vector<8x16x128xf32>
    %c2_176 = arith.constant 2 : index
    %c1_177 = arith.constant 1 : index
    %c0_178 = arith.constant 0 : index
    %319 = vector.load %arg14[%c2_176, %c1_177, %c0_178] : memref<10x18x128xf32, #tpu.memory_space<vmem>>, vector<8x16x128xf32>
    %c2_179 = arith.constant 2 : index
    %c1_180 = arith.constant 1 : index
    %c0_181 = arith.constant 0 : index
    %320 = vector.load %arg6[%c2_179, %c1_180, %c0_181] : memref<3x3x128xf32, #tpu.memory_space<vmem>>, vector<1x1x128xf32>
    %321 = vector.shape_cast %320 : vector<1x1x128xf32> to vector<1x128xf32>
    %322 = vector.shape_cast %321 : vector<1x128xf32> to vector<1x1x128xf32>
    %323 = vector.broadcast %322 : vector<1x1x128xf32> to vector<8x16x128xf32>
    %324 = arith.mulf %319, %323 : vector<8x16x128xf32>
    %325 = arith.addf %318, %324 : vector<8x16x128xf32>
    %c2_182 = arith.constant 2 : index
    %c2_183 = arith.constant 2 : index
    %c0_184 = arith.constant 0 : index
    %326 = vector.load %arg14[%c2_182, %c2_183, %c0_184] : memref<10x18x128xf32, #tpu.memory_space<vmem>>, vector<8x16x128xf32>
    %c2_185 = arith.constant 2 : index
    %c2_186 = arith.constant 2 : index
    %c0_187 = arith.constant 0 : index
    %327 = vector.load %arg6[%c2_185, %c2_186, %c0_187] : memref<3x3x128xf32, #tpu.memory_space<vmem>>, vector<1x1x128xf32>
    %328 = vector.shape_cast %327 : vector<1x1x128xf32> to vector<1x128xf32>
    %329 = vector.shape_cast %328 : vector<1x128xf32> to vector<1x1x128xf32>
    %330 = vector.broadcast %329 : vector<1x1x128xf32> to vector<8x16x128xf32>
    %331 = arith.mulf %326, %330 : vector<8x16x128xf32>
    %332 = arith.addf %325, %331 : vector<8x16x128xf32>
    %c0_188 = arith.constant 0 : index
    %c0_189 = arith.constant 0 : index
    %333 = vector.load %arg7[%c0_188, %c0_189] : memref<1x128xf32, #tpu.memory_space<vmem>>, vector<1x128xf32>
    %334 = vector.shape_cast %333 : vector<1x128xf32> to vector<1x1x128xf32>
    %335 = vector.broadcast %334 : vector<1x1x128xf32> to vector<8x16x128xf32>
    %336 = arith.mulf %332, %335 : vector<8x16x128xf32>
    %c0_190 = arith.constant 0 : index
    %c0_191 = arith.constant 0 : index
    %337 = vector.load %arg8[%c0_190, %c0_191] : memref<1x128xf32, #tpu.memory_space<vmem>>, vector<1x128xf32>
    %338 = vector.shape_cast %337 : vector<1x128xf32> to vector<1x1x128xf32>
    %339 = vector.broadcast %338 : vector<1x1x128xf32> to vector<8x16x128xf32>
    %340 = arith.addf %336, %339 : vector<8x16x128xf32>
    %cst_192 = arith.constant 0.000000e+00 : f32
    %cst_193 = arith.constant 6.000000e+00 : f32
    %341 = vector.broadcast %cst_192 : f32 to vector<8x16x128xf32>
    %342 = arith.maximumf %341, %340 : vector<8x16x128xf32>
    %343 = vector.broadcast %cst_193 : f32 to vector<8x16x128xf32>
    %344 = arith.minimumf %343, %342 : vector<8x16x128xf32>
    %c0_194 = arith.constant 0 : index
    %c0_195 = arith.constant 0 : index
    %345 = vector.load %arg9[%c0_194, %c0_195] : memref<128x128xf32, #tpu.memory_space<vmem>>, vector<128x128xf32>
    %c0_196 = arith.constant 0 : index
    %c0_197 = arith.constant 0 : index
    %346 = vector.load %arg10[%c0_196, %c0_197] : memref<1x128xf32, #tpu.memory_space<vmem>>, vector<1x128xf32>
    %c0_198 = arith.constant 0 : index
    %c0_199 = arith.constant 0 : index
    %347 = vector.load %arg11[%c0_198, %c0_199] : memref<1x128xf32, #tpu.memory_space<vmem>>, vector<1x128xf32>
    %348 = vector.extract_strided_slice %344 {offsets = [0, 0, 0], sizes = [1, 16, 128], strides = [1, 1, 1]} : vector<8x16x128xf32> to vector<1x16x128xf32>
    %349 = vector.shape_cast %348 : vector<1x16x128xf32> to vector<16x128xf32>
    %cst_200 = arith.constant dense<0.000000e+00> : vector<16x128xf32>
    %350 = tpu.matmul %349, %345, %cst_200 {dimension_numbers = #tpu.dot_dimension_numbers<[1], [0], [0], [1], [0, 0, 1, 1], [], []>} : vector<16x128xf32>, vector<128x128xf32>, vector<16x128xf32> -> vector<16x128xf32>
    %351 = vector.broadcast %346 : vector<1x128xf32> to vector<16x128xf32>
    %352 = arith.mulf %350, %351 : vector<16x128xf32>
    %353 = vector.broadcast %347 : vector<1x128xf32> to vector<16x128xf32>
    %354 = arith.addf %352, %353 : vector<16x128xf32>
    %c1_201 = arith.constant 1 : index
    %c1_202 = arith.constant 1 : index
    %c0_203 = arith.constant 0 : index
    %355 = vector.load %arg13[%c1_201, %c1_202, %c0_203] : memref<10x18x128xf32, #tpu.memory_space<vmem>>, vector<1x16x128xf32>
    %356 = vector.shape_cast %355 : vector<1x16x128xf32> to vector<16x128xf32>
    %357 = arith.addf %354, %356 : vector<16x128xf32>
    %c0_204 = arith.constant 0 : index
    %c0_205 = arith.constant 0 : index
    %c0_206 = arith.constant 0 : index
    %c0_207 = arith.constant 0 : index
    %358 = vector.load %arg12[%c0_204, %c0_205, %c0_206, %c0_207] : memref<1x8x16x128xf32, #tpu.memory_space<vmem>>, vector<1x1x16x128xf32>
    %359 = vector.shape_cast %358 : vector<1x1x16x128xf32> to vector<16x128xf32>
    %360 = vector.shape_cast %357 : vector<16x128xf32> to vector<1x1x16x128xf32>
    tpu.vector_store %arg12[%c0_204, %c0_205, %c0_206, %c0_207], %360 {strides = array<i32>} : memref<1x8x16x128xf32, #tpu.memory_space<vmem>>, vector<1x1x16x128xf32>,
    %361 = vector.extract_strided_slice %344 {offsets = [1, 0, 0], sizes = [1, 16, 128], strides = [1, 1, 1]} : vector<8x16x128xf32> to vector<1x16x128xf32>
    %362 = vector.shape_cast %361 : vector<1x16x128xf32> to vector<16x128xf32>
    %cst_208 = arith.constant dense<0.000000e+00> : vector<16x128xf32>
    %363 = tpu.matmul %362, %345, %cst_208 {dimension_numbers = #tpu.dot_dimension_numbers<[1], [0], [0], [1], [0, 0, 1, 1], [], []>} : vector<16x128xf32>, vector<128x128xf32>, vector<16x128xf32> -> vector<16x128xf32>
    %364 = vector.broadcast %346 : vector<1x128xf32> to vector<16x128xf32>
    %365 = arith.mulf %363, %364 : vector<16x128xf32>
    %366 = vector.broadcast %347 : vector<1x128xf32> to vector<16x128xf32>
    %367 = arith.addf %365, %366 : vector<16x128xf32>
    %c2_209 = arith.constant 2 : index
    %c1_210 = arith.constant 1 : index
    %c0_211 = arith.constant 0 : index
    %368 = vector.load %arg13[%c2_209, %c1_210, %c0_211] : memref<10x18x128xf32, #tpu.memory_space<vmem>>, vector<1x16x128xf32>
    %369 = vector.shape_cast %368 : vector<1x16x128xf32> to vector<16x128xf32>
    %370 = arith.addf %367, %369 : vector<16x128xf32>
    %c0_212 = arith.constant 0 : index
    %c1_213 = arith.constant 1 : index
    %c0_214 = arith.constant 0 : index
    %c0_215 = arith.constant 0 : index
    %371 = vector.load %arg12[%c0_212, %c1_213, %c0_214, %c0_215] : memref<1x8x16x128xf32, #tpu.memory_space<vmem>>, vector<1x1x16x128xf32>
    %372 = vector.shape_cast %371 : vector<1x1x16x128xf32> to vector<16x128xf32>
    %373 = vector.shape_cast %370 : vector<16x128xf32> to vector<1x1x16x128xf32>
    tpu.vector_store %arg12[%c0_212, %c1_213, %c0_214, %c0_215], %373 {strides = array<i32>} : memref<1x8x16x128xf32, #tpu.memory_space<vmem>>, vector<1x1x16x128xf32>,
    %374 = vector.extract_strided_slice %344 {offsets = [2, 0, 0], sizes = [1, 16, 128], strides = [1, 1, 1]} : vector<8x16x128xf32> to vector<1x16x128xf32>
    %375 = vector.shape_cast %374 : vector<1x16x128xf32> to vector<16x128xf32>
    %cst_216 = arith.constant dense<0.000000e+00> : vector<16x128xf32>
    %376 = tpu.matmul %375, %345, %cst_216 {dimension_numbers = #tpu.dot_dimension_numbers<[1], [0], [0], [1], [0, 0, 1, 1], [], []>} : vector<16x128xf32>, vector<128x128xf32>, vector<16x128xf32> -> vector<16x128xf32>
    %377 = vector.broadcast %346 : vector<1x128xf32> to vector<16x128xf32>
    %378 = arith.mulf %376, %377 : vector<16x128xf32>
    %379 = vector.broadcast %347 : vector<1x128xf32> to vector<16x128xf32>
    %380 = arith.addf %378, %379 : vector<16x128xf32>
    %c3_217 = arith.constant 3 : index
    %c1_218 = arith.constant 1 : index
    %c0_219 = arith.constant 0 : index
    %381 = vector.load %arg13[%c3_217, %c1_218, %c0_219] : memref<10x18x128xf32, #tpu.memory_space<vmem>>, vector<1x16x128xf32>
    %382 = vector.shape_cast %381 : vector<1x16x128xf32> to vector<16x128xf32>
    %383 = arith.addf %380, %382 : vector<16x128xf32>
    %c0_220 = arith.constant 0 : index
    %c2_221 = arith.constant 2 : index
    %c0_222 = arith.constant 0 : index
    %c0_223 = arith.constant 0 : index
    %384 = vector.load %arg12[%c0_220, %c2_221, %c0_222, %c0_223] : memref<1x8x16x128xf32, #tpu.memory_space<vmem>>, vector<1x1x16x128xf32>
    %385 = vector.shape_cast %384 : vector<1x1x16x128xf32> to vector<16x128xf32>
    %386 = vector.shape_cast %383 : vector<16x128xf32> to vector<1x1x16x128xf32>
    tpu.vector_store %arg12[%c0_220, %c2_221, %c0_222, %c0_223], %386 {strides = array<i32>} : memref<1x8x16x128xf32, #tpu.memory_space<vmem>>, vector<1x1x16x128xf32>,
    %387 = vector.extract_strided_slice %344 {offsets = [3, 0, 0], sizes = [1, 16, 128], strides = [1, 1, 1]} : vector<8x16x128xf32> to vector<1x16x128xf32>
    %388 = vector.shape_cast %387 : vector<1x16x128xf32> to vector<16x128xf32>
    %cst_224 = arith.constant dense<0.000000e+00> : vector<16x128xf32>
    %389 = tpu.matmul %388, %345, %cst_224 {dimension_numbers = #tpu.dot_dimension_numbers<[1], [0], [0], [1], [0, 0, 1, 1], [], []>} : vector<16x128xf32>, vector<128x128xf32>, vector<16x128xf32> -> vector<16x128xf32>
    %390 = vector.broadcast %346 : vector<1x128xf32> to vector<16x128xf32>
    %391 = arith.mulf %389, %390 : vector<16x128xf32>
    %392 = vector.broadcast %347 : vector<1x128xf32> to vector<16x128xf32>
    %393 = arith.addf %391, %392 : vector<16x128xf32>
    %c4_225 = arith.constant 4 : index
    %c1_226 = arith.constant 1 : index
    %c0_227 = arith.constant 0 : index
    %394 = vector.load %arg13[%c4_225, %c1_226, %c0_227] : memref<10x18x128xf32, #tpu.memory_space<vmem>>, vector<1x16x128xf32>
    %395 = vector.shape_cast %394 : vector<1x16x128xf32> to vector<16x128xf32>
    %396 = arith.addf %393, %395 : vector<16x128xf32>
    %c0_228 = arith.constant 0 : index
    %c3_229 = arith.constant 3 : index
    %c0_230 = arith.constant 0 : index
    %c0_231 = arith.constant 0 : index
    %397 = vector.load %arg12[%c0_228, %c3_229, %c0_230, %c0_231] : memref<1x8x16x128xf32, #tpu.memory_space<vmem>>, vector<1x1x16x128xf32>
    %398 = vector.shape_cast %397 : vector<1x1x16x128xf32> to vector<16x128xf32>
    %399 = vector.shape_cast %396 : vector<16x128xf32> to vector<1x1x16x128xf32>
    tpu.vector_store %arg12[%c0_228, %c3_229, %c0_230, %c0_231], %399 {strides = array<i32>} : memref<1x8x16x128xf32, #tpu.memory_space<vmem>>, vector<1x1x16x128xf32>,
    %400 = vector.extract_strided_slice %344 {offsets = [4, 0, 0], sizes = [1, 16, 128], strides = [1, 1, 1]} : vector<8x16x128xf32> to vector<1x16x128xf32>
    %401 = vector.shape_cast %400 : vector<1x16x128xf32> to vector<16x128xf32>
    %cst_232 = arith.constant dense<0.000000e+00> : vector<16x128xf32>
    %402 = tpu.matmul %401, %345, %cst_232 {dimension_numbers = #tpu.dot_dimension_numbers<[1], [0], [0], [1], [0, 0, 1, 1], [], []>} : vector<16x128xf32>, vector<128x128xf32>, vector<16x128xf32> -> vector<16x128xf32>
    %403 = vector.broadcast %346 : vector<1x128xf32> to vector<16x128xf32>
    %404 = arith.mulf %402, %403 : vector<16x128xf32>
    %405 = vector.broadcast %347 : vector<1x128xf32> to vector<16x128xf32>
    %406 = arith.addf %404, %405 : vector<16x128xf32>
    %c5_233 = arith.constant 5 : index
    %c1_234 = arith.constant 1 : index
    %c0_235 = arith.constant 0 : index
    %407 = vector.load %arg13[%c5_233, %c1_234, %c0_235] : memref<10x18x128xf32, #tpu.memory_space<vmem>>, vector<1x16x128xf32>
    %408 = vector.shape_cast %407 : vector<1x16x128xf32> to vector<16x128xf32>
    %409 = arith.addf %406, %408 : vector<16x128xf32>
    %c0_236 = arith.constant 0 : index
    %c4_237 = arith.constant 4 : index
    %c0_238 = arith.constant 0 : index
    %c0_239 = arith.constant 0 : index
    %410 = vector.load %arg12[%c0_236, %c4_237, %c0_238, %c0_239] : memref<1x8x16x128xf32, #tpu.memory_space<vmem>>, vector<1x1x16x128xf32>
    %411 = vector.shape_cast %410 : vector<1x1x16x128xf32> to vector<16x128xf32>
    %412 = vector.shape_cast %409 : vector<16x128xf32> to vector<1x1x16x128xf32>
    tpu.vector_store %arg12[%c0_236, %c4_237, %c0_238, %c0_239], %412 {strides = array<i32>} : memref<1x8x16x128xf32, #tpu.memory_space<vmem>>, vector<1x1x16x128xf32>,
    %413 = vector.extract_strided_slice %344 {offsets = [5, 0, 0], sizes = [1, 16, 128], strides = [1, 1, 1]} : vector<8x16x128xf32> to vector<1x16x128xf32>
    %414 = vector.shape_cast %413 : vector<1x16x128xf32> to vector<16x128xf32>
    %cst_240 = arith.constant dense<0.000000e+00> : vector<16x128xf32>
    %415 = tpu.matmul %414, %345, %cst_240 {dimension_numbers = #tpu.dot_dimension_numbers<[1], [0], [0], [1], [0, 0, 1, 1], [], []>} : vector<16x128xf32>, vector<128x128xf32>, vector<16x128xf32> -> vector<16x128xf32>
    %416 = vector.broadcast %346 : vector<1x128xf32> to vector<16x128xf32>
    %417 = arith.mulf %415, %416 : vector<16x128xf32>
    %418 = vector.broadcast %347 : vector<1x128xf32> to vector<16x128xf32>
    %419 = arith.addf %417, %418 : vector<16x128xf32>
    %c6_241 = arith.constant 6 : index
    %c1_242 = arith.constant 1 : index
    %c0_243 = arith.constant 0 : index
    %420 = vector.load %arg13[%c6_241, %c1_242, %c0_243] : memref<10x18x128xf32, #tpu.memory_space<vmem>>, vector<1x16x128xf32>
    %421 = vector.shape_cast %420 : vector<1x16x128xf32> to vector<16x128xf32>
    %422 = arith.addf %419, %421 : vector<16x128xf32>
    %c0_244 = arith.constant 0 : index
    %c5_245 = arith.constant 5 : index
    %c0_246 = arith.constant 0 : index
    %c0_247 = arith.constant 0 : index
    %423 = vector.load %arg12[%c0_244, %c5_245, %c0_246, %c0_247] : memref<1x8x16x128xf32, #tpu.memory_space<vmem>>, vector<1x1x16x128xf32>
    %424 = vector.shape_cast %423 : vector<1x1x16x128xf32> to vector<16x128xf32>
    %425 = vector.shape_cast %422 : vector<16x128xf32> to vector<1x1x16x128xf32>
    tpu.vector_store %arg12[%c0_244, %c5_245, %c0_246, %c0_247], %425 {strides = array<i32>} : memref<1x8x16x128xf32, #tpu.memory_space<vmem>>, vector<1x1x16x128xf32>,
    %426 = vector.extract_strided_slice %344 {offsets = [6, 0, 0], sizes = [1, 16, 128], strides = [1, 1, 1]} : vector<8x16x128xf32> to vector<1x16x128xf32>
    %427 = vector.shape_cast %426 : vector<1x16x128xf32> to vector<16x128xf32>
    %cst_248 = arith.constant dense<0.000000e+00> : vector<16x128xf32>
    %428 = tpu.matmul %427, %345, %cst_248 {dimension_numbers = #tpu.dot_dimension_numbers<[1], [0], [0], [1], [0, 0, 1, 1], [], []>} : vector<16x128xf32>, vector<128x128xf32>, vector<16x128xf32> -> vector<16x128xf32>
    %429 = vector.broadcast %346 : vector<1x128xf32> to vector<16x128xf32>
    %430 = arith.mulf %428, %429 : vector<16x128xf32>
    %431 = vector.broadcast %347 : vector<1x128xf32> to vector<16x128xf32>
    %432 = arith.addf %430, %431 : vector<16x128xf32>
    %c7_249 = arith.constant 7 : index
    %c1_250 = arith.constant 1 : index
    %c0_251 = arith.constant 0 : index
    %433 = vector.load %arg13[%c7_249, %c1_250, %c0_251] : memref<10x18x128xf32, #tpu.memory_space<vmem>>, vector<1x16x128xf32>
    %434 = vector.shape_cast %433 : vector<1x16x128xf32> to vector<16x128xf32>
    %435 = arith.addf %432, %434 : vector<16x128xf32>
    %c0_252 = arith.constant 0 : index
    %c6_253 = arith.constant 6 : index
    %c0_254 = arith.constant 0 : index
    %c0_255 = arith.constant 0 : index
    %436 = vector.load %arg12[%c0_252, %c6_253, %c0_254, %c0_255] : memref<1x8x16x128xf32, #tpu.memory_space<vmem>>, vector<1x1x16x128xf32>
    %437 = vector.shape_cast %436 : vector<1x1x16x128xf32> to vector<16x128xf32>
    %438 = vector.shape_cast %435 : vector<16x128xf32> to vector<1x1x16x128xf32>
    tpu.vector_store %arg12[%c0_252, %c6_253, %c0_254, %c0_255], %438 {strides = array<i32>} : memref<1x8x16x128xf32, #tpu.memory_space<vmem>>, vector<1x1x16x128xf32>,
    %439 = vector.extract_strided_slice %344 {offsets = [7, 0, 0], sizes = [1, 16, 128], strides = [1, 1, 1]} : vector<8x16x128xf32> to vector<1x16x128xf32>
    %440 = vector.shape_cast %439 : vector<1x16x128xf32> to vector<16x128xf32>
    %cst_256 = arith.constant dense<0.000000e+00> : vector<16x128xf32>
    %441 = tpu.matmul %440, %345, %cst_256 {dimension_numbers = #tpu.dot_dimension_numbers<[1], [0], [0], [1], [0, 0, 1, 1], [], []>} : vector<16x128xf32>, vector<128x128xf32>, vector<16x128xf32> -> vector<16x128xf32>
    %442 = vector.broadcast %346 : vector<1x128xf32> to vector<16x128xf32>
    %443 = arith.mulf %441, %442 : vector<16x128xf32>
    %444 = vector.broadcast %347 : vector<1x128xf32> to vector<16x128xf32>
    %445 = arith.addf %443, %444 : vector<16x128xf32>
    %c8_257 = arith.constant 8 : index
    %c1_258 = arith.constant 1 : index
    %c0_259 = arith.constant 0 : index
    %446 = vector.load %arg13[%c8_257, %c1_258, %c0_259] : memref<10x18x128xf32, #tpu.memory_space<vmem>>, vector<1x16x128xf32>
    %447 = vector.shape_cast %446 : vector<1x16x128xf32> to vector<16x128xf32>
    %448 = arith.addf %445, %447 : vector<16x128xf32>
    %c0_260 = arith.constant 0 : index
    %c7_261 = arith.constant 7 : index
    %c0_262 = arith.constant 0 : index
    %c0_263 = arith.constant 0 : index
    %449 = vector.load %arg12[%c0_260, %c7_261, %c0_262, %c0_263] : memref<1x8x16x128xf32, #tpu.memory_space<vmem>>, vector<1x1x16x128xf32>
    %450 = vector.shape_cast %449 : vector<1x1x16x128xf32> to vector<16x128xf32>
    %451 = vector.shape_cast %448 : vector<16x128xf32> to vector<1x1x16x128xf32>
    tpu.vector_store %arg12[%c0_260, %c7_261, %c0_262, %c0_263], %451 {strides = array<i32>} : memref<1x8x16x128xf32, #tpu.memory_space<vmem>>, vector<1x1x16x128xf32>,
    return
  }
  func.func @transform_1(%arg0: i32, %arg1: i32) -> (i32, i32) {
    %c0_i32 = arith.constant 0 : i32
    %c0_i32_0 = arith.constant 0 : i32
    %c0_i32_1 = arith.constant 0 : i32
    return %c0_i32, %c0_i32_0 : i32, i32
  }
  func.func @transform_2(%arg0: i32, %arg1: i32) -> (i32, i32) {
    %c0_i32 = arith.constant 0 : i32
    %c0_i32_0 = arith.constant 0 : i32
    %c0_i32_1 = arith.constant 0 : i32
    return %c0_i32, %c0_i32_0 : i32, i32
  }
  func.func @transform_3(%arg0: i32, %arg1: i32) -> (i32, i32) {
    %c0_i32 = arith.constant 0 : i32
    %c0_i32_0 = arith.constant 0 : i32
    %c0_i32_1 = arith.constant 0 : i32
    return %c0_i32, %c0_i32_0 : i32, i32
  }
  func.func @transform_4(%arg0: i32, %arg1: i32) -> (i32, i32, i32) {
    %c0_i32 = arith.constant 0 : i32
    %c0_i32_0 = arith.constant 0 : i32
    %c0_i32_1 = arith.constant 0 : i32
    %c0_i32_2 = arith.constant 0 : i32
    return %c0_i32, %c0_i32_0, %c0_i32_1 : i32, i32, i32
  }
  func.func @transform_5(%arg0: i32, %arg1: i32) -> (i32, i32) {
    %c0_i32 = arith.constant 0 : i32
    %c0_i32_0 = arith.constant 0 : i32
    %c0_i32_1 = arith.constant 0 : i32
    return %c0_i32, %c0_i32_0 : i32, i32
  }
  func.func @transform_6(%arg0: i32, %arg1: i32) -> (i32, i32) {
    %c0_i32 = arith.constant 0 : i32
    %c0_i32_0 = arith.constant 0 : i32
    %c0_i32_1 = arith.constant 0 : i32
    return %c0_i32, %c0_i32_0 : i32, i32
  }
  func.func @transform_7(%arg0: i32, %arg1: i32) -> (i32, i32) {
    %c0_i32 = arith.constant 0 : i32
    %c0_i32_0 = arith.constant 0 : i32
    %c0_i32_1 = arith.constant 0 : i32
    return %c0_i32, %c0_i32_0 : i32, i32
  }
  func.func @transform_8(%arg0: i32, %arg1: i32) -> (i32, i32) {
    %c0_i32 = arith.constant 0 : i32
    %c0_i32_0 = arith.constant 0 : i32
    %c0_i32_1 = arith.constant 0 : i32
    return %c0_i32, %c0_i32_0 : i32, i32
  }
  func.func @transform_9(%arg0: i32, %arg1: i32) -> (i32, i32) {
    %c0_i32 = arith.constant 0 : i32
    %c0_i32_0 = arith.constant 0 : i32
    %c0_i32_1 = arith.constant 0 : i32
    return %c0_i32, %c0_i32_0 : i32, i32
  }
  func.func @transform_10(%arg0: i32, %arg1: i32) -> (i32, i32, i32, i32) {
    %c0_i32 = arith.constant 0 : i32
    %c0_i32_0 = arith.constant 0 : i32
    %c0_i32_1 = arith.constant 0 : i32
    return %arg0, %arg1, %c0_i32, %c0_i32_0 : i32, i32, i32, i32
  }
}

</mosaic_0001>

<llo_original>
// kernel: tpu_custom_call.1
$region0: #{tpu_custom_call.1}
  #allocation0 [shape = 'u32[]', space=smem, size = 0x4, offset = 0x4, fixed_abs, tag = 'smem constant byte address 0x4 - core index']
  #allocation1 [shape = 'u32[144,128]{1,0:T(1,128)}', space=vmem, size = 0x12000, scoped, tag = 'internal scratch']
  #allocation2 [shape = 'f32[10,18,128]{2,1,0:T(8,128)}', space=vmem, size = 0x1e000, scoped, tag = 'scratch operand']
  #allocation3 [shape = 'f32[10,18,128]{2,1,0:T(8,128)}', space=vmem, size = 0x1e000, scoped, tag = 'scratch operand']
  #allocation4 [shape = 's32[1]{0}', space=sflag, size = 0x4, scoped, tag = 'scratch operand']
  #allocation7 [shape = 's32[]', space=sflag, size = 0x4, offset = 0, fixed_abs, tag = 'sflag constant byte address 0x0 - dummy sync flag']
  %s0 = inlined_call_operand.vmem [shape: f32[2,18,18,128], index: 0, kind: input, shape index: {}]
  %s1 = inlined_call_operand.vmem [shape: f32[128,128], index: 1, kind: input, shape index: {}]
  %s2 = inlined_call_operand.vmem [shape: f32[1,128], index: 2, kind: input, shape index: {}]
  %s3 = inlined_call_operand.vmem [shape: f32[1,128], index: 3, kind: input, shape index: {}]
  %s4 = inlined_call_operand.vmem [shape: f32[3,3,128], index: 4, kind: input, shape index: {}]
  %s5 = inlined_call_operand.vmem [shape: f32[1,128], index: 5, kind: input, shape index: {}]
  %s6 = inlined_call_operand.vmem [shape: f32[1,128], index: 6, kind: input, shape index: {}]
  %s7 = inlined_call_operand.vmem [shape: f32[128,128], index: 7, kind: input, shape index: {}]
  %s8 = inlined_call_operand.vmem [shape: f32[1,128], index: 8, kind: input, shape index: {}]
  %s9 = inlined_call_operand.vmem [shape: f32[1,128], index: 9, kind: input, shape index: {}]
  %s10 = inlined_call_operand.hbm [shape: f32[2,16,16,128], index: 10, kind: output, shape index: {}]
  %s11 = sld [smem:[#allocation0]]
  $region106: #{tpu_custom_call.1} parent=0
    _
  %s13 = ssub.s32 1, %s11
  %s14 = scalar_select 0, %s13, %s11
  $region1: #{tpu_custom_call.1} parent=0
    #allocation5 [shape = 'u8[131072]{0}', space=vmem, size = 0x20000, scoped, tag = 'output window, operand 0']
    #allocation6 [shape = 's32[2]{0}', space=sflag, size = 0x8, scoped, tag = 'scoped memory for tpu_custom_call.1']
    %15 = vsyncpa [#allocation6], 0
    %s16 = scalar_lea.sflag [#allocation6], 1
    %17 = vsyncpa %s16, 0
    loop: start=0, step=1, limit=6
    $region2: #{tpu_custom_call.1} parent=1 // loop_pre_header
      _
    $region3: #{tpu_custom_call.1} parent=1 // loop_header
      %s19 = sphi 0, %s23
      %p20 = scmp.ge.s32.totalorder %s19, 6
      %s26 = sphi 0, %s38
      %s27 = sphi 0, %s34
      %s28 = sphi 0, %s26
      %s29 = sphi 0, %s27
      %s30 = sphi 0, %s28
      %s31 = sphi 0, %s29
      %s39 = sphi 0, %s39
      %s41 = sphi 0, %s39
      %s42 = sphi 0, %s41
      %s56 = sphi 0, %s42
      %s60 = sphi 0, %s60
      %s62 = sphi 0, %s60
      %s63 = sphi 0, %s62
      %s77 = sphi 0, %s63
      %s81 = sphi 0, %s81
      %s83 = sphi 0, %s81
      %s84 = sphi 0, %s83
      %s98 = sphi 0, %s84
      %s102 = sphi 0, %s102
      %s104 = sphi 0, %s102
      %s105 = sphi 0, %s104
      %s119 = sphi 0, %s105
      %s123 = sphi 0, %s123
      %s125 = sphi 0, %s123
      %s126 = sphi 0, %s125
      %s140 = sphi 0, %s126
      %s144 = sphi 0, %s144
      %s146 = sphi 0, %s144
      %s147 = sphi 0, %s146
      %s161 = sphi 0, %s147
      %s165 = sphi 0, %s165
      %s167 = sphi 0, %s165
      %s168 = sphi 0, %s167
      %s182 = sphi 0, %s168
      %s186 = sphi 0, %s186
      %s188 = sphi 0, %s186
      %s189 = sphi 0, %s188
      %s203 = sphi 0, %s189
      %s207 = sphi 0, %s207
      %s209 = sphi 0, %s207
      %s210 = sphi 0, %s209
      %s224 = sphi 0, %s210
      %s232 = sphi 0, %s234
      %s235 = sphi 0, %s232
      %s236 = sphi 0, %s235
      %s252 = sphi 0, %s236
    $region4: #{tpu_custom_call.1} parent=1 // loop_header_branch
      %22 = sbr.rel (%p20) target = $region8
    $region5: #{tpu_custom_call.1} parent=1 // loop_body
      %s24 = ssub.s32 %s19, 1
      %s25 = ssub.s32 %s19, 2
      %s32 = sadd.s32 1, %s27
      %p33 = scmp.ge.s32.totalorder %s32, 2
      %s34 = scalar_select %p33, 0, %s32
      %s35 = sadd.s32 1, %s26
      %s36 = scalar_select %p33, %s35, %s26
      %p37 = scmp.ge.s32.totalorder %s36, 2
      %s38 = scalar_select %p37, 0, %s36
      %s40 = sadd.s32 %s39, 1
      %p43 = scmp.eq.s32.totalorder %s19, 3
      %p44 = scmp.ne.s32.totalorder %s39, %s41
      %p45 = scmp.eq.s32.totalorder %s19, 0
      %p46 = por %p44, %p45
      %p47 = scmp.ne.s32.totalorder %s39, %s41
      %p48 = scmp.eq.s32.totalorder %s24, 3
      %p49 = por %p47, %p48
      %p50 = scmp.ne.s32.totalorder %s41, %s42
      %p51 = scmp.eq.s32.totalorder %s24, 0
      %p52 = por %p50, %p51
      %p53 = scmp.ne.s32.totalorder %s41, %s42
      %p54 = scmp.eq.s32.totalorder %s25, 3
      %p55 = por %p53, %p54
      %p57 = scmp.ne.s32.totalorder %s42, %s56
      %p58 = scmp.eq.s32.totalorder %s25, 0
      %p59 = por %p57, %p58
      %s61 = sadd.s32 %s60, 1
      %p64 = scmp.eq.s32.totalorder %s19, 3
      %p65 = scmp.ne.s32.totalorder %s60, %s62
      %p66 = scmp.eq.s32.totalorder %s19, 0
      %p67 = por %p65, %p66
      %p68 = scmp.ne.s32.totalorder %s60, %s62
      %p69 = scmp.eq.s32.totalorder %s24, 3
      %p70 = por %p68, %p69
      %p71 = scmp.ne.s32.totalorder %s62, %s63
      %p72 = scmp.eq.s32.totalorder %s24, 0
      %p73 = por %p71, %p72
      %p74 = scmp.ne.s32.totalorder %s62, %s63
      %p75 = scmp.eq.s32.totalorder %s25, 3
      %p76 = por %p74, %p75
      %p78 = scmp.ne.s32.totalorder %s63, %s77
      %p79 = scmp.eq.s32.totalorder %s25, 0
      %p80 = por %p78, %p79
      %s82 = sadd.s32 %s81, 1
      %p85 = scmp.eq.s32.totalorder %s19, 3
      %p86 = scmp.ne.s32.totalorder %s81, %s83
      %p87 = scmp.eq.s32.totalorder %s19, 0
      %p88 = por %p86, %p87
      %p89 = scmp.ne.s32.totalorder %s81, %s83
      %p90 = scmp.eq.s32.totalorder %s24, 3
      %p91 = por %p89, %p90
      %p92 = scmp.ne.s32.totalorder %s83, %s84
      %p93 = scmp.eq.s32.totalorder %s24, 0
      %p94 = por %p92, %p93
      %p95 = scmp.ne.s32.totalorder %s83, %s84
      %p96 = scmp.eq.s32.totalorder %s25, 3
      %p97 = por %p95, %p96
      %p99 = scmp.ne.s32.totalorder %s84, %s98
      %p100 = scmp.eq.s32.totalorder %s25, 0
      %p101 = por %p99, %p100
      %s103 = sadd.s32 %s102, 1
      %p106 = scmp.eq.s32.totalorder %s19, 3
      %p107 = scmp.ne.s32.totalorder %s102, %s104
      %p108 = scmp.eq.s32.totalorder %s19, 0
      %p109 = por %p107, %p108
      %p110 = scmp.ne.s32.totalorder %s102, %s104
      %p111 = scmp.eq.s32.totalorder %s24, 3
      %p112 = por %p110, %p111
      %p113 = scmp.ne.s32.totalorder %s104, %s105
      %p114 = scmp.eq.s32.totalorder %s24, 0
      %p115 = por %p113, %p114
      %p116 = scmp.ne.s32.totalorder %s104, %s105
      %p117 = scmp.eq.s32.totalorder %s25, 3
      %p118 = por %p116, %p117
      %p120 = scmp.ne.s32.totalorder %s105, %s119
      %p121 = scmp.eq.s32.totalorder %s25, 0
      %p122 = por %p120, %p121
      %s124 = sadd.s32 %s123, 1
      %p127 = scmp.eq.s32.totalorder %s19, 3
      %p128 = scmp.ne.s32.totalorder %s123, %s125
      %p129 = scmp.eq.s32.totalorder %s19, 0
      %p130 = por %p128, %p129
      %p131 = scmp.ne.s32.totalorder %s123, %s125
      %p132 = scmp.eq.s32.totalorder %s24, 3
      %p133 = por %p131, %p132
      %p134 = scmp.ne.s32.totalorder %s125, %s126
      %p135 = scmp.eq.s32.totalorder %s24, 0
      %p136 = por %p134, %p135
      %p137 = scmp.ne.s32.totalorder %s125, %s126
      %p138 = scmp.eq.s32.totalorder %s25, 3
      %p139 = por %p137, %p138
      %p141 = scmp.ne.s32.totalorder %s126, %s140
      %p142 = scmp.eq.s32.totalorder %s25, 0
      %p143 = por %p141, %p142
      %s145 = sadd.s32 %s144, 1
      %p148 = scmp.eq.s32.totalorder %s19, 3
      %p149 = scmp.ne.s32.totalorder %s144, %s146
      %p150 = scmp.eq.s32.totalorder %s19, 0
      %p151 = por %p149, %p150
      %p152 = scmp.ne.s32.totalorder %s144, %s146
      %p153 = scmp.eq.s32.totalorder %s24, 3
      %p154 = por %p152, %p153
      %p155 = scmp.ne.s32.totalorder %s146, %s147
      %p156 = scmp.eq.s32.totalorder %s24, 0
      %p157 = por %p155, %p156
      %p158 = scmp.ne.s32.totalorder %s146, %s147
      %p159 = scmp.eq.s32.totalorder %s25, 3
      %p160 = por %p158, %p159
      %p162 = scmp.ne.s32.totalorder %s147, %s161
      %p163 = scmp.eq.s32.totalorder %s25, 0
      %p164 = por %p162, %p163
      %s166 = sadd.s32 %s165, 1
      %p169 = scmp.eq.s32.totalorder %s19, 3
      %p170 = scmp.ne.s32.totalorder %s165, %s167
      %p171 = scmp.eq.s32.totalorder %s19, 0
      %p172 = por %p170, %p171
      %p173 = scmp.ne.s32.totalorder %s165, %s167
      %p174 = scmp.eq.s32.totalorder %s24, 3
      %p175 = por %p173, %p174
      %p176 = scmp.ne.s32.totalorder %s167, %s168
      %p177 = scmp.eq.s32.totalorder %s24, 0
      %p178 = por %p176, %p177
      %p179 = scmp.ne.s32.totalorder %s167, %s168
      %p180 = scmp.eq.s32.totalorder %s25, 3
      %p181 = por %p179, %p180
      %p183 = scmp.ne.s32.totalorder %s168, %s182
      %p184 = scmp.eq.s32.totalorder %s25, 0
      %p185 = por %p183, %p184
      %s187 = sadd.s32 %s186, 1
      %p190 = scmp.eq.s32.totalorder %s19, 3
      %p191 = scmp.ne.s32.totalorder %s186, %s188
      %p192 = scmp.eq.s32.totalorder %s19, 0
      %p193 = por %p191, %p192
      %p194 = scmp.ne.s32.totalorder %s186, %s188
      %p195 = scmp.eq.s32.totalorder %s24, 3
      %p196 = por %p194, %p195
      %p197 = scmp.ne.s32.totalorder %s188, %s189
      %p198 = scmp.eq.s32.totalorder %s24, 0
      %p199 = por %p197, %p198
      %p200 = scmp.ne.s32.totalorder %s188, %s189
      %p201 = scmp.eq.s32.totalorder %s25, 3
      %p202 = por %p200, %p201
      %p204 = scmp.ne.s32.totalorder %s189, %s203
      %p205 = scmp.eq.s32.totalorder %s25, 0
      %p206 = por %p204, %p205
      %s208 = sadd.s32 %s207, 1
      %p211 = scmp.eq.s32.totalorder %s19, 3
      %p212 = scmp.ne.s32.totalorder %s207, %s209
      %p213 = scmp.eq.s32.totalorder %s19, 0
      %p214 = por %p212, %p213
      %p215 = scmp.ne.s32.totalorder %s207, %s209
      %p216 = scmp.eq.s32.totalorder %s24, 3
      %p217 = por %p215, %p216
      %p218 = scmp.ne.s32.totalorder %s209, %s210
      %p219 = scmp.eq.s32.totalorder %s24, 0
      %p220 = por %p218, %p219
      %p221 = scmp.ne.s32.totalorder %s209, %s210
      %p222 = scmp.eq.s32.totalorder %s25, 3
      %p223 = por %p221, %p222
      %p225 = scmp.ne.s32.totalorder %s210, %s224
      %p226 = scmp.eq.s32.totalorder %s25, 0
      %p227 = por %p225, %p226
      %s228 = ssub.s32 %s26, %s38
      %s229 = ssub.s32 %s27, %s34
      %s230 = sor.u32 %s228, %s229
      %p231 = scmp.eq.s32.totalorder %s230, 0
      %s233 = sadd.s32 %s232, 1
      %s234 = scalar_select %p231, %s232, %s233
      %p237 = pneg %p231
      %p238 = scmp.eq.s32.totalorder %s19, 3
      %p239 = por %p237, %p238
      %p240 = scmp.ne.s32.totalorder %s232, %s235
      %p241 = scmp.eq.s32.totalorder %s19, 0
      %p242 = por %p240, %p241
      %p243 = scmp.ne.s32.totalorder %s232, %s235
      %p244 = scmp.eq.s32.totalorder %s24, 3
      %p245 = por %p243, %p244
      %p246 = scmp.ne.s32.totalorder %s235, %s236
      %p247 = scmp.eq.s32.totalorder %s24, 0
      %p248 = por %p246, %p247
      %p249 = scmp.ne.s32.totalorder %s235, %s236
      %p250 = scmp.eq.s32.totalorder %s25, 3
      %p251 = por %p249, %p250
      %p253 = scmp.ne.s32.totalorder %s236, %s252
      %p254 = scmp.eq.s32.totalorder %s25, 0
      %p255 = por %p253, %p254
      %p256 = scmp.le.s32.totalorder 1, %s19
      %p257 = scmp.lt.s32.totalorder %s19, 5
      %p258 = pnand %p256, %p257
      %p259 = pneg %p258
      // Predicated region
      $region9: #{tpu_custom_call.1} parent=5 // pred_check
        _
      $region10: #{tpu_custom_call.1} parent=5 // pred_check_branch
        %261 = sbr.rel (%p258) target = $region12
      $region11: #{tpu_custom_call.1} parent=5 // pred_region
        %s262 = ssub.s32 %s19, 1
        // Predicated region
        $region13: #{tpu_custom_call.1} parent=11 // pred_check
          %p263 = pneg %p52
        $region14: #{tpu_custom_call.1} parent=11 // pred_check_branch
          %265 = sbr.rel (%p263) target = $region16
        $region15: #{tpu_custom_call.1} parent=11 // pred_region
          _
        $region16: #{tpu_custom_call.1} parent=11 // pred_fallthru
          _
        // Predicated region
        $region17: #{tpu_custom_call.1} parent=11 // pred_check
          %p266 = pneg %p73
        $region18: #{tpu_custom_call.1} parent=11 // pred_check_branch
          %268 = sbr.rel (%p266) target = $region20
        $region19: #{tpu_custom_call.1} parent=11 // pred_region
          _
        $region20: #{tpu_custom_call.1} parent=11 // pred_fallthru
          _
        // Predicated region
        $region21: #{tpu_custom_call.1} parent=11 // pred_check
          %p269 = pneg %p94
        $region22: #{tpu_custom_call.1} parent=11 // pred_check_branch
          %271 = sbr.rel (%p269) target = $region24
        $region23: #{tpu_custom_call.1} parent=11 // pred_region
          _
        $region24: #{tpu_custom_call.1} parent=11 // pred_fallthru
          _
        // Predicated region
        $region25: #{tpu_custom_call.1} parent=11 // pred_check
          %p272 = pneg %p115
        $region26: #{tpu_custom_call.1} parent=11 // pred_check_branch
          %274 = sbr.rel (%p272) target = $region28
        $region27: #{tpu_custom_call.1} parent=11 // pred_region
          _
        $region28: #{tpu_custom_call.1} parent=11 // pred_fallthru
          _
        // Predicated region
        $region29: #{tpu_custom_call.1} parent=11 // pred_check
          %p275 = pneg %p136
        $region30: #{tpu_custom_call.1} parent=11 // pred_check_branch
          %277 = sbr.rel (%p275) target = $region32
        $region31: #{tpu_custom_call.1} parent=11 // pred_region
          _
        $region32: #{tpu_custom_call.1} parent=11 // pred_fallthru
          _
        // Predicated region
        $region33: #{tpu_custom_call.1} parent=11 // pred_check
          %p278 = pneg %p157
        $region34: #{tpu_custom_call.1} parent=11 // pred_check_branch
          %280 = sbr.rel (%p278) target = $region36
        $region35: #{tpu_custom_call.1} parent=11 // pred_region
          _
        $region36: #{tpu_custom_call.1} parent=11 // pred_fallthru
          _
        // Predicated region
        $region37: #{tpu_custom_call.1} parent=11 // pred_check
          %p281 = pneg %p178
        $region38: #{tpu_custom_call.1} parent=11 // pred_check_branch
          %283 = sbr.rel (%p281) target = $region40
        $region39: #{tpu_custom_call.1} parent=11 // pred_region
          _
        $region40: #{tpu_custom_call.1} parent=11 // pred_fallthru
          _
        // Predicated region
        $region41: #{tpu_custom_call.1} parent=11 // pred_check
          %p284 = pneg %p199
        $region42: #{tpu_custom_call.1} parent=11 // pred_check_branch
          %286 = sbr.rel (%p284) target = $region44
        $region43: #{tpu_custom_call.1} parent=11 // pred_region
          _
        $region44: #{tpu_custom_call.1} parent=11 // pred_fallthru
          _
        // Predicated region
        $region45: #{tpu_custom_call.1} parent=11 // pred_check
          %p287 = pneg %p220
        $region46: #{tpu_custom_call.1} parent=11 // pred_check_branch
          %289 = sbr.rel (%p287) target = $region48
        $region47: #{tpu_custom_call.1} parent=11 // pred_region
          _
        $region48: #{tpu_custom_call.1} parent=11 // pred_fallthru
          _
      $region12: #{tpu_custom_call.1} parent=5 // pred_fallthru
        _
      %p290 = scmp.lt.s32.totalorder %s19, 4
      // Predicated region
      $region49: #{tpu_custom_call.1} parent=5 // pred_check
        %p291 = pneg %p290
      $region50: #{tpu_custom_call.1} parent=5 // pred_check_branch
        %293 = sbr.rel (%p291) target = $region52
      $region51: #{tpu_custom_call.1} parent=5 // pred_region
        _
      $region52: #{tpu_custom_call.1} parent=5 // pred_fallthru
        _
      %p294 = scmp.le.s32.totalorder 1, %s19
      %p295 = scmp.lt.s32.totalorder %s19, 5
      %p296 = pnand %p294, %p295
      %p297 = pneg %p296
      // Predicated region
      $region53: #{tpu_custom_call.1} parent=5 // pred_check
        _
      $region54: #{tpu_custom_call.1} parent=5 // pred_check_branch
        %299 = sbr.rel (%p296) target = $region56
      $region55: #{tpu_custom_call.1} parent=5 // pred_region
        %s300 = ssub.s32 %s19, 1
        %p301 = pneg %p52
        %p302 = pneg %p49
        %p303 = pneg %p73
        %p304 = pneg %p70
        %p305 = pneg %p94
        %p306 = pneg %p91
        %p307 = pneg %p115
        %p308 = pneg %p112
        %p309 = pneg %p136
        %p310 = pneg %p133
        %p311 = pneg %p157
        %p312 = pneg %p154
        %p313 = pneg %p178
        %p314 = pneg %p175
        %p315 = pneg %p199
        %p316 = pneg %p196
        %p317 = pneg %p220
        %p318 = pneg %p217
        %p319 = pneg %p248
        %p320 = pneg %p245
        %s321 = sand.u32 %s235, 1
        %s322 = scalar_lea.sflag [#allocation6], %s321
        %s323 = sand.u32 %s235, 1
        %s324 = smul.addr %s323, 128
        %s325 = scalar_lea.vmem [#allocation5], %s324
        %s326 = smul.u32 8, %s29
        %s327 = smul.u32 %s29, 8
        %s328 = smul.u32 %s327, 24
        %s329 = smul.u32 %s28, 432
        %s330 = sadd.s32 %s328, %s329
        %s331 = scalar_lea.vmem %s0, %s330
        %p333 = scmp.lt.u32.totalorder 18, 8
        %p334 = pneg %p333
        // Predicated region
        $region57: #{tpu_custom_call.1} parent=55 // pred_check
          _
        $region58: #{tpu_custom_call.1} parent=55 // pred_check_branch
          %336 = sbr.rel (%p333) target = $region60
        $region59: #{tpu_custom_call.1} parent=55 // pred_region
          %s369 = sand.u32 18, 7
          %p370 = scmp.eq.s32.totalorder %s369, 0
          %p371 = pneg %p370
          // Predicated region
          $region72: #{tpu_custom_call.1} parent=59 // pred_check
            _
          $region73: #{tpu_custom_call.1} parent=59 // pred_check_branch
            %373 = sbr.rel (%p370) target = $region75
          $region74: #{tpu_custom_call.1} parent=59 // pred_region
            %s374 = sand.u32 18, 7
            %s375 = ssub.s32 18, %s374
            %s376 = scalar_lea.vmem %s331, %s375
            %s377 = ssub.s32 18, %s374
            %s378 = scalar_lea.vmem [#allocation2], %s377
            loop: start=0, step=1, limit=1
            $region76: #{tpu_custom_call.1} parent=74 // loop_pre_header
              _
            $region77: #{tpu_custom_call.1} parent=74 // loop_header
              %s380 = sphi 0, %s384
              %p381 = scmp.ge.s32.totalorder %s380, 1
              %s385 = sphi %s331, %s331
              %s386 = sphi [#allocation2], [#allocation2]
            $region78: #{tpu_custom_call.1} parent=74 // loop_header_branch
              %383 = sbr.rel (%p381) target = $region82
            $region79: #{tpu_custom_call.1} parent=74 // loop_body
              %v387 = vld [vmem:[%s385] sm:$0xff]
              %388 = vst [vmem:[%s386] sm:$0xff] %v387
              %v389 = vld [vmem:[%s385 + $0x8] sm:$0xff]
              %390 = vst [vmem:[%s386 + $0x8] sm:$0xff] %v389
              %v391 = vld [vmem:[%s385 + $0x18] sm:$0xff]
              %392 = vst [vmem:[%s386 + $0x18] sm:$0xff] %v391
              %v393 = vld [vmem:[%s385 + $0x20] sm:$0xff]
              %394 = vst [vmem:[%s386 + $0x20] sm:$0xff] %v393
              %v395 = vld [vmem:[%s385 + $0x30] sm:$0xff]
              %396 = vst [vmem:[%s386 + $0x30] sm:$0xff] %v395
              %v397 = vld [vmem:[%s385 + $0x38] sm:$0xff]
              %398 = vst [vmem:[%s386 + $0x38] sm:$0xff] %v397
              %v399 = vld [vmem:[%s385 + $0x48] sm:$0xff]
              %400 = vst [vmem:[%s386 + $0x48] sm:$0xff] %v399
              %v401 = vld [vmem:[%s385 + $0x50] sm:$0xff]
              %402 = vst [vmem:[%s386 + $0x50] sm:$0xff] %v401
              %v403 = vld [vmem:[%s385 + $0x60] sm:$0xff]
              %404 = vst [vmem:[%s386 + $0x60] sm:$0xff] %v403
              %v405 = vld [vmem:[%s385 + $0x68] sm:$0xff]
              %406 = vst [vmem:[%s386 + $0x68] sm:$0xff] %v405
              %v407 = vld [vmem:[%s385 + $0x78] sm:$0xff]
              %408 = vst [vmem:[%s386 + $0x78] sm:$0xff] %v407
              %v409 = vld [vmem:[%s385 + $0x80] sm:$0xff]
              %410 = vst [vmem:[%s386 + $0x80] sm:$0xff] %v409
              %v411 = vld [vmem:[%s385 + $0x90] sm:$0xff]
              %412 = vst [vmem:[%s386 + $0x90] sm:$0xff] %v411
              %v413 = vld [vmem:[%s385 + $0x98] sm:$0xff]
              %414 = vst [vmem:[%s386 + $0x98] sm:$0xff] %v413
              %v415 = vld [vmem:[%s385 + $0xa8] sm:$0xff]
              %416 = vst [vmem:[%s386 + $0xa8] sm:$0xff] %v415
              %v417 = vld [vmem:[%s385 + $0xb0] sm:$0xff]
              %418 = vst [vmem:[%s386 + $0xb0] sm:$0xff] %v417
              %v419 = vld [vmem:[%s385 + $0xc0] sm:$0xff]
              %420 = vst [vmem:[%s386 + $0xc0] sm:$0xff] %v419
              %v421 = vld [vmem:[%s385 + $0xc8] sm:$0xff]
              %422 = vst [vmem:[%s386 + $0xc8] sm:$0xff] %v421
              %v423 = vld [vmem:[%s385 + $0xd8] sm:$0xff]
              %424 = vst [vmem:[%s386 + $0xd8] sm:$0xff] %v423
              %v425 = vld [vmem:[%s385 + $0xe0] sm:$0xff]
              %426 = vst [vmem:[%s386 + $0xe0] sm:$0xff] %v425
            $region80: #{tpu_custom_call.1} parent=74 // loop_footer
              %s384 = sadd.s32 1, %s380
            $region81: #{tpu_custom_call.1} parent=74 // loop_footer_branch
              %379 = sbr.rel target = $region77
            $region82: #{tpu_custom_call.1} parent=74 // loop_exit
              _
            %s427 = sshllo.u32 0, %s374
            loop: start=0, step=1, limit=1
            $region83: #{tpu_custom_call.1} parent=74 // loop_pre_header
              _
            $region84: #{tpu_custom_call.1} parent=74 // loop_header
              %s429 = sphi 0, %s433
              %p430 = scmp.ge.s32.totalorder %s429, 1
              %s434 = sphi %s376, %s376
              %s435 = sphi %s378, %s378
            $region85: #{tpu_custom_call.1} parent=74 // loop_header_branch
              %432 = sbr.rel (%p430) target = $region89
            $region86: #{tpu_custom_call.1} parent=74 // loop_body
              %v436 = vld [vmem:[%s434] sm:%s427]
              %437 = vst [vmem:[%s435] sm:%s427] %v436
              %v438 = vld [vmem:[%s434 + $0x18] sm:%s427]
              %439 = vst [vmem:[%s435 + $0x18] sm:%s427] %v438
              %v440 = vld [vmem:[%s434 + $0x30] sm:%s427]
              %441 = vst [vmem:[%s435 + $0x30] sm:%s427] %v440
              %v442 = vld [vmem:[%s434 + $0x48] sm:%s427]
              %443 = vst [vmem:[%s435 + $0x48] sm:%s427] %v442
              %v444 = vld [vmem:[%s434 + $0x60] sm:%s427]
              %445 = vst [vmem:[%s435 + $0x60] sm:%s427] %v444
              %v446 = vld [vmem:[%s434 + $0x78] sm:%s427]
              %447 = vst [vmem:[%s435 + $0x78] sm:%s427] %v446
              %v448 = vld [vmem:[%s434 + $0x90] sm:%s427]
              %449 = vst [vmem:[%s435 + $0x90] sm:%s427] %v448
              %v450 = vld [vmem:[%s434 + $0xa8] sm:%s427]
              %451 = vst [vmem:[%s435 + $0xa8] sm:%s427] %v450
              %v452 = vld [vmem:[%s434 + $0xc0] sm:%s427]
              %453 = vst [vmem:[%s435 + $0xc0] sm:%s427] %v452
              %v454 = vld [vmem:[%s434 + $0xd8] sm:%s427]
              %455 = vst [vmem:[%s435 + $0xd8] sm:%s427] %v454
            $region87: #{tpu_custom_call.1} parent=74 // loop_footer
              %s433 = sadd.s32 1, %s429
            $region88: #{tpu_custom_call.1} parent=74 // loop_footer_branch
              %428 = sbr.rel target = $region84
            $region89: #{tpu_custom_call.1} parent=74 // loop_exit
              _
          $region75: #{tpu_custom_call.1} parent=59 // pred_fallthru
            _
        $region60: #{tpu_custom_call.1} parent=55 // pred_fallthru
          _
        // Predicated region
        $region61: #{tpu_custom_call.1} parent=55 // pred_check
          %p337 = pneg %p333
        $region62: #{tpu_custom_call.1} parent=55 // pred_check_branch
          %339 = sbr.rel (%p337) target = $region64
        $region63: #{tpu_custom_call.1} parent=55 // pred_region
          %s340 = sshllo.u32 0, 18
          loop: start=0, step=1, limit=1
          $region65: #{tpu_custom_call.1} parent=63 // loop_pre_header
            _
          $region66: #{tpu_custom_call.1} parent=63 // loop_header
            %s342 = sphi 0, %s346
            %p343 = scmp.ge.s32.totalorder %s342, 1
            %s347 = sphi %s331, %s331
            %s348 = sphi [#allocation2], [#allocation2]
          $region67: #{tpu_custom_call.1} parent=63 // loop_header_branch
            %345 = sbr.rel (%p343) target = $region71
          $region68: #{tpu_custom_call.1} parent=63 // loop_body
            %v349 = vld [vmem:[%s347] sm:%s340]
            %350 = vst [vmem:[%s348] sm:%s340] %v349
            %v351 = vld [vmem:[%s347 + $0x18] sm:%s340]
            %352 = vst [vmem:[%s348 + $0x18] sm:%s340] %v351
            %v353 = vld [vmem:[%s347 + $0x30] sm:%s340]
            %354 = vst [vmem:[%s348 + $0x30] sm:%s340] %v353
            %v355 = vld [vmem:[%s347 + $0x48] sm:%s340]
            %356 = vst [vmem:[%s348 + $0x48] sm:%s340] %v355
            %v357 = vld [vmem:[%s347 + $0x60] sm:%s340]
            %358 = vst [vmem:[%s348 + $0x60] sm:%s340] %v357
            %v359 = vld [vmem:[%s347 + $0x78] sm:%s340]
            %360 = vst [vmem:[%s348 + $0x78] sm:%s340] %v359
            %v361 = vld [vmem:[%s347 + $0x90] sm:%s340]
            %362 = vst [vmem:[%s348 + $0x90] sm:%s340] %v361
            %v363 = vld [vmem:[%s347 + $0xa8] sm:%s340]
            %364 = vst [vmem:[%s348 + $0xa8] sm:%s340] %v363
            %v365 = vld [vmem:[%s347 + $0xc0] sm:%s340]
            %366 = vst [vmem:[%s348 + $0xc0] sm:%s340] %v365
            %v367 = vld [vmem:[%s347 + $0xd8] sm:%s340]
            %368 = vst [vmem:[%s348 + $0xd8] sm:%s340] %v367
          $region69: #{tpu_custom_call.1} parent=63 // loop_footer
            %s346 = sadd.s32 1, %s342
          $region70: #{tpu_custom_call.1} parent=63 // loop_footer_branch
            %341 = sbr.rel target = $region66
          $region71: #{tpu_custom_call.1} parent=63 // loop_exit
            _
        $region64: #{tpu_custom_call.1} parent=55 // pred_fallthru
          _
        // Predicated region
        $region90: #{tpu_custom_call.1} parent=55 // pred_check
          _
        $region91: #{tpu_custom_call.1} parent=55 // pred_check_branch
          %458 = sbr.rel (0) target = $region93
        $region92: #{tpu_custom_call.1} parent=55 // pred_region
          %459 = vsyncadd [#allocation4], 2880
        $region93: #{tpu_custom_call.1} parent=55 // pred_fallthru
          _
        %s460 = smul.u32 10, 18
        %s461 = smul.u32 %s460, 1
        %s462 = sshll.u32 %s461, 4
        %463 = dma.done [#allocation4], %s462
        %v464 = vlaneseq
        %v465 = vshrl.u32 %v464, 7
        %v466 = vadd.s32 %v465, 8
        %v467 = vadd.s32 %v465, 16
        %vm468 = vcmp.ge.s32.totalorder %v465, 1
        %vm469 = vcmp.ge.s32.totalorder %v466, 1
        %vm470 = vcmp.ge.s32.totalorder %v467, 1
        %vm471 = vcmp.le.s32.totalorder %v465, 16
        %vm472 = vcmp.le.s32.totalorder %v466, 16
        %vm473 = vcmp.le.s32.totalorder %v467, 16
        %vm474 = vmand %vm468, %vm471
        %vm475 = vmand %vm469, %vm472
        %vm476 = vmand %vm470, %vm473
        %v477 = vld [vmem:[%s1] sm:$0xff]
        %v478 = vld [vmem:[%s1 + $0x8] sm:$0xff]
        %v479 = vld [vmem:[%s1 + $0x10] sm:$0xff]
        %v480 = vld [vmem:[%s1 + $0x18] sm:$0xff]
        %v481 = vld [vmem:[%s1 + $0x20] sm:$0xff]
        %v482 = vld [vmem:[%s1 + $0x28] sm:$0xff]
        %v483 = vld [vmem:[%s1 + $0x30] sm:$0xff]
        %v484 = vld [vmem:[%s1 + $0x38] sm:$0xff]
        %v485 = vld [vmem:[%s1 + $0x40] sm:$0xff]
        %v486 = vld [vmem:[%s1 + $0x48] sm:$0xff]
        %v487 = vld [vmem:[%s1 + $0x50] sm:$0xff]
        %v488 = vld [vmem:[%s1 + $0x58] sm:$0xff]
        %v489 = vld [vmem:[%s1 + $0x60] sm:$0xff]
        %v490 = vld [vmem:[%s1 + $0x68] sm:$0xff]
        %v491 = vld [vmem:[%s1 + $0x70] sm:$0xff]
        %v492 = vld [vmem:[%s1 + $0x78] sm:$0xff]
        %v493 = vld [vmem:[%s2] sm:$0x1]
        %v494 = vld [vmem:[%s3] sm:$0x1]
        %p495 = scmp.ge.s32.totalorder %s327, 1
        %p496 = scmp.le.s32.totalorder %s327, 16
        %p497 = pnand %p495, %p496
        %p498 = pneg %p497
        %v499 = vld [vmem:[#allocation2] sm:$0xff]
        %v500 = vld [vmem:[#allocation2 + $0x8] sm:$0xff]
        %v501 = vld [vmem:[#allocation2 + $0x10] sm:$0x3]
        %502 = vmatprep.subr.mxu0 0.0
        %503 = vmatpush1.msra.mxu0 %v477
        %504 = vmatprep.subr.mxu0 0.0
        %505 = vmatpush1.msra.mxu0 %v478
        %506 = vmatprep.subr.mxu0 0.0
        %507 = vmatpush1.msra.mxu0 %v479
        %508 = vmatprep.subr.mxu0 0.0
        %509 = vmatpush1.msra.mxu0 %v480
        %510 = vmatprep.subr.mxu0 0.0
        %511 = vmatpush1.msra.mxu0 %v481
        %512 = vmatprep.subr.mxu0 0.0
        %513 = vmatpush1.msra.mxu0 %v482
        %514 = vmatprep.subr.mxu0 0.0
        %515 = vmatpush1.msra.mxu0 %v483
        %516 = vmatprep.subr.mxu0 0.0
        %517 = vmatpush1.msra.mxu0 %v484
        %518 = vmatprep.subr.mxu0 0.0
        %519 = vmatpush1.msra.mxu0 %v485
        %520 = vmatprep.subr.mxu0 0.0
        %521 = vmatpush1.msra.mxu0 %v486
        %522 = vmatprep.subr.mxu0 0.0
        %523 = vmatpush1.msra.mxu0 %v487
        %524 = vmatprep.subr.mxu0 0.0
        %525 = vmatpush1.msra.mxu0 %v488
        %526 = vmatprep.subr.mxu0 0.0
        %527 = vmatpush1.msra.mxu0 %v489
        %528 = vmatprep.subr.mxu0 0.0
        %529 = vmatpush1.msra.mxu0 %v490
        %530 = vmatprep.subr.mxu0 0.0
        %531 = vmatpush1.msra.mxu0 %v491
        %532 = vmatprep.subr.mxu0 0.0
        %533 = vmatpush1.msra.mxu0 %v492
        %534 = vmatprep.subr.mxu0 0.0
        %535 = vmatpush1.msra.mxu0 0.0
        %536 = vmatprep.subr.mxu0 0.0
        %537 = vmatpush1.msra.mxu0 0.0
        %538 = vmatprep.subr.mxu0 0.0
        %539 = vmatpush1.msra.mxu0 0.0
        %540 = vmatprep.subr.mxu0 0.0
        %541 = vmatpush1.msra.mxu0 0.0
        %542 = vmatprep.subr.mxu0 0.0
        %543 = vmatpush1.msra.mxu0 0.0
        %544 = vmatprep.subr.mxu0 0.0
        %545 = vmatpush1.msra.mxu0 0.0
        %546 = vmatprep.subr.mxu0 0.0
        %547 = vmatpush1.msra.mxu0 0.0
        %548 = vmatprep.subr.mxu0 0.0
        %549 = vmatpush1.msra.mxu0 0.0
        %550 = vmatprep.subr.mxu0 0.0
        %551 = vmatpush1.msra.mxu0 0.0
        %552 = vmatprep.subr.mxu0 0.0
        %553 = vmatpush1.msra.mxu0 0.0
        %554 = vmatprep.subr.mxu0 0.0
        %555 = vmatpush1.msra.mxu0 0.0
        %556 = vmatprep.subr.mxu0 0.0
        %557 = vmatpush1.msra.mxu0 0.0
        %558 = vmatprep.subr.mxu0 0.0
        %559 = vmatpush1.msra.mxu0 0.0
        %560 = vmatprep.subr.mxu0 0.0
        %561 = vmatpush1.msra.mxu0 0.0
        %562 = vmatprep.subr.mxu0 0.0
        %563 = vmatpush1.msra.mxu0 0.0
        %564 = vmatprep.subr.mxu0 0.0
        %565 = vmatpush1.msra.mxu0 0.0
        %566 = vmatprep.mubr.f32.mxu0 0.0
        %567 = vmatmul.mubr.f32.gmra.mrb[0].mxu0 %v499
        %v568 = vpop.f32.mrb[0].mxu0
        %v569 = vadd.f32 0.0, %v568
        %v570 = vpop.f32.mrb[0].mxu0
        %571 = vmatprep.mubr.f32.mxu0 0.0
        %572 = vmatmul.mubr.f32.gmra.mrb[0].mxu0 %v500
        %v573 = vpop.f32.mrb[0].mxu0
        %v574 = vadd.f32 0.0, %v573
        %v575 = vpop.f32.mrb[0].mxu0
        %576 = vmatprep.mubr.f32.mxu0 0.0
        %577 = vmatmul.mubr.f32.gmra.mrb[0].mxu0 %v501
        %v578 = vpop.f32.mrb[0].mxu0
        %v579 = vadd.f32 0.0, %v578
        %v580 = vpop.f32.mrb[0].mxu0
        %581 = vdwg.mxu0
        %v583 = vlaneseq
        %v584 = vshrl.u32 %v583, 7
        %v585 = vsub.s32 0, %v584
        %v586 = vrot.slane %v493, %v585
        %v588 = vmul.f32 %v569, %v586
        %v589 = vmul.f32 %v574, %v586
        %v590 = vmul.f32 %v579, %v586
        %v592 = vlaneseq
        %v593 = vshrl.u32 %v592, 7
        %v594 = vsub.s32 0, %v593
        %v595 = vrot.slane %v494, %v594
        %v597 = vadd.f32 %v588, %v595
        %v598 = vadd.f32 %v589, %v595
        %v599 = vadd.f32 %v590, %v595
        %v600 = vmax.f32 %v597, 0.0
        %v601 = vmax.f32 %v598, 0.0
        %v602 = vmax.f32 %v599, 0.0
        %v603 = vmin.f32 %v600, 6.0
        %v604 = vmin.f32 %v601, 6.0
        %v605 = vmin.f32 %v602, 6.0
        %s606 = scalar_select %p498, 1, 0
        %v607 = vstv %s606
        %vm608 = vcmp.eq.s32.totalorder %v607, 1
        %vm609 = vmand %vm474, %vm608
        %vm610 = vmand %vm475, %vm608
        %vm611 = vmand %vm476, %vm608
        %v612 = vsel %vm609, 1, 0
        %v613 = vsel %vm610, 1, 0
        %v614 = vsel %vm611, 1, 0
        %vm615 = vcmp.eq.s32.totalorder %v612, 1
        %vm616 = vcmp.eq.s32.totalorder %v613, 1
        %vm617 = vcmp.eq.s32.totalorder %v614, 1
        %v618 = vsel %vm615, %v603, 0.0
        %v619 = vsel %vm616, %v604, 0.0
        %v620 = vsel %vm617, %v605, 0.0
        %621 = vst [vmem:[#allocation3] sm:$0xff] %v618
        %622 = vst [vmem:[#allocation3 + $0x8] sm:$0xff] %v619
        %623 = vst [vmem:[#allocation3 + $0x10] sm:$0x3] %v620
        %s624 = sadd.s32 %s327, 1
        %p625 = scmp.ge.s32.totalorder %s624, 1
        %p626 = scmp.le.s32.totalorder %s624, 16
        %p627 = pnand %p625, %p626
        %p628 = pneg %p627
        %s629 = scalar_lea.vmem [#allocation2], 24
        %v630 = vld [vmem:[%s629] sm:$0xff]
        %v631 = vld [vmem:[%s629 + $0x8] sm:$0xff]
        %v632 = vld [vmem:[%s629 + $0x10] sm:$0x3]
        %633 = vmatprep.subr.mxu0 0.0
        %634 = vmatpush1.msra.mxu0 %v477
        %635 = vmatprep.subr.mxu0 0.0
        %636 = vmatpush1.msra.mxu0 %v478
        %637 = vmatprep.subr.mxu0 0.0
        %638 = vmatpush1.msra.mxu0 %v479
        %639 = vmatprep.subr.mxu0 0.0
        %640 = vmatpush1.msra.mxu0 %v480
        %641 = vmatprep.subr.mxu0 0.0
        %642 = vmatpush1.msra.mxu0 %v481
        %643 = vmatprep.subr.mxu0 0.0
        %644 = vmatpush1.msra.mxu0 %v482
        %645 = vmatprep.subr.mxu0 0.0
        %646 = vmatpush1.msra.mxu0 %v483
        %647 = vmatprep.subr.mxu0 0.0
        %648 = vmatpush1.msra.mxu0 %v484
        %649 = vmatprep.subr.mxu0 0.0
        %650 = vmatpush1.msra.mxu0 %v485
        %651 = vmatprep.subr.mxu0 0.0
        %652 = vmatpush1.msra.mxu0 %v486
        %653 = vmatprep.subr.mxu0 0.0
        %654 = vmatpush1.msra.mxu0 %v487
        %655 = vmatprep.subr.mxu0 0.0
        %656 = vmatpush1.msra.mxu0 %v488
        %657 = vmatprep.subr.mxu0 0.0
        %658 = vmatpush1.msra.mxu0 %v489
        %659 = vmatprep.subr.mxu0 0.0
        %660 = vmatpush1.msra.mxu0 %v490
        %661 = vmatprep.subr.mxu0 0.0
        %662 = vmatpush1.msra.mxu0 %v491
        %663 = vmatprep.subr.mxu0 0.0
        %664 = vmatpush1.msra.mxu0 %v492
        %665 = vmatprep.subr.mxu0 0.0
        %666 = vmatpush1.msra.mxu0 0.0
        %667 = vmatprep.subr.mxu0 0.0
        %668 = vmatpush1.msra.mxu0 0.0
        %669 = vmatprep.subr.mxu0 0.0
        %670 = vmatpush1.msra.mxu0 0.0
        %671 = vmatprep.subr.mxu0 0.0
        %672 = vmatpush1.msra.mxu0 0.0
        %673 = vmatprep.subr.mxu0 0.0
        %674 = vmatpush1.msra.mxu0 0.0
        %675 = vmatprep.subr.mxu0 0.0
        %676 = vmatpush1.msra.mxu0 0.0
        %677 = vmatprep.subr.mxu0 0.0
        %678 = vmatpush1.msra.mxu0 0.0
        %679 = vmatprep.subr.mxu0 0.0
        %680 = vmatpush1.msra.mxu0 0.0
        %681 = vmatprep.subr.mxu0 0.0
        %682 = vmatpush1.msra.mxu0 0.0
        %683 = vmatprep.subr.mxu0 0.0
        %684 = vmatpush1.msra.mxu0 0.0
        %685 = vmatprep.subr.mxu0 0.0
        %686 = vmatpush1.msra.mxu0 0.0
        %687 = vmatprep.subr.mxu0 0.0
        %688 = vmatpush1.msra.mxu0 0.0
        %689 = vmatprep.subr.mxu0 0.0
        %690 = vmatpush1.msra.mxu0 0.0
        %691 = vmatprep.subr.mxu0 0.0
        %692 = vmatpush1.msra.mxu0 0.0
        %693 = vmatprep.subr.mxu0 0.0
        %694 = vmatpush1.msra.mxu0 0.0
        %695 = vmatprep.subr.mxu0 0.0
        %696 = vmatpush1.msra.mxu0 0.0
        %697 = vmatprep.mubr.f32.mxu0 0.0
        %698 = vmatmul.mubr.f32.gmra.mrb[0].mxu0 %v630
        %v699 = vpop.f32.mrb[0].mxu0
        %v700 = vadd.f32 0.0, %v699
        %v701 = vpop.f32.mrb[0].mxu0
        %702 = vmatprep.mubr.f32.mxu0 0.0
        %703 = vmatmul.mubr.f32.gmra.mrb[0].mxu0 %v631
        %v704 = vpop.f32.mrb[0].mxu0
        %v705 = vadd.f32 0.0, %v704
        %v706 = vpop.f32.mrb[0].mxu0
        %707 = vmatprep.mubr.f32.mxu0 0.0
        %708 = vmatmul.mubr.f32.gmra.mrb[0].mxu0 %v632
        %v709 = vpop.f32.mrb[0].mxu0
        %v710 = vadd.f32 0.0, %v709
        %v711 = vpop.f32.mrb[0].mxu0
        %712 = vdwg.mxu0
        %v713 = vmul.f32 %v700, %v586
        %v714 = vmul.f32 %v705, %v586
        %v715 = vmul.f32 %v710, %v586
        %v716 = vadd.f32 %v713, %v595
        %v717 = vadd.f32 %v714, %v595
        %v718 = vadd.f32 %v715, %v595
        %v719 = vmax.f32 %v716, 0.0
        %v720 = vmax.f32 %v717, 0.0
        %v721 = vmax.f32 %v718, 0.0
        %v722 = vmin.f32 %v719, 6.0
        %v723 = vmin.f32 %v720, 6.0
        %v724 = vmin.f32 %v721, 6.0
        %s725 = scalar_select %p628, 1, 0
        %v726 = vstv %s725
        %vm727 = vcmp.eq.s32.totalorder %v726, 1
        %vm728 = vmand %vm474, %vm727
        %vm729 = vmand %vm475, %vm727
        %vm730 = vmand %vm476, %vm727
        %v731 = vsel %vm728, 1, 0
        %v732 = vsel %vm729, 1, 0
        %v733 = vsel %vm730, 1, 0
        %vm734 = vcmp.eq.s32.totalorder %v731, 1
        %vm735 = vcmp.eq.s32.totalorder %v732, 1
        %vm736 = vcmp.eq.s32.totalorder %v733, 1
        %v737 = vsel %vm734, %v722, 0.0
        %v738 = vsel %vm735, %v723, 0.0
        %v739 = vsel %vm736, %v724, 0.0
        %s740 = scalar_lea.vmem [#allocation3], 24
        %741 = vst [vmem:[%s740] sm:$0xff] %v737
        %742 = vst [vmem:[%s740 + $0x8] sm:$0xff] %v738
        %743 = vst [vmem:[%s740 + $0x10] sm:$0x3] %v739
        %s744 = sadd.s32 %s327, 2
        %p745 = scmp.ge.s32.totalorder %s744, 1
        %p746 = scmp.le.s32.totalorder %s744, 16
        %p747 = pnand %p745, %p746
        %p748 = pneg %p747
        %s749 = scalar_lea.vmem [#allocation2], 48
        %v750 = vld [vmem:[%s749] sm:$0xff]
        %v751 = vld [vmem:[%s749 + $0x8] sm:$0xff]
        %v752 = vld [vmem:[%s749 + $0x10] sm:$0x3]
        %753 = vmatprep.subr.mxu0 0.0
        %754 = vmatpush1.msra.mxu0 %v477
        %755 = vmatprep.subr.mxu0 0.0
        %756 = vmatpush1.msra.mxu0 %v478
        %757 = vmatprep.subr.mxu0 0.0
        %758 = vmatpush1.msra.mxu0 %v479
        %759 = vmatprep.subr.mxu0 0.0
        %760 = vmatpush1.msra.mxu0 %v480
        %761 = vmatprep.subr.mxu0 0.0
        %762 = vmatpush1.msra.mxu0 %v481
        %763 = vmatprep.subr.mxu0 0.0
        %764 = vmatpush1.msra.mxu0 %v482
        %765 = vmatprep.subr.mxu0 0.0
        %766 = vmatpush1.msra.mxu0 %v483
        %767 = vmatprep.subr.mxu0 0.0
        %768 = vmatpush1.msra.mxu0 %v484
        %769 = vmatprep.subr.mxu0 0.0
        %770 = vmatpush1.msra.mxu0 %v485
        %771 = vmatprep.subr.mxu0 0.0
        %772 = vmatpush1.msra.mxu0 %v486
        %773 = vmatprep.subr.mxu0 0.0
        %774 = vmatpush1.msra.mxu0 %v487
        %775 = vmatprep.subr.mxu0 0.0
        %776 = vmatpush1.msra.mxu0 %v488
        %777 = vmatprep.subr.mxu0 0.0
        %778 = vmatpush1.msra.mxu0 %v489
        %779 = vmatprep.subr.mxu0 0.0
        %780 = vmatpush1.msra.mxu0 %v490
        %781 = vmatprep.subr.mxu0 0.0
        %782 = vmatpush1.msra.mxu0 %v491
        %783 = vmatprep.subr.mxu0 0.0
        %784 = vmatpush1.msra.mxu0 %v492
        %785 = vmatprep.subr.mxu0 0.0
        %786 = vmatpush1.msra.mxu0 0.0
        %787 = vmatprep.subr.mxu0 0.0
        %788 = vmatpush1.msra.mxu0 0.0
        %789 = vmatprep.subr.mxu0 0.0
        %790 = vmatpush1.msra.mxu0 0.0
        %791 = vmatprep.subr.mxu0 0.0
        %792 = vmatpush1.msra.mxu0 0.0
        %793 = vmatprep.subr.mxu0 0.0
        %794 = vmatpush1.msra.mxu0 0.0
        %795 = vmatprep.subr.mxu0 0.0
        %796 = vmatpush1.msra.mxu0 0.0
        %797 = vmatprep.subr.mxu0 0.0
        %798 = vmatpush1.msra.mxu0 0.0
        %799 = vmatprep.subr.mxu0 0.0
        %800 = vmatpush1.msra.mxu0 0.0
        %801 = vmatprep.subr.mxu0 0.0
        %802 = vmatpush1.msra.mxu0 0.0
        %803 = vmatprep.subr.mxu0 0.0
        %804 = vmatpush1.msra.mxu0 0.0
        %805 = vmatprep.subr.mxu0 0.0
        %806 = vmatpush1.msra.mxu0 0.0
        %807 = vmatprep.subr.mxu0 0.0
        %808 = vmatpush1.msra.mxu0 0.0
        %809 = vmatprep.subr.mxu0 0.0
        %810 = vmatpush1.msra.mxu0 0.0
        %811 = vmatprep.subr.mxu0 0.0
        %812 = vmatpush1.msra.mxu0 0.0
        %813 = vmatprep.subr.mxu0 0.0
        %814 = vmatpush1.msra.mxu0 0.0
        %815 = vmatprep.subr.mxu0 0.0
        %816 = vmatpush1.msra.mxu0 0.0
        %817 = vmatprep.mubr.f32.mxu0 0.0
        %818 = vmatmul.mubr.f32.gmra.mrb[0].mxu0 %v750
        %v819 = vpop.f32.mrb[0].mxu0
        %v820 = vadd.f32 0.0, %v819
        %v821 = vpop.f32.mrb[0].mxu0
        %822 = vmatprep.mubr.f32.mxu0 0.0
        %823 = vmatmul.mubr.f32.gmra.mrb[0].mxu0 %v751
        %v824 = vpop.f32.mrb[0].mxu0
        %v825 = vadd.f32 0.0, %v824
        %v826 = vpop.f32.mrb[0].mxu0
        %827 = vmatprep.mubr.f32.mxu0 0.0
        %828 = vmatmul.mubr.f32.gmra.mrb[0].mxu0 %v752
        %v829 = vpop.f32.mrb[0].mxu0
        %v830 = vadd.f32 0.0, %v829
        %v831 = vpop.f32.mrb[0].mxu0
        %832 = vdwg.mxu0
        %v833 = vmul.f32 %v820, %v586
        %v834 = vmul.f32 %v825, %v586
        %v835 = vmul.f32 %v830, %v586
        %v836 = vadd.f32 %v833, %v595
        %v837 = vadd.f32 %v834, %v595
        %v838 = vadd.f32 %v835, %v595
        %v839 = vmax.f32 %v836, 0.0
        %v840 = vmax.f32 %v837, 0.0
        %v841 = vmax.f32 %v838, 0.0
        %v842 = vmin.f32 %v839, 6.0
        %v843 = vmin.f32 %v840, 6.0
        %v844 = vmin.f32 %v841, 6.0
        %s845 = scalar_select %p748, 1, 0
        %v846 = vstv %s845
        %vm847 = vcmp.eq.s32.totalorder %v846, 1
        %vm848 = vmand %vm474, %vm847
        %vm849 = vmand %vm475, %vm847
        %vm850 = vmand %vm476, %vm847
        %v851 = vsel %vm848, 1, 0
        %v852 = vsel %vm849, 1, 0
        %v853 = vsel %vm850, 1, 0
        %vm854 = vcmp.eq.s32.totalorder %v851, 1
        %vm855 = vcmp.eq.s32.totalorder %v852, 1
        %vm856 = vcmp.eq.s32.totalorder %v853, 1
        %v857 = vsel %vm854, %v842, 0.0
        %v858 = vsel %vm855, %v843, 0.0
        %v859 = vsel %vm856, %v844, 0.0
        %s860 = scalar_lea.vmem [#allocation3], 48
        %861 = vst [vmem:[%s860] sm:$0xff] %v857
        %862 = vst [vmem:[%s860 + $0x8] sm:$0xff] %v858
        %863 = vst [vmem:[%s860 + $0x10] sm:$0x3] %v859
        %s864 = sadd.s32 %s327, 3
        %p865 = scmp.ge.s32.totalorder %s864, 1
        %p866 = scmp.le.s32.totalorder %s864, 16
        %p867 = pnand %p865, %p866
        %p868 = pneg %p867
        %s869 = scalar_lea.vmem [#allocation2], 72
        %v870 = vld [vmem:[%s869] sm:$0xff]
        %v871 = vld [vmem:[%s869 + $0x8] sm:$0xff]
        %v872 = vld [vmem:[%s869 + $0x10] sm:$0x3]
        %873 = vmatprep.subr.mxu0 0.0
        %874 = vmatpush1.msra.mxu0 %v477
        %875 = vmatprep.subr.mxu0 0.0
        %876 = vmatpush1.msra.mxu0 %v478
        %877 = vmatprep.subr.mxu0 0.0
        %878 = vmatpush1.msra.mxu0 %v479
        %879 = vmatprep.subr.mxu0 0.0
        %880 = vmatpush1.msra.mxu0 %v480
        %881 = vmatprep.subr.mxu0 0.0
        %882 = vmatpush1.msra.mxu0 %v481
        %883 = vmatprep.subr.mxu0 0.0
        %884 = vmatpush1.msra.mxu0 %v482
        %885 = vmatprep.subr.mxu0 0.0
        %886 = vmatpush1.msra.mxu0 %v483
        %887 = vmatprep.subr.mxu0 0.0
        %888 = vmatpush1.msra.mxu0 %v484
        %889 = vmatprep.subr.mxu0 0.0
        %890 = vmatpush1.msra.mxu0 %v485
        %891 = vmatprep.subr.mxu0 0.0
        %892 = vmatpush1.msra.mxu0 %v486
        %893 = vmatprep.subr.mxu0 0.0
        %894 = vmatpush1.msra.mxu0 %v487
        %895 = vmatprep.subr.mxu0 0.0
        %896 = vmatpush1.msra.mxu0 %v488
        %897 = vmatprep.subr.mxu0 0.0
        %898 = vmatpush1.msra.mxu0 %v489
        %899 = vmatprep.subr.mxu0 0.0
        %900 = vmatpush1.msra.mxu0 %v490
        %901 = vmatprep.subr.mxu0 0.0
        %902 = vmatpush1.msra.mxu0 %v491
        %903 = vmatprep.subr.mxu0 0.0
        %904 = vmatpush1.msra.mxu0 %v492
        %905 = vmatprep.subr.mxu0 0.0
        %906 = vmatpush1.msra.mxu0 0.0
        %907 = vmatprep.subr.mxu0 0.0
        %908 = vmatpush1.msra.mxu0 0.0
        %909 = vmatprep.subr.mxu0 0.0
        %910 = vmatpush1.msra.mxu0 0.0
        %911 = vmatprep.subr.mxu0 0.0
        %912 = vmatpush1.msra.mxu0 0.0
        %913 = vmatprep.subr.mxu0 0.0
        %914 = vmatpush1.msra.mxu0 0.0
        %915 = vmatprep.subr.mxu0 0.0
        %916 = vmatpush1.msra.mxu0 0.0
        %917 = vmatprep.subr.mxu0 0.0
        %918 = vmatpush1.msra.mxu0 0.0
        %919 = vmatprep.subr.mxu0 0.0
        %920 = vmatpush1.msra.mxu0 0.0
        %921 = vmatprep.subr.mxu0 0.0
        %922 = vmatpush1.msra.mxu0 0.0
        %923 = vmatprep.subr.mxu0 0.0
        %924 = vmatpush1.msra.mxu0 0.0
        %925 = vmatprep.subr.mxu0 0.0
        %926 = vmatpush1.msra.mxu0 0.0
        %927 = vmatprep.subr.mxu0 0.0
        %928 = vmatpush1.msra.mxu0 0.0
        %929 = vmatprep.subr.mxu0 0.0
        %930 = vmatpush1.msra.mxu0 0.0
        %931 = vmatprep.subr.mxu0 0.0
        %932 = vmatpush1.msra.mxu0 0.0
        %933 = vmatprep.subr.mxu0 0.0
        %934 = vmatpush1.msra.mxu0 0.0
        %935 = vmatprep.subr.mxu0 0.0
        %936 = vmatpush1.msra.mxu0 0.0
        %937 = vmatprep.mubr.f32.mxu0 0.0
        %938 = vmatmul.mubr.f32.gmra.mrb[0].mxu0 %v870
        %v939 = vpop.f32.mrb[0].mxu0
        %v940 = vadd.f32 0.0, %v939
        %v941 = vpop.f32.mrb[0].mxu0
        %942 = vmatprep.mubr.f32.mxu0 0.0
        %943 = vmatmul.mubr.f32.gmra.mrb[0].mxu0 %v871
        %v944 = vpop.f32.mrb[0].mxu0
        %v945 = vadd.f32 0.0, %v944
        %v946 = vpop.f32.mrb[0].mxu0
        %947 = vmatprep.mubr.f32.mxu0 0.0
        %948 = vmatmul.mubr.f32.gmra.mrb[0].mxu0 %v872
        %v949 = vpop.f32.mrb[0].mxu0
        %v950 = vadd.f32 0.0, %v949
        %v951 = vpop.f32.mrb[0].mxu0
        %952 = vdwg.mxu0
        %v953 = vmul.f32 %v940, %v586
        %v954 = vmul.f32 %v945, %v586
        %v955 = vmul.f32 %v950, %v586
        %v956 = vadd.f32 %v953, %v595
        %v957 = vadd.f32 %v954, %v595
        %v958 = vadd.f32 %v955, %v595
        %v959 = vmax.f32 %v956, 0.0
        %v960 = vmax.f32 %v957, 0.0
        %v961 = vmax.f32 %v958, 0.0
        %v962 = vmin.f32 %v959, 6.0
        %v963 = vmin.f32 %v960, 6.0
        %v964 = vmin.f32 %v961, 6.0
        %s965 = scalar_select %p868, 1, 0
        %v966 = vstv %s965
        %vm967 = vcmp.eq.s32.totalorder %v966, 1
        %vm968 = vmand %vm474, %vm967
        %vm969 = vmand %vm475, %vm967
        %vm970 = vmand %vm476, %vm967
        %v971 = vsel %vm968, 1, 0
        %v972 = vsel %vm969, 1, 0
        %v973 = vsel %vm970, 1, 0
        %vm974 = vcmp.eq.s32.totalorder %v971, 1
        %vm975 = vcmp.eq.s32.totalorder %v972, 1
        %vm976 = vcmp.eq.s32.totalorder %v973, 1
        %v977 = vsel %vm974, %v962, 0.0
        %v978 = vsel %vm975, %v963, 0.0
        %v979 = vsel %vm976, %v964, 0.0
        %s980 = scalar_lea.vmem [#allocation3], 72
        %981 = vst [vmem:[%s980] sm:$0xff] %v977
        %982 = vst [vmem:[%s980 + $0x8] sm:$0xff] %v978
        %983 = vst [vmem:[%s980 + $0x10] sm:$0x3] %v979
        %s984 = sadd.s32 %s327, 4
        %p985 = scmp.ge.s32.totalorder %s984, 1
        %p986 = scmp.le.s32.totalorder %s984, 16
        %p987 = pnand %p985, %p986
        %p988 = pneg %p987
        %s989 = scalar_lea.vmem [#allocation2], 96
        %v990 = vld [vmem:[%s989] sm:$0xff]
        %v991 = vld [vmem:[%s989 + $0x8] sm:$0xff]
        %v992 = vld [vmem:[%s989 + $0x10] sm:$0x3]
        %993 = vmatprep.subr.mxu0 0.0
        %994 = vmatpush1.msra.mxu0 %v477
        %995 = vmatprep.subr.mxu0 0.0
        %996 = vmatpush1.msra.mxu0 %v478
        %997 = vmatprep.subr.mxu0 0.0
        %998 = vmatpush1.msra.mxu0 %v479
        %999 = vmatprep.subr.mxu0 0.0
        %1000 = vmatpush1.msra.mxu0 %v480
        %1001 = vmatprep.subr.mxu0 0.0
        %1002 = vmatpush1.msra.mxu0 %v481
        %1003 = vmatprep.subr.mxu0 0.0
        %1004 = vmatpush1.msra.mxu0 %v482
        %1005 = vmatprep.subr.mxu0 0.0
        %1006 = vmatpush1.msra.mxu0 %v483
        %1007 = vmatprep.subr.mxu0 0.0
        %1008 = vmatpush1.msra.mxu0 %v484
        %1009 = vmatprep.subr.mxu0 0.0
        %1010 = vmatpush1.msra.mxu0 %v485
        %1011 = vmatprep.subr.mxu0 0.0
        %1012 = vmatpush1.msra.mxu0 %v486
        %1013 = vmatprep.subr.mxu0 0.0
        %1014 = vmatpush1.msra.mxu0 %v487
        %1015 = vmatprep.subr.mxu0 0.0
        %1016 = vmatpush1.msra.mxu0 %v488
        %1017 = vmatprep.subr.mxu0 0.0
        %1018 = vmatpush1.msra.mxu0 %v489
        %1019 = vmatprep.subr.mxu0 0.0
        %1020 = vmatpush1.msra.mxu0 %v490
        %1021 = vmatprep.subr.mxu0 0.0
        %1022 = vmatpush1.msra.mxu0 %v491
        %1023 = vmatprep.subr.mxu0 0.0
        %1024 = vmatpush1.msra.mxu0 %v492
        %1025 = vmatprep.subr.mxu0 0.0
        %1026 = vmatpush1.msra.mxu0 0.0
        %1027 = vmatprep.subr.mxu0 0.0
        %1028 = vmatpush1.msra.mxu0 0.0
        %1029 = vmatprep.subr.mxu0 0.0
        %1030 = vmatpush1.msra.mxu0 0.0
        %1031 = vmatprep.subr.mxu0 0.0
        %1032 = vmatpush1.msra.mxu0 0.0
        %1033 = vmatprep.subr.mxu0 0.0
        %1034 = vmatpush1.msra.mxu0 0.0
        %1035 = vmatprep.subr.mxu0 0.0
        %1036 = vmatpush1.msra.mxu0 0.0
        %1037 = vmatprep.subr.mxu0 0.0
        %1038 = vmatpush1.msra.mxu0 0.0
        %1039 = vmatprep.subr.mxu0 0.0
        %1040 = vmatpush1.msra.mxu0 0.0
        %1041 = vmatprep.subr.mxu0 0.0
        %1042 = vmatpush1.msra.mxu0 0.0
        %1043 = vmatprep.subr.mxu0 0.0
        %1044 = vmatpush1.msra.mxu0 0.0
        %1045 = vmatprep.subr.mxu0 0.0
        %1046 = vmatpush1.msra.mxu0 0.0
        %1047 = vmatprep.subr.mxu0 0.0
        %1048 = vmatpush1.msra.mxu0 0.0
        %1049 = vmatprep.subr.mxu0 0.0
        %1050 = vmatpush1.msra.mxu0 0.0
        %1051 = vmatprep.subr.mxu0 0.0
        %1052 = vmatpush1.msra.mxu0 0.0
        %1053 = vmatprep.subr.mxu0 0.0
        %1054 = vmatpush1.msra.mxu0 0.0
        %1055 = vmatprep.subr.mxu0 0.0
        %1056 = vmatpush1.msra.mxu0 0.0
        %1057 = vmatprep.mubr.f32.mxu0 0.0
        %1058 = vmatmul.mubr.f32.gmra.mrb[0].mxu0 %v990
        %v1059 = vpop.f32.mrb[0].mxu0
        %v1060 = vadd.f32 0.0, %v1059
        %v1061 = vpop.f32.mrb[0].mxu0
        %1062 = vmatprep.mubr.f32.mxu0 0.0
        %1063 = vmatmul.mubr.f32.gmra.mrb[0].mxu0 %v991
        %v1064 = vpop.f32.mrb[0].mxu0
        %v1065 = vadd.f32 0.0, %v1064
        %v1066 = vpop.f32.mrb[0].mxu0
        %1067 = vmatprep.mubr.f32.mxu0 0.0
        %1068 = vmatmul.mubr.f32.gmra.mrb[0].mxu0 %v992
        %v1069 = vpop.f32.mrb[0].mxu0
        %v1070 = vadd.f32 0.0, %v1069
        %v1071 = vpop.f32.mrb[0].mxu0
        %1072 = vdwg.mxu0
        %v1073 = vmul.f32 %v1060, %v586
        %v1074 = vmul.f32 %v1065, %v586
        %v1075 = vmul.f32 %v1070, %v586
        %v1076 = vadd.f32 %v1073, %v595
        %v1077 = vadd.f32 %v1074, %v595
        %v1078 = vadd.f32 %v1075, %v595
        %v1079 = vmax.f32 %v1076, 0.0
        %v1080 = vmax.f32 %v1077, 0.0
        %v1081 = vmax.f32 %v1078, 0.0
        %v1082 = vmin.f32 %v1079, 6.0
        %v1083 = vmin.f32 %v1080, 6.0
        %v1084 = vmin.f32 %v1081, 6.0
        %s1085 = scalar_select %p988, 1, 0
        %v1086 = vstv %s1085
        %vm1087 = vcmp.eq.s32.totalorder %v1086, 1
        %vm1088 = vmand %vm474, %vm1087
        %vm1089 = vmand %vm475, %vm1087
        %vm1090 = vmand %vm476, %vm1087
        %v1091 = vsel %vm1088, 1, 0
        %v1092 = vsel %vm1089, 1, 0
        %v1093 = vsel %vm1090, 1, 0
        %vm1094 = vcmp.eq.s32.totalorder %v1091, 1
        %vm1095 = vcmp.eq.s32.totalorder %v1092, 1
        %vm1096 = vcmp.eq.s32.totalorder %v1093, 1
        %v1097 = vsel %vm1094, %v1082, 0.0
        %v1098 = vsel %vm1095, %v1083, 0.0
        %v1099 = vsel %vm1096, %v1084, 0.0
        %s1100 = scalar_lea.vmem [#allocation3], 96
        %1101 = vst [vmem:[%s1100] sm:$0xff] %v1097
        %1102 = vst [vmem:[%s1100 + $0x8] sm:$0xff] %v1098
        %1103 = vst [vmem:[%s1100 + $0x10] sm:$0x3] %v1099
        %s1104 = sadd.s32 %s327, 5
        %p1105 = scmp.ge.s32.totalorder %s1104, 1
        %p1106 = scmp.le.s32.totalorder %s1104, 16
        %p1107 = pnand %p1105, %p1106
        %p1108 = pneg %p1107
        %s1109 = scalar_lea.vmem [#allocation2], 120
        %v1110 = vld [vmem:[%s1109] sm:$0xff]
        %v1111 = vld [vmem:[%s1109 + $0x8] sm:$0xff]
        %v1112 = vld [vmem:[%s1109 + $0x10] sm:$0x3]
        %1113 = vmatprep.subr.mxu0 0.0
        %1114 = vmatpush1.msra.mxu0 %v477
        %1115 = vmatprep.subr.mxu0 0.0
        %1116 = vmatpush1.msra.mxu0 %v478
        %1117 = vmatprep.subr.mxu0 0.0
        %1118 = vmatpush1.msra.mxu0 %v479
        %1119 = vmatprep.subr.mxu0 0.0
        %1120 = vmatpush1.msra.mxu0 %v480
        %1121 = vmatprep.subr.mxu0 0.0
        %1122 = vmatpush1.msra.mxu0 %v481
        %1123 = vmatprep.subr.mxu0 0.0
        %1124 = vmatpush1.msra.mxu0 %v482
        %1125 = vmatprep.subr.mxu0 0.0
        %1126 = vmatpush1.msra.mxu0 %v483
        %1127 = vmatprep.subr.mxu0 0.0
        %1128 = vmatpush1.msra.mxu0 %v484
        %1129 = vmatprep.subr.mxu0 0.0
        %1130 = vmatpush1.msra.mxu0 %v485
        %1131 = vmatprep.subr.mxu0 0.0
        %1132 = vmatpush1.msra.mxu0 %v486
        %1133 = vmatprep.subr.mxu0 0.0
        %1134 = vmatpush1.msra.mxu0 %v487
        %1135 = vmatprep.subr.mxu0 0.0
        %1136 = vmatpush1.msra.mxu0 %v488
        %1137 = vmatprep.subr.mxu0 0.0
        %1138 = vmatpush1.msra.mxu0 %v489
        %1139 = vmatprep.subr.mxu0 0.0
        %1140 = vmatpush1.msra.mxu0 %v490
        %1141 = vmatprep.subr.mxu0 0.0
        %1142 = vmatpush1.msra.mxu0 %v491
        %1143 = vmatprep.subr.mxu0 0.0
        %1144 = vmatpush1.msra.mxu0 %v492
        %1145 = vmatprep.subr.mxu0 0.0
        %1146 = vmatpush1.msra.mxu0 0.0
        %1147 = vmatprep.subr.mxu0 0.0
        %1148 = vmatpush1.msra.mxu0 0.0
        %1149 = vmatprep.subr.mxu0 0.0
        %1150 = vmatpush1.msra.mxu0 0.0
        %1151 = vmatprep.subr.mxu0 0.0
        %1152 = vmatpush1.msra.mxu0 0.0
        %1153 = vmatprep.subr.mxu0 0.0
        %1154 = vmatpush1.msra.mxu0 0.0
        %1155 = vmatprep.subr.mxu0 0.0
        %1156 = vmatpush1.msra.mxu0 0.0
        %1157 = vmatprep.subr.mxu0 0.0
        %1158 = vmatpush1.msra.mxu0 0.0
        %1159 = vmatprep.subr.mxu0 0.0
        %1160 = vmatpush1.msra.mxu0 0.0
        %1161 = vmatprep.subr.mxu0 0.0
        %1162 = vmatpush1.msra.mxu0 0.0
        %1163 = vmatprep.subr.mxu0 0.0
        %1164 = vmatpush1.msra.mxu0 0.0
        %1165 = vmatprep.subr.mxu0 0.0
        %1166 = vmatpush1.msra.mxu0 0.0
        %1167 = vmatprep.subr.mxu0 0.0
        %1168 = vmatpush1.msra.mxu0 0.0
        %1169 = vmatprep.subr.mxu0 0.0
        %1170 = vmatpush1.msra.mxu0 0.0
        %1171 = vmatprep.subr.mxu0 0.0
        %1172 = vmatpush1.msra.mxu0 0.0
        %1173 = vmatprep.subr.mxu0 0.0
        %1174 = vmatpush1.msra.mxu0 0.0
        %1175 = vmatprep.subr.mxu0 0.0
        %1176 = vmatpush1.msra.mxu0 0.0
        %1177 = vmatprep.mubr.f32.mxu0 0.0
        %1178 = vmatmul.mubr.f32.gmra.mrb[0].mxu0 %v1110
        %v1179 = vpop.f32.mrb[0].mxu0
        %v1180 = vadd.f32 0.0, %v1179
        %v1181 = vpop.f32.mrb[0].mxu0
        %1182 = vmatprep.mubr.f32.mxu0 0.0
        %1183 = vmatmul.mubr.f32.gmra.mrb[0].mxu0 %v1111
        %v1184 = vpop.f32.mrb[0].mxu0
        %v1185 = vadd.f32 0.0, %v1184
        %v1186 = vpop.f32.mrb[0].mxu0
        %1187 = vmatprep.mubr.f32.mxu0 0.0
        %1188 = vmatmul.mubr.f32.gmra.mrb[0].mxu0 %v1112
        %v1189 = vpop.f32.mrb[0].mxu0
        %v1190 = vadd.f32 0.0, %v1189
        %v1191 = vpop.f32.mrb[0].mxu0
        %1192 = vdwg.mxu0
        %v1193 = vmul.f32 %v1180, %v586
        %v1194 = vmul.f32 %v1185, %v586
        %v1195 = vmul.f32 %v1190, %v586
        %v1196 = vadd.f32 %v1193, %v595
        %v1197 = vadd.f32 %v1194, %v595
        %v1198 = vadd.f32 %v1195, %v595
        %v1199 = vmax.f32 %v1196, 0.0
        %v1200 = vmax.f32 %v1197, 0.0
        %v1201 = vmax.f32 %v1198, 0.0
        %v1202 = vmin.f32 %v1199, 6.0
        %v1203 = vmin.f32 %v1200, 6.0
        %v1204 = vmin.f32 %v1201, 6.0
        %s1205 = scalar_select %p1108, 1, 0
        %v1206 = vstv %s1205
        %vm1207 = vcmp.eq.s32.totalorder %v1206, 1
        %vm1208 = vmand %vm474, %vm1207
        %vm1209 = vmand %vm475, %vm1207
        %vm1210 = vmand %vm476, %vm1207
        %v1211 = vsel %vm1208, 1, 0
        %v1212 = vsel %vm1209, 1, 0
        %v1213 = vsel %vm1210, 1, 0
        %vm1214 = vcmp.eq.s32.totalorder %v1211, 1
        %vm1215 = vcmp.eq.s32.totalorder %v1212, 1
        %vm1216 = vcmp.eq.s32.totalorder %v1213, 1
        %v1217 = vsel %vm1214, %v1202, 0.0
        %v1218 = vsel %vm1215, %v1203, 0.0
        %v1219 = vsel %vm1216, %v1204, 0.0
        %s1220 = scalar_lea.vmem [#allocation3], 120
        %1221 = vst [vmem:[%s1220] sm:$0xff] %v1217
        %1222 = vst [vmem:[%s1220 + $0x8] sm:$0xff] %v1218
        %1223 = vst [vmem:[%s1220 + $0x10] sm:$0x3] %v1219
        %s1224 = sadd.s32 %s327, 6
        %p1225 = scmp.ge.s32.totalorder %s1224, 1
        %p1226 = scmp.le.s32.totalorder %s1224, 16
        %p1227 = pnand %p1225, %p1226
        %p1228 = pneg %p1227
        %s1229 = scalar_lea.vmem [#allocation2], 144
        %v1230 = vld [vmem:[%s1229] sm:$0xff]
        %v1231 = vld [vmem:[%s1229 + $0x8] sm:$0xff]
        %v1232 = vld [vmem:[%s1229 + $0x10] sm:$0x3]
        %1233 = vmatprep.subr.mxu0 0.0
        %1234 = vmatpush1.msra.mxu0 %v477
        %1235 = vmatprep.subr.mxu0 0.0
        %1236 = vmatpush1.msra.mxu0 %v478
        %1237 = vmatprep.subr.mxu0 0.0
        %1238 = vmatpush1.msra.mxu0 %v479
        %1239 = vmatprep.subr.mxu0 0.0
        %1240 = vmatpush1.msra.mxu0 %v480
        %1241 = vmatprep.subr.mxu0 0.0
        %1242 = vmatpush1.msra.mxu0 %v481
        %1243 = vmatprep.subr.mxu0 0.0
        %1244 = vmatpush1.msra.mxu0 %v482
        %1245 = vmatprep.subr.mxu0 0.0
        %1246 = vmatpush1.msra.mxu0 %v483
        %1247 = vmatprep.subr.mxu0 0.0
        %1248 = vmatpush1.msra.mxu0 %v484
        %1249 = vmatprep.subr.mxu0 0.0
        %1250 = vmatpush1.msra.mxu0 %v485
        %1251 = vmatprep.subr.mxu0 0.0
        %1252 = vmatpush1.msra.mxu0 %v486
        %1253 = vmatprep.subr.mxu0 0.0
        %1254 = vmatpush1.msra.mxu0 %v487
        %1255 = vmatprep.subr.mxu0 0.0
        %1256 = vmatpush1.msra.mxu0 %v488
        %1257 = vmatprep.subr.mxu0 0.0
        %1258 = vmatpush1.msra.mxu0 %v489
        %1259 = vmatprep.subr.mxu0 0.0
        %1260 = vmatpush1.msra.mxu0 %v490
        %1261 = vmatprep.subr.mxu0 0.0
        %1262 = vmatpush1.msra.mxu0 %v491
        %1263 = vmatprep.subr.mxu0 0.0
        %1264 = vmatpush1.msra.mxu0 %v492
        %1265 = vmatprep.subr.mxu0 0.0
        %1266 = vmatpush1.msra.mxu0 0.0
        %1267 = vmatprep.subr.mxu0 0.0
        %1268 = vmatpush1.msra.mxu0 0.0
        %1269 = vmatprep.subr.mxu0 0.0
        %1270 = vmatpush1.msra.mxu0 0.0
        %1271 = vmatprep.subr.mxu0 0.0
        %1272 = vmatpush1.msra.mxu0 0.0
        %1273 = vmatprep.subr.mxu0 0.0
        %1274 = vmatpush1.msra.mxu0 0.0
        %1275 = vmatprep.subr.mxu0 0.0
        %1276 = vmatpush1.msra.mxu0 0.0
        %1277 = vmatprep.subr.mxu0 0.0
        %1278 = vmatpush1.msra.mxu0 0.0
        %1279 = vmatprep.subr.mxu0 0.0
        %1280 = vmatpush1.msra.mxu0 0.0
        %1281 = vmatprep.subr.mxu0 0.0
        %1282 = vmatpush1.msra.mxu0 0.0
        %1283 = vmatprep.subr.mxu0 0.0
        %1284 = vmatpush1.msra.mxu0 0.0
        %1285 = vmatprep.subr.mxu0 0.0
        %1286 = vmatpush1.msra.mxu0 0.0
        %1287 = vmatprep.subr.mxu0 0.0
        %1288 = vmatpush1.msra.mxu0 0.0
        %1289 = vmatprep.subr.mxu0 0.0
        %1290 = vmatpush1.msra.mxu0 0.0
        %1291 = vmatprep.subr.mxu0 0.0
        %1292 = vmatpush1.msra.mxu0 0.0
        %1293 = vmatprep.subr.mxu0 0.0
        %1294 = vmatpush1.msra.mxu0 0.0
        %1295 = vmatprep.subr.mxu0 0.0
        %1296 = vmatpush1.msra.mxu0 0.0
        %1297 = vmatprep.mubr.f32.mxu0 0.0
        %1298 = vmatmul.mubr.f32.gmra.mrb[0].mxu0 %v1230
        %v1299 = vpop.f32.mrb[0].mxu0
        %v1300 = vadd.f32 0.0, %v1299
        %v1301 = vpop.f32.mrb[0].mxu0
        %1302 = vmatprep.mubr.f32.mxu0 0.0
        %1303 = vmatmul.mubr.f32.gmra.mrb[0].mxu0 %v1231
        %v1304 = vpop.f32.mrb[0].mxu0
        %v1305 = vadd.f32 0.0, %v1304
        %v1306 = vpop.f32.mrb[0].mxu0
        %1307 = vmatprep.mubr.f32.mxu0 0.0
        %1308 = vmatmul.mubr.f32.gmra.mrb[0].mxu0 %v1232
        %v1309 = vpop.f32.mrb[0].mxu0
        %v1310 = vadd.f32 0.0, %v1309
        %v1311 = vpop.f32.mrb[0].mxu0
        %1312 = vdwg.mxu0
        %v1313 = vmul.f32 %v1300, %v586
        %v1314 = vmul.f32 %v1305, %v586
        %v1315 = vmul.f32 %v1310, %v586
        %v1316 = vadd.f32 %v1313, %v595
        %v1317 = vadd.f32 %v1314, %v595
        %v1318 = vadd.f32 %v1315, %v595
        %v1319 = vmax.f32 %v1316, 0.0
        %v1320 = vmax.f32 %v1317, 0.0
        %v1321 = vmax.f32 %v1318, 0.0
        %v1322 = vmin.f32 %v1319, 6.0
        %v1323 = vmin.f32 %v1320, 6.0
        %v1324 = vmin.f32 %v1321, 6.0
        %s1325 = scalar_select %p1228, 1, 0
        %v1326 = vstv %s1325
        %vm1327 = vcmp.eq.s32.totalorder %v1326, 1
        %vm1328 = vmand %vm474, %vm1327
        %vm1329 = vmand %vm475, %vm1327
        %vm1330 = vmand %vm476, %vm1327
        %v1331 = vsel %vm1328, 1, 0
        %v1332 = vsel %vm1329, 1, 0
        %v1333 = vsel %vm1330, 1, 0
        %vm1334 = vcmp.eq.s32.totalorder %v1331, 1
        %vm1335 = vcmp.eq.s32.totalorder %v1332, 1
        %vm1336 = vcmp.eq.s32.totalorder %v1333, 1
        %v1337 = vsel %vm1334, %v1322, 0.0
        %v1338 = vsel %vm1335, %v1323, 0.0
        %v1339 = vsel %vm1336, %v1324, 0.0
        %s1340 = scalar_lea.vmem [#allocation3], 144
        %1341 = vst [vmem:[%s1340] sm:$0xff] %v1337
        %1342 = vst [vmem:[%s1340 + $0x8] sm:$0xff] %v1338
        %1343 = vst [vmem:[%s1340 + $0x10] sm:$0x3] %v1339
        %s1344 = sadd.s32 %s327, 7
        %p1345 = scmp.ge.s32.totalorder %s1344, 1
        %p1346 = scmp.le.s32.totalorder %s1344, 16
        %p1347 = pnand %p1345, %p1346
        %p1348 = pneg %p1347
        %s1349 = scalar_lea.vmem [#allocation2], 168
        %v1350 = vld [vmem:[%s1349] sm:$0xff]
        %v1351 = vld [vmem:[%s1349 + $0x8] sm:$0xff]
        %v1352 = vld [vmem:[%s1349 + $0x10] sm:$0x3]
        %1353 = vmatprep.subr.mxu0 0.0
        %1354 = vmatpush1.msra.mxu0 %v477
        %1355 = vmatprep.subr.mxu0 0.0
        %1356 = vmatpush1.msra.mxu0 %v478
        %1357 = vmatprep.subr.mxu0 0.0
        %1358 = vmatpush1.msra.mxu0 %v479
        %1359 = vmatprep.subr.mxu0 0.0
        %1360 = vmatpush1.msra.mxu0 %v480
        %1361 = vmatprep.subr.mxu0 0.0
        %1362 = vmatpush1.msra.mxu0 %v481
        %1363 = vmatprep.subr.mxu0 0.0
        %1364 = vmatpush1.msra.mxu0 %v482
        %1365 = vmatprep.subr.mxu0 0.0
        %1366 = vmatpush1.msra.mxu0 %v483
        %1367 = vmatprep.subr.mxu0 0.0
        %1368 = vmatpush1.msra.mxu0 %v484
        %1369 = vmatprep.subr.mxu0 0.0
        %1370 = vmatpush1.msra.mxu0 %v485
        %1371 = vmatprep.subr.mxu0 0.0
        %1372 = vmatpush1.msra.mxu0 %v486
        %1373 = vmatprep.subr.mxu0 0.0
        %1374 = vmatpush1.msra.mxu0 %v487
        %1375 = vmatprep.subr.mxu0 0.0
        %1376 = vmatpush1.msra.mxu0 %v488
        %1377 = vmatprep.subr.mxu0 0.0
        %1378 = vmatpush1.msra.mxu0 %v489
        %1379 = vmatprep.subr.mxu0 0.0
        %1380 = vmatpush1.msra.mxu0 %v490
        %1381 = vmatprep.subr.mxu0 0.0
        %1382 = vmatpush1.msra.mxu0 %v491
        %1383 = vmatprep.subr.mxu0 0.0
        %1384 = vmatpush1.msra.mxu0 %v492
        %1385 = vmatprep.subr.mxu0 0.0
        %1386 = vmatpush1.msra.mxu0 0.0
        %1387 = vmatprep.subr.mxu0 0.0
        %1388 = vmatpush1.msra.mxu0 0.0
        %1389 = vmatprep.subr.mxu0 0.0
        %1390 = vmatpush1.msra.mxu0 0.0
        %1391 = vmatprep.subr.mxu0 0.0
        %1392 = vmatpush1.msra.mxu0 0.0
        %1393 = vmatprep.subr.mxu0 0.0
        %1394 = vmatpush1.msra.mxu0 0.0
        %1395 = vmatprep.subr.mxu0 0.0
        %1396 = vmatpush1.msra.mxu0 0.0
        %1397 = vmatprep.subr.mxu0 0.0
        %1398 = vmatpush1.msra.mxu0 0.0
        %1399 = vmatprep.subr.mxu0 0.0
        %1400 = vmatpush1.msra.mxu0 0.0
        %1401 = vmatprep.subr.mxu0 0.0
        %1402 = vmatpush1.msra.mxu0 0.0
        %1403 = vmatprep.subr.mxu0 0.0
        %1404 = vmatpush1.msra.mxu0 0.0
        %1405 = vmatprep.subr.mxu0 0.0
        %1406 = vmatpush1.msra.mxu0 0.0
        %1407 = vmatprep.subr.mxu0 0.0
        %1408 = vmatpush1.msra.mxu0 0.0
        %1409 = vmatprep.subr.mxu0 0.0
        %1410 = vmatpush1.msra.mxu0 0.0
        %1411 = vmatprep.subr.mxu0 0.0
        %1412 = vmatpush1.msra.mxu0 0.0
        %1413 = vmatprep.subr.mxu0 0.0
        %1414 = vmatpush1.msra.mxu0 0.0
        %1415 = vmatprep.subr.mxu0 0.0
        %1416 = vmatpush1.msra.mxu0 0.0
        %1417 = vmatprep.mubr.f32.mxu0 0.0
        %1418 = vmatmul.mubr.f32.gmra.mrb[0].mxu0 %v1350
        %v1419 = vpop.f32.mrb[0].mxu0
        %v1420 = vadd.f32 0.0, %v1419
        %v1421 = vpop.f32.mrb[0].mxu0
        %1422 = vmatprep.mubr.f32.mxu0 0.0
        %1423 = vmatmul.mubr.f32.gmra.mrb[0].mxu0 %v1351
        %v1424 = vpop.f32.mrb[0].mxu0
        %v1425 = vadd.f32 0.0, %v1424
        %v1426 = vpop.f32.mrb[0].mxu0
        %1427 = vmatprep.mubr.f32.mxu0 0.0
        %1428 = vmatmul.mubr.f32.gmra.mrb[0].mxu0 %v1352
        %v1429 = vpop.f32.mrb[0].mxu0
        %v1430 = vadd.f32 0.0, %v1429
        %v1431 = vpop.f32.mrb[0].mxu0
        %1432 = vdwg.mxu0
        %v1433 = vmul.f32 %v1420, %v586
        %v1434 = vmul.f32 %v1425, %v586
        %v1435 = vmul.f32 %v1430, %v586
        %v1436 = vadd.f32 %v1433, %v595
        %v1437 = vadd.f32 %v1434, %v595
        %v1438 = vadd.f32 %v1435, %v595
        %v1439 = vmax.f32 %v1436, 0.0
        %v1440 = vmax.f32 %v1437, 0.0
        %v1441 = vmax.f32 %v1438, 0.0
        %v1442 = vmin.f32 %v1439, 6.0
        %v1443 = vmin.f32 %v1440, 6.0
        %v1444 = vmin.f32 %v1441, 6.0
        %s1445 = scalar_select %p1348, 1, 0
        %v1446 = vstv %s1445
        %vm1447 = vcmp.eq.s32.totalorder %v1446, 1
        %vm1448 = vmand %vm474, %vm1447
        %vm1449 = vmand %vm475, %vm1447
        %vm1450 = vmand %vm476, %vm1447
        %v1451 = vsel %vm1448, 1, 0
        %v1452 = vsel %vm1449, 1, 0
        %v1453 = vsel %vm1450, 1, 0
        %vm1454 = vcmp.eq.s32.totalorder %v1451, 1
        %vm1455 = vcmp.eq.s32.totalorder %v1452, 1
        %vm1456 = vcmp.eq.s32.totalorder %v1453, 1
        %v1457 = vsel %vm1454, %v1442, 0.0
        %v1458 = vsel %vm1455, %v1443, 0.0
        %v1459 = vsel %vm1456, %v1444, 0.0
        %s1460 = scalar_lea.vmem [#allocation3], 168
        %1461 = vst [vmem:[%s1460] sm:$0xff] %v1457
        %1462 = vst [vmem:[%s1460 + $0x8] sm:$0xff] %v1458
        %1463 = vst [vmem:[%s1460 + $0x10] sm:$0x3] %v1459
        %s1464 = sadd.s32 %s327, 8
        %p1465 = scmp.ge.s32.totalorder %s1464, 1
        %p1466 = scmp.le.s32.totalorder %s1464, 16
        %p1467 = pnand %p1465, %p1466
        %p1468 = pneg %p1467
        %s1469 = scalar_lea.vmem [#allocation2], 192
        %v1470 = vld [vmem:[%s1469] sm:$0xff]
        %v1471 = vld [vmem:[%s1469 + $0x8] sm:$0xff]
        %v1472 = vld [vmem:[%s1469 + $0x10] sm:$0x3]
        %1473 = vmatprep.subr.mxu0 0.0
        %1474 = vmatpush1.msra.mxu0 %v477
        %1475 = vmatprep.subr.mxu0 0.0
        %1476 = vmatpush1.msra.mxu0 %v478
        %1477 = vmatprep.subr.mxu0 0.0
        %1478 = vmatpush1.msra.mxu0 %v479
        %1479 = vmatprep.subr.mxu0 0.0
        %1480 = vmatpush1.msra.mxu0 %v480
        %1481 = vmatprep.subr.mxu0 0.0
        %1482 = vmatpush1.msra.mxu0 %v481
        %1483 = vmatprep.subr.mxu0 0.0
        %1484 = vmatpush1.msra.mxu0 %v482
        %1485 = vmatprep.subr.mxu0 0.0
        %1486 = vmatpush1.msra.mxu0 %v483
        %1487 = vmatprep.subr.mxu0 0.0
        %1488 = vmatpush1.msra.mxu0 %v484
        %1489 = vmatprep.subr.mxu0 0.0
        %1490 = vmatpush1.msra.mxu0 %v485
        %1491 = vmatprep.subr.mxu0 0.0
        %1492 = vmatpush1.msra.mxu0 %v486
        %1493 = vmatprep.subr.mxu0 0.0
        %1494 = vmatpush1.msra.mxu0 %v487
        %1495 = vmatprep.subr.mxu0 0.0
        %1496 = vmatpush1.msra.mxu0 %v488
        %1497 = vmatprep.subr.mxu0 0.0
        %1498 = vmatpush1.msra.mxu0 %v489
        %1499 = vmatprep.subr.mxu0 0.0
        %1500 = vmatpush1.msra.mxu0 %v490
        %1501 = vmatprep.subr.mxu0 0.0
        %1502 = vmatpush1.msra.mxu0 %v491
        %1503 = vmatprep.subr.mxu0 0.0
        %1504 = vmatpush1.msra.mxu0 %v492
        %1505 = vmatprep.subr.mxu0 0.0
        %1506 = vmatpush1.msra.mxu0 0.0
        %1507 = vmatprep.subr.mxu0 0.0
        %1508 = vmatpush1.msra.mxu0 0.0
        %1509 = vmatprep.subr.mxu0 0.0
        %1510 = vmatpush1.msra.mxu0 0.0
        %1511 = vmatprep.subr.mxu0 0.0
        %1512 = vmatpush1.msra.mxu0 0.0
        %1513 = vmatprep.subr.mxu0 0.0
        %1514 = vmatpush1.msra.mxu0 0.0
        %1515 = vmatprep.subr.mxu0 0.0
        %1516 = vmatpush1.msra.mxu0 0.0
        %1517 = vmatprep.subr.mxu0 0.0
        %1518 = vmatpush1.msra.mxu0 0.0
        %1519 = vmatprep.subr.mxu0 0.0
        %1520 = vmatpush1.msra.mxu0 0.0
        %1521 = vmatprep.subr.mxu0 0.0
        %1522 = vmatpush1.msra.mxu0 0.0
        %1523 = vmatprep.subr.mxu0 0.0
        %1524 = vmatpush1.msra.mxu0 0.0
        %1525 = vmatprep.subr.mxu0 0.0
        %1526 = vmatpush1.msra.mxu0 0.0
        %1527 = vmatprep.subr.mxu0 0.0
        %1528 = vmatpush1.msra.mxu0 0.0
        %1529 = vmatprep.subr.mxu0 0.0
        %1530 = vmatpush1.msra.mxu0 0.0
        %1531 = vmatprep.subr.mxu0 0.0
        %1532 = vmatpush1.msra.mxu0 0.0
        %1533 = vmatprep.subr.mxu0 0.0
        %1534 = vmatpush1.msra.mxu0 0.0
        %1535 = vmatprep.subr.mxu0 0.0
        %1536 = vmatpush1.msra.mxu0 0.0
        %1537 = vmatprep.mubr.f32.mxu0 0.0
        %1538 = vmatmul.mubr.f32.gmra.mrb[0].mxu0 %v1470
        %v1539 = vpop.f32.mrb[0].mxu0
        %v1540 = vadd.f32 0.0, %v1539
        %v1541 = vpop.f32.mrb[0].mxu0
        %1542 = vmatprep.mubr.f32.mxu0 0.0
        %1543 = vmatmul.mubr.f32.gmra.mrb[0].mxu0 %v1471
        %v1544 = vpop.f32.mrb[0].mxu0
        %v1545 = vadd.f32 0.0, %v1544
        %v1546 = vpop.f32.mrb[0].mxu0
        %1547 = vmatprep.mubr.f32.mxu0 0.0
        %1548 = vmatmul.mubr.f32.gmra.mrb[0].mxu0 %v1472
        %v1549 = vpop.f32.mrb[0].mxu0
        %v1550 = vadd.f32 0.0, %v1549
        %v1551 = vpop.f32.mrb[0].mxu0
        %1552 = vdwg.mxu0
        %v1553 = vmul.f32 %v1540, %v586
        %v1554 = vmul.f32 %v1545, %v586
        %v1555 = vmul.f32 %v1550, %v586
        %v1556 = vadd.f32 %v1553, %v595
        %v1557 = vadd.f32 %v1554, %v595
        %v1558 = vadd.f32 %v1555, %v595
        %v1559 = vmax.f32 %v1556, 0.0
        %v1560 = vmax.f32 %v1557, 0.0
        %v1561 = vmax.f32 %v1558, 0.0
        %v1562 = vmin.f32 %v1559, 6.0
        %v1563 = vmin.f32 %v1560, 6.0
        %v1564 = vmin.f32 %v1561, 6.0
        %s1565 = scalar_select %p1468, 1, 0
        %v1566 = vstv %s1565
        %vm1567 = vcmp.eq.s32.totalorder %v1566, 1
        %vm1568 = vmand %vm474, %vm1567
        %vm1569 = vmand %vm475, %vm1567
        %vm1570 = vmand %vm476, %vm1567
        %v1571 = vsel %vm1568, 1, 0
        %v1572 = vsel %vm1569, 1, 0
        %v1573 = vsel %vm1570, 1, 0
        %vm1574 = vcmp.eq.s32.totalorder %v1571, 1
        %vm1575 = vcmp.eq.s32.totalorder %v1572, 1
        %vm1576 = vcmp.eq.s32.totalorder %v1573, 1
        %v1577 = vsel %vm1574, %v1562, 0.0
        %v1578 = vsel %vm1575, %v1563, 0.0
        %v1579 = vsel %vm1576, %v1564, 0.0
        %s1580 = scalar_lea.vmem [#allocation3], 192
        %1581 = vst [vmem:[%s1580] sm:$0xff] %v1577
        %1582 = vst [vmem:[%s1580 + $0x8] sm:$0xff] %v1578
        %1583 = vst [vmem:[%s1580 + $0x10] sm:$0x3] %v1579
        %s1584 = sadd.s32 %s327, 9
        %p1585 = scmp.ge.s32.totalorder %s1584, 1
        %p1586 = scmp.le.s32.totalorder %s1584, 16
        %p1587 = pnand %p1585, %p1586
        %p1588 = pneg %p1587
        %s1589 = scalar_lea.vmem [#allocation2], 216
        %v1590 = vld [vmem:[%s1589] sm:$0xff]
        %v1591 = vld [vmem:[%s1589 + $0x8] sm:$0xff]
        %v1592 = vld [vmem:[%s1589 + $0x10] sm:$0x3]
        %1593 = vmatprep.subr.mxu0 0.0
        %1594 = vmatpush1.msra.mxu0 %v477
        %1595 = vmatprep.subr.mxu0 0.0
        %1596 = vmatpush1.msra.mxu0 %v478
        %1597 = vmatprep.subr.mxu0 0.0
        %1598 = vmatpush1.msra.mxu0 %v479
        %1599 = vmatprep.subr.mxu0 0.0
        %1600 = vmatpush1.msra.mxu0 %v480
        %1601 = vmatprep.subr.mxu0 0.0
        %1602 = vmatpush1.msra.mxu0 %v481
        %1603 = vmatprep.subr.mxu0 0.0
        %1604 = vmatpush1.msra.mxu0 %v482
        %1605 = vmatprep.subr.mxu0 0.0
        %1606 = vmatpush1.msra.mxu0 %v483
        %1607 = vmatprep.subr.mxu0 0.0
        %1608 = vmatpush1.msra.mxu0 %v484
        %1609 = vmatprep.subr.mxu0 0.0
        %1610 = vmatpush1.msra.mxu0 %v485
        %1611 = vmatprep.subr.mxu0 0.0
        %1612 = vmatpush1.msra.mxu0 %v486
        %1613 = vmatprep.subr.mxu0 0.0
        %1614 = vmatpush1.msra.mxu0 %v487
        %1615 = vmatprep.subr.mxu0 0.0
        %1616 = vmatpush1.msra.mxu0 %v488
        %1617 = vmatprep.subr.mxu0 0.0
        %1618 = vmatpush1.msra.mxu0 %v489
        %1619 = vmatprep.subr.mxu0 0.0
        %1620 = vmatpush1.msra.mxu0 %v490
        %1621 = vmatprep.subr.mxu0 0.0
        %1622 = vmatpush1.msra.mxu0 %v491
        %1623 = vmatprep.subr.mxu0 0.0
        %1624 = vmatpush1.msra.mxu0 %v492
        %1625 = vmatprep.subr.mxu0 0.0
        %1626 = vmatpush1.msra.mxu0 0.0
        %1627 = vmatprep.subr.mxu0 0.0
        %1628 = vmatpush1.msra.mxu0 0.0
        %1629 = vmatprep.subr.mxu0 0.0
        %1630 = vmatpush1.msra.mxu0 0.0
        %1631 = vmatprep.subr.mxu0 0.0
        %1632 = vmatpush1.msra.mxu0 0.0
        %1633 = vmatprep.subr.mxu0 0.0
        %1634 = vmatpush1.msra.mxu0 0.0
        %1635 = vmatprep.subr.mxu0 0.0
        %1636 = vmatpush1.msra.mxu0 0.0
        %1637 = vmatprep.subr.mxu0 0.0
        %1638 = vmatpush1.msra.mxu0 0.0
        %1639 = vmatprep.subr.mxu0 0.0
        %1640 = vmatpush1.msra.mxu0 0.0
        %1641 = vmatprep.subr.mxu0 0.0
        %1642 = vmatpush1.msra.mxu0 0.0
        %1643 = vmatprep.subr.mxu0 0.0
        %1644 = vmatpush1.msra.mxu0 0.0
        %1645 = vmatprep.subr.mxu0 0.0
        %1646 = vmatpush1.msra.mxu0 0.0
        %1647 = vmatprep.subr.mxu0 0.0
        %1648 = vmatpush1.msra.mxu0 0.0
        %1649 = vmatprep.subr.mxu0 0.0
        %1650 = vmatpush1.msra.mxu0 0.0
        %1651 = vmatprep.subr.mxu0 0.0
        %1652 = vmatpush1.msra.mxu0 0.0
        %1653 = vmatprep.subr.mxu0 0.0
        %1654 = vmatpush1.msra.mxu0 0.0
        %1655 = vmatprep.subr.mxu0 0.0
        %1656 = vmatpush1.msra.mxu0 0.0
        %1657 = vmatprep.mubr.f32.mxu0 0.0
        %1658 = vmatmul.mubr.f32.gmra.mrb[0].mxu0 %v1590
        %v1659 = vpop.f32.mrb[0].mxu0
        %v1660 = vadd.f32 0.0, %v1659
        %v1661 = vpop.f32.mrb[0].mxu0
        %1662 = vmatprep.mubr.f32.mxu0 0.0
        %1663 = vmatmul.mubr.f32.gmra.mrb[0].mxu0 %v1591
        %v1664 = vpop.f32.mrb[0].mxu0
        %v1665 = vadd.f32 0.0, %v1664
        %v1666 = vpop.f32.mrb[0].mxu0
        %1667 = vmatprep.mubr.f32.mxu0 0.0
        %1668 = vmatmul.mubr.f32.gmra.mrb[0].mxu0 %v1592
        %v1669 = vpop.f32.mrb[0].mxu0
        %v1670 = vadd.f32 0.0, %v1669
        %v1671 = vpop.f32.mrb[0].mxu0
        %1672 = vdwg.mxu0
        %v1673 = vmul.f32 %v1660, %v586
        %v1674 = vmul.f32 %v1665, %v586
        %v1675 = vmul.f32 %v1670, %v586
        %v1676 = vadd.f32 %v1673, %v595
        %v1677 = vadd.f32 %v1674, %v595
        %v1678 = vadd.f32 %v1675, %v595
        %v1679 = vmax.f32 %v1676, 0.0
        %v1680 = vmax.f32 %v1677, 0.0
        %v1681 = vmax.f32 %v1678, 0.0
        %v1682 = vmin.f32 %v1679, 6.0
        %v1683 = vmin.f32 %v1680, 6.0
        %v1684 = vmin.f32 %v1681, 6.0
        %s1685 = scalar_select %p1588, 1, 0
        %v1686 = vstv %s1685
        %vm1687 = vcmp.eq.s32.totalorder %v1686, 1
        %vm1688 = vmand %vm474, %vm1687
        %vm1689 = vmand %vm475, %vm1687
        %vm1690 = vmand %vm476, %vm1687
        %v1691 = vsel %vm1688, 1, 0
        %v1692 = vsel %vm1689, 1, 0
        %v1693 = vsel %vm1690, 1, 0
        %vm1694 = vcmp.eq.s32.totalorder %v1691, 1
        %vm1695 = vcmp.eq.s32.totalorder %v1692, 1
        %vm1696 = vcmp.eq.s32.totalorder %v1693, 1
        %v1697 = vsel %vm1694, %v1682, 0.0
        %v1698 = vsel %vm1695, %v1683, 0.0
        %v1699 = vsel %vm1696, %v1684, 0.0
        %s1700 = scalar_lea.vmem [#allocation3], 216
        %1701 = vst [vmem:[%s1700] sm:$0xff] %v1697
        %1702 = vst [vmem:[%s1700 + $0x8] sm:$0xff] %v1698
        %1703 = vst [vmem:[%s1700 + $0x10] sm:$0x3] %v1699
        %v1704 = vld [vmem:[#allocation3] sm:$0xff]
        %v1705 = vld [vmem:[#allocation3 + $0x8] sm:$0xff]
        %v1706 = vld [vmem:[#allocation3 + $0x18] sm:$0xff]
        %v1707 = vld [vmem:[#allocation3 + $0x20] sm:$0xff]
        %v1708 = vld [vmem:[#allocation3 + $0x30] sm:$0xff]
        %v1709 = vld [vmem:[#allocation3 + $0x38] sm:$0xff]
        %v1710 = vld [vmem:[#allocation3 + $0x48] sm:$0xff]
        %v1711 = vld [vmem:[#allocation3 + $0x50] sm:$0xff]
        %v1712 = vld [vmem:[#allocation3 + $0x60] sm:$0xff]
        %v1713 = vld [vmem:[#allocation3 + $0x68] sm:$0xff]
        %v1714 = vld [vmem:[#allocation3 + $0x78] sm:$0xff]
        %v1715 = vld [vmem:[#allocation3 + $0x80] sm:$0xff]
        %v1716 = vld [vmem:[#allocation3 + $0x90] sm:$0xff]
        %v1717 = vld [vmem:[#allocation3 + $0x98] sm:$0xff]
        %v1718 = vld [vmem:[#allocation3 + $0xa8] sm:$0xff]
        %v1719 = vld [vmem:[#allocation3 + $0xb0] sm:$0xff]
        %v1720 = vld [vmem:[%s4] sm:$0x1]
        %v1721 = vlaneseq
        %v1722 = vshrl.u32 %v1721, 7
        %v1723 = vsub.s32 0, %v1722
        %v1724 = vrot.slane %v1720, %v1723
        %v1725 = vmul.f32 %v1704, %v1724
        %v1726 = vmul.f32 %v1705, %v1724
        %v1727 = vmul.f32 %v1706, %v1724
        %v1728 = vmul.f32 %v1707, %v1724
        %v1729 = vmul.f32 %v1708, %v1724
        %v1730 = vmul.f32 %v1709, %v1724
        %v1731 = vmul.f32 %v1710, %v1724
        %v1732 = vmul.f32 %v1711, %v1724
        %v1733 = vmul.f32 %v1712, %v1724
        %v1734 = vmul.f32 %v1713, %v1724
        %v1735 = vmul.f32 %v1714, %v1724
        %v1736 = vmul.f32 %v1715, %v1724
        %v1737 = vmul.f32 %v1716, %v1724
        %v1738 = vmul.f32 %v1717, %v1724
        %v1739 = vmul.f32 %v1718, %v1724
        %v1740 = vmul.f32 %v1719, %v1724
        %v1741 = vadd.f32 %v1725, 0.0
        %v1742 = vadd.f32 %v1726, 0.0
        %v1743 = vadd.f32 %v1727, 0.0
        %v1744 = vadd.f32 %v1728, 0.0
        %v1745 = vadd.f32 %v1729, 0.0
        %v1746 = vadd.f32 %v1730, 0.0
        %v1747 = vadd.f32 %v1731, 0.0
        %v1748 = vadd.f32 %v1732, 0.0
        %v1749 = vadd.f32 %v1733, 0.0
        %v1750 = vadd.f32 %v1734, 0.0
        %v1751 = vadd.f32 %v1735, 0.0
        %v1752 = vadd.f32 %v1736, 0.0
        %v1753 = vadd.f32 %v1737, 0.0
        %v1754 = vadd.f32 %v1738, 0.0
        %v1755 = vadd.f32 %v1739, 0.0
        %v1756 = vadd.f32 %v1740, 0.0
        %v1757 = vld [vmem:[#allocation3 + $0x1] sm:$0xff]
        %v1758 = vld [vmem:[#allocation3 + $0x9] sm:$0xff]
        %v1759 = vld [vmem:[#allocation3 + $0x19] sm:$0xff]
        %v1760 = vld [vmem:[#allocation3 + $0x21] sm:$0xff]
        %v1761 = vld [vmem:[#allocation3 + $0x31] sm:$0xff]
        %v1762 = vld [vmem:[#allocation3 + $0x39] sm:$0xff]
        %v1763 = vld [vmem:[#allocation3 + $0x49] sm:$0xff]
        %v1764 = vld [vmem:[#allocation3 + $0x51] sm:$0xff]
        %v1765 = vld [vmem:[#allocation3 + $0x61] sm:$0xff]
        %v1766 = vld [vmem:[#allocation3 + $0x69] sm:$0xff]
        %v1767 = vld [vmem:[#allocation3 + $0x79] sm:$0xff]
        %v1768 = vld [vmem:[#allocation3 + $0x81] sm:$0xff]
        %v1769 = vld [vmem:[#allocation3 + $0x91] sm:$0xff]
        %v1770 = vld [vmem:[#allocation3 + $0x99] sm:$0xff]
        %v1771 = vld [vmem:[#allocation3 + $0xa9] sm:$0xff]
        %v1772 = vld [vmem:[#allocation3 + $0xb1] sm:$0xff]
        %v1773 = vld [vmem:[%s4 + $0x1] sm:$0x1]
        %v1774 = vlaneseq
        %v1775 = vshrl.u32 %v1774, 7
        %v1776 = vsub.s32 0, %v1775
        %v1777 = vrot.slane %v1773, %v1776
        %v1778 = vmul.f32 %v1757, %v1777
        %v1779 = vmul.f32 %v1758, %v1777
        %v1780 = vmul.f32 %v1759, %v1777
        %v1781 = vmul.f32 %v1760, %v1777
        %v1782 = vmul.f32 %v1761, %v1777
        %v1783 = vmul.f32 %v1762, %v1777
        %v1784 = vmul.f32 %v1763, %v1777
        %v1785 = vmul.f32 %v1764, %v1777
        %v1786 = vmul.f32 %v1765, %v1777
        %v1787 = vmul.f32 %v1766, %v1777
        %v1788 = vmul.f32 %v1767, %v1777
        %v1789 = vmul.f32 %v1768, %v1777
        %v1790 = vmul.f32 %v1769, %v1777
        %v1791 = vmul.f32 %v1770, %v1777
        %v1792 = vmul.f32 %v1771, %v1777
        %v1793 = vmul.f32 %v1772, %v1777
        %v1794 = vadd.f32 %v1741, %v1778
        %v1795 = vadd.f32 %v1742, %v1779
        %v1796 = vadd.f32 %v1743, %v1780
        %v1797 = vadd.f32 %v1744, %v1781
        %v1798 = vadd.f32 %v1745, %v1782
        %v1799 = vadd.f32 %v1746, %v1783
        %v1800 = vadd.f32 %v1747, %v1784
        %v1801 = vadd.f32 %v1748, %v1785
        %v1802 = vadd.f32 %v1749, %v1786
        %v1803 = vadd.f32 %v1750, %v1787
        %v1804 = vadd.f32 %v1751, %v1788
        %v1805 = vadd.f32 %v1752, %v1789
        %v1806 = vadd.f32 %v1753, %v1790
        %v1807 = vadd.f32 %v1754, %v1791
        %v1808 = vadd.f32 %v1755, %v1792
        %v1809 = vadd.f32 %v1756, %v1793
        %v1810 = vld [vmem:[#allocation3 + $0x2] sm:$0xff]
        %v1811 = vld [vmem:[#allocation3 + $0xa] sm:$0xff]
        %v1812 = vld [vmem:[#allocation3 + $0x1a] sm:$0xff]
        %v1813 = vld [vmem:[#allocation3 + $0x22] sm:$0xff]
        %v1814 = vld [vmem:[#allocation3 + $0x32] sm:$0xff]
        %v1815 = vld [vmem:[#allocation3 + $0x3a] sm:$0xff]
        %v1816 = vld [vmem:[#allocation3 + $0x4a] sm:$0xff]
        %v1817 = vld [vmem:[#allocation3 + $0x52] sm:$0xff]
        %v1818 = vld [vmem:[#allocation3 + $0x62] sm:$0xff]
        %v1819 = vld [vmem:[#allocation3 + $0x6a] sm:$0xff]
        %v1820 = vld [vmem:[#allocation3 + $0x7a] sm:$0xff]
        %v1821 = vld [vmem:[#allocation3 + $0x82] sm:$0xff]
        %v1822 = vld [vmem:[#allocation3 + $0x92] sm:$0xff]
        %v1823 = vld [vmem:[#allocation3 + $0x9a] sm:$0xff]
        %v1824 = vld [vmem:[#allocation3 + $0xaa] sm:$0xff]
        %v1825 = vld [vmem:[#allocation3 + $0xb2] sm:$0xff]
        %v1826 = vld [vmem:[%s4 + $0x2] sm:$0x1]
        %v1827 = vlaneseq
        %v1828 = vshrl.u32 %v1827, 7
        %v1829 = vsub.s32 0, %v1828
        %v1830 = vrot.slane %v1826, %v1829
        %v1831 = vmul.f32 %v1810, %v1830
        %v1832 = vmul.f32 %v1811, %v1830
        %v1833 = vmul.f32 %v1812, %v1830
        %v1834 = vmul.f32 %v1813, %v1830
        %v1835 = vmul.f32 %v1814, %v1830
        %v1836 = vmul.f32 %v1815, %v1830
        %v1837 = vmul.f32 %v1816, %v1830
        %v1838 = vmul.f32 %v1817, %v1830
        %v1839 = vmul.f32 %v1818, %v1830
        %v1840 = vmul.f32 %v1819, %v1830
        %v1841 = vmul.f32 %v1820, %v1830
        %v1842 = vmul.f32 %v1821, %v1830
        %v1843 = vmul.f32 %v1822, %v1830
        %v1844 = vmul.f32 %v1823, %v1830
        %v1845 = vmul.f32 %v1824, %v1830
        %v1846 = vmul.f32 %v1825, %v1830
        %v1847 = vadd.f32 %v1794, %v1831
        %v1848 = vadd.f32 %v1795, %v1832
        %v1849 = vadd.f32 %v1796, %v1833
        %v1850 = vadd.f32 %v1797, %v1834
        %v1851 = vadd.f32 %v1798, %v1835
        %v1852 = vadd.f32 %v1799, %v1836
        %v1853 = vadd.f32 %v1800, %v1837
        %v1854 = vadd.f32 %v1801, %v1838
        %v1855 = vadd.f32 %v1802, %v1839
        %v1856 = vadd.f32 %v1803, %v1840
        %v1857 = vadd.f32 %v1804, %v1841
        %v1858 = vadd.f32 %v1805, %v1842
        %v1859 = vadd.f32 %v1806, %v1843
        %v1860 = vadd.f32 %v1807, %v1844
        %v1861 = vadd.f32 %v1808, %v1845
        %v1862 = vadd.f32 %v1809, %v1846
        %v1863 = vld [vmem:[%s740] sm:$0xff]
        %v1864 = vld [vmem:[%s740 + $0x8] sm:$0xff]
        %v1865 = vld [vmem:[%s740 + $0x18] sm:$0xff]
        %v1866 = vld [vmem:[%s740 + $0x20] sm:$0xff]
        %v1867 = vld [vmem:[%s740 + $0x30] sm:$0xff]
        %v1868 = vld [vmem:[%s740 + $0x38] sm:$0xff]
        %v1869 = vld [vmem:[%s740 + $0x48] sm:$0xff]
        %v1870 = vld [vmem:[%s740 + $0x50] sm:$0xff]
        %v1871 = vld [vmem:[%s740 + $0x60] sm:$0xff]
        %v1872 = vld [vmem:[%s740 + $0x68] sm:$0xff]
        %v1873 = vld [vmem:[%s740 + $0x78] sm:$0xff]
        %v1874 = vld [vmem:[%s740 + $0x80] sm:$0xff]
        %v1875 = vld [vmem:[%s740 + $0x90] sm:$0xff]
        %v1876 = vld [vmem:[%s740 + $0x98] sm:$0xff]
        %v1877 = vld [vmem:[%s740 + $0xa8] sm:$0xff]
        %v1878 = vld [vmem:[%s740 + $0xb0] sm:$0xff]
        %s1879 = scalar_lea.vmem %s4, 4
        %v1880 = vld [vmem:[%s1879] sm:$0x1]
        %v1881 = vlaneseq
        %v1882 = vshrl.u32 %v1881, 7
        %v1883 = vsub.s32 0, %v1882
        %v1884 = vrot.slane %v1880, %v1883
        %v1885 = vmul.f32 %v1863, %v1884
        %v1886 = vmul.f32 %v1864, %v1884
        %v1887 = vmul.f32 %v1865, %v1884
        %v1888 = vmul.f32 %v1866, %v1884
        %v1889 = vmul.f32 %v1867, %v1884
        %v1890 = vmul.f32 %v1868, %v1884
        %v1891 = vmul.f32 %v1869, %v1884
        %v1892 = vmul.f32 %v1870, %v1884
        %v1893 = vmul.f32 %v1871, %v1884
        %v1894 = vmul.f32 %v1872, %v1884
        %v1895 = vmul.f32 %v1873, %v1884
        %v1896 = vmul.f32 %v1874, %v1884
        %v1897 = vmul.f32 %v1875, %v1884
        %v1898 = vmul.f32 %v1876, %v1884
        %v1899 = vmul.f32 %v1877, %v1884
        %v1900 = vmul.f32 %v1878, %v1884
        %v1901 = vadd.f32 %v1847, %v1885
        %v1902 = vadd.f32 %v1848, %v1886
        %v1903 = vadd.f32 %v1849, %v1887
        %v1904 = vadd.f32 %v1850, %v1888
        %v1905 = vadd.f32 %v1851, %v1889
        %v1906 = vadd.f32 %v1852, %v1890
        %v1907 = vadd.f32 %v1853, %v1891
        %v1908 = vadd.f32 %v1854, %v1892
        %v1909 = vadd.f32 %v1855, %v1893
        %v1910 = vadd.f32 %v1856, %v1894
        %v1911 = vadd.f32 %v1857, %v1895
        %v1912 = vadd.f32 %v1858, %v1896
        %v1913 = vadd.f32 %v1859, %v1897
        %v1914 = vadd.f32 %v1860, %v1898
        %v1915 = vadd.f32 %v1861, %v1899
        %v1916 = vadd.f32 %v1862, %v1900
        %v1917 = vld [vmem:[%s740 + $0x1] sm:$0xff]
        %v1918 = vld [vmem:[%s740 + $0x9] sm:$0xff]
        %v1919 = vld [vmem:[%s740 + $0x19] sm:$0xff]
        %v1920 = vld [vmem:[%s740 + $0x21] sm:$0xff]
        %v1921 = vld [vmem:[%s740 + $0x31] sm:$0xff]
        %v1922 = vld [vmem:[%s740 + $0x39] sm:$0xff]
        %v1923 = vld [vmem:[%s740 + $0x49] sm:$0xff]
        %v1924 = vld [vmem:[%s740 + $0x51] sm:$0xff]
        %v1925 = vld [vmem:[%s740 + $0x61] sm:$0xff]
        %v1926 = vld [vmem:[%s740 + $0x69] sm:$0xff]
        %v1927 = vld [vmem:[%s740 + $0x79] sm:$0xff]
        %v1928 = vld [vmem:[%s740 + $0x81] sm:$0xff]
        %v1929 = vld [vmem:[%s740 + $0x91] sm:$0xff]
        %v1930 = vld [vmem:[%s740 + $0x99] sm:$0xff]
        %v1931 = vld [vmem:[%s740 + $0xa9] sm:$0xff]
        %v1932 = vld [vmem:[%s740 + $0xb1] sm:$0xff]
        %v1933 = vld [vmem:[%s1879 + $0x1] sm:$0x1]
        %v1934 = vlaneseq
        %v1935 = vshrl.u32 %v1934, 7
        %v1936 = vsub.s32 0, %v1935
        %v1937 = vrot.slane %v1933, %v1936
        %v1938 = vmul.f32 %v1917, %v1937
        %v1939 = vmul.f32 %v1918, %v1937
        %v1940 = vmul.f32 %v1919, %v1937
        %v1941 = vmul.f32 %v1920, %v1937
        %v1942 = vmul.f32 %v1921, %v1937
        %v1943 = vmul.f32 %v1922, %v1937
        %v1944 = vmul.f32 %v1923, %v1937
        %v1945 = vmul.f32 %v1924, %v1937
        %v1946 = vmul.f32 %v1925, %v1937
        %v1947 = vmul.f32 %v1926, %v1937
        %v1948 = vmul.f32 %v1927, %v1937
        %v1949 = vmul.f32 %v1928, %v1937
        %v1950 = vmul.f32 %v1929, %v1937
        %v1951 = vmul.f32 %v1930, %v1937
        %v1952 = vmul.f32 %v1931, %v1937
        %v1953 = vmul.f32 %v1932, %v1937
        %v1954 = vadd.f32 %v1901, %v1938
        %v1955 = vadd.f32 %v1902, %v1939
        %v1956 = vadd.f32 %v1903, %v1940
        %v1957 = vadd.f32 %v1904, %v1941
        %v1958 = vadd.f32 %v1905, %v1942
        %v1959 = vadd.f32 %v1906, %v1943
        %v1960 = vadd.f32 %v1907, %v1944
        %v1961 = vadd.f32 %v1908, %v1945
        %v1962 = vadd.f32 %v1909, %v1946
        %v1963 = vadd.f32 %v1910, %v1947
        %v1964 = vadd.f32 %v1911, %v1948
        %v1965 = vadd.f32 %v1912, %v1949
        %v1966 = vadd.f32 %v1913, %v1950
        %v1967 = vadd.f32 %v1914, %v1951
        %v1968 = vadd.f32 %v1915, %v1952
        %v1969 = vadd.f32 %v1916, %v1953
        %v1970 = vld [vmem:[%s740 + $0x2] sm:$0xff]
        %v1971 = vld [vmem:[%s740 + $0xa] sm:$0xff]
        %v1972 = vld [vmem:[%s740 + $0x1a] sm:$0xff]
        %v1973 = vld [vmem:[%s740 + $0x22] sm:$0xff]
        %v1974 = vld [vmem:[%s740 + $0x32] sm:$0xff]
        %v1975 = vld [vmem:[%s740 + $0x3a] sm:$0xff]
        %v1976 = vld [vmem:[%s740 + $0x4a] sm:$0xff]
        %v1977 = vld [vmem:[%s740 + $0x52] sm:$0xff]
        %v1978 = vld [vmem:[%s740 + $0x62] sm:$0xff]
        %v1979 = vld [vmem:[%s740 + $0x6a] sm:$0xff]
        %v1980 = vld [vmem:[%s740 + $0x7a] sm:$0xff]
        %v1981 = vld [vmem:[%s740 + $0x82] sm:$0xff]
        %v1982 = vld [vmem:[%s740 + $0x92] sm:$0xff]
        %v1983 = vld [vmem:[%s740 + $0x9a] sm:$0xff]
        %v1984 = vld [vmem:[%s740 + $0xaa] sm:$0xff]
        %v1985 = vld [vmem:[%s740 + $0xb2] sm:$0xff]
        %v1986 = vld [vmem:[%s1879 + $0x2] sm:$0x1]
        %v1987 = vlaneseq
        %v1988 = vshrl.u32 %v1987, 7
        %v1989 = vsub.s32 0, %v1988
        %v1990 = vrot.slane %v1986, %v1989
        %v1991 = vmul.f32 %v1970, %v1990
        %v1992 = vmul.f32 %v1971, %v1990
        %v1993 = vmul.f32 %v1972, %v1990
        %v1994 = vmul.f32 %v1973, %v1990
        %v1995 = vmul.f32 %v1974, %v1990
        %v1996 = vmul.f32 %v1975, %v1990
        %v1997 = vmul.f32 %v1976, %v1990
        %v1998 = vmul.f32 %v1977, %v1990
        %v1999 = vmul.f32 %v1978, %v1990
        %v2000 = vmul.f32 %v1979, %v1990
        %v2001 = vmul.f32 %v1980, %v1990
        %v2002 = vmul.f32 %v1981, %v1990
        %v2003 = vmul.f32 %v1982, %v1990
        %v2004 = vmul.f32 %v1983, %v1990
        %v2005 = vmul.f32 %v1984, %v1990
        %v2006 = vmul.f32 %v1985, %v1990
        %v2007 = vadd.f32 %v1954, %v1991
        %v2008 = vadd.f32 %v1955, %v1992
        %v2009 = vadd.f32 %v1956, %v1993
        %v2010 = vadd.f32 %v1957, %v1994
        %v2011 = vadd.f32 %v1958, %v1995
        %v2012 = vadd.f32 %v1959, %v1996
        %v2013 = vadd.f32 %v1960, %v1997
        %v2014 = vadd.f32 %v1961, %v1998
        %v2015 = vadd.f32 %v1962, %v1999
        %v2016 = vadd.f32 %v1963, %v2000
        %v2017 = vadd.f32 %v1964, %v2001
        %v2018 = vadd.f32 %v1965, %v2002
        %v2019 = vadd.f32 %v1966, %v2003
        %v2020 = vadd.f32 %v1967, %v2004
        %v2021 = vadd.f32 %v1968, %v2005
        %v2022 = vadd.f32 %v1969, %v2006
        %v2023 = vld [vmem:[%s860] sm:$0xff]
        %v2024 = vld [vmem:[%s860 + $0x8] sm:$0xff]
        %v2025 = vld [vmem:[%s860 + $0x18] sm:$0xff]
        %v2026 = vld [vmem:[%s860 + $0x20] sm:$0xff]
        %v2027 = vld [vmem:[%s860 + $0x30] sm:$0xff]
        %v2028 = vld [vmem:[%s860 + $0x38] sm:$0xff]
        %v2029 = vld [vmem:[%s860 + $0x48] sm:$0xff]
        %v2030 = vld [vmem:[%s860 + $0x50] sm:$0xff]
        %v2031 = vld [vmem:[%s860 + $0x60] sm:$0xff]
        %v2032 = vld [vmem:[%s860 + $0x68] sm:$0xff]
        %v2033 = vld [vmem:[%s860 + $0x78] sm:$0xff]
        %v2034 = vld [vmem:[%s860 + $0x80] sm:$0xff]
        %v2035 = vld [vmem:[%s860 + $0x90] sm:$0xff]
        %v2036 = vld [vmem:[%s860 + $0x98] sm:$0xff]
        %v2037 = vld [vmem:[%s860 + $0xa8] sm:$0xff]
        %v2038 = vld [vmem:[%s860 + $0xb0] sm:$0xff]
        %s2039 = scalar_lea.vmem %s4, 8
        %v2040 = vld [vmem:[%s2039] sm:$0x1]
        %v2041 = vlaneseq
        %v2042 = vshrl.u32 %v2041, 7
        %v2043 = vsub.s32 0, %v2042
        %v2044 = vrot.slane %v2040, %v2043
        %v2045 = vmul.f32 %v2023, %v2044
        %v2046 = vmul.f32 %v2024, %v2044
        %v2047 = vmul.f32 %v2025, %v2044
        %v2048 = vmul.f32 %v2026, %v2044
        %v2049 = vmul.f32 %v2027, %v2044
        %v2050 = vmul.f32 %v2028, %v2044
        %v2051 = vmul.f32 %v2029, %v2044
        %v2052 = vmul.f32 %v2030, %v2044
        %v2053 = vmul.f32 %v2031, %v2044
        %v2054 = vmul.f32 %v2032, %v2044
        %v2055 = vmul.f32 %v2033, %v2044
        %v2056 = vmul.f32 %v2034, %v2044
        %v2057 = vmul.f32 %v2035, %v2044
        %v2058 = vmul.f32 %v2036, %v2044
        %v2059 = vmul.f32 %v2037, %v2044
        %v2060 = vmul.f32 %v2038, %v2044
        %v2061 = vadd.f32 %v2007, %v2045
        %v2062 = vadd.f32 %v2008, %v2046
        %v2063 = vadd.f32 %v2009, %v2047
        %v2064 = vadd.f32 %v2010, %v2048
        %v2065 = vadd.f32 %v2011, %v2049
        %v2066 = vadd.f32 %v2012, %v2050
        %v2067 = vadd.f32 %v2013, %v2051
        %v2068 = vadd.f32 %v2014, %v2052
        %v2069 = vadd.f32 %v2015, %v2053
        %v2070 = vadd.f32 %v2016, %v2054
        %v2071 = vadd.f32 %v2017, %v2055
        %v2072 = vadd.f32 %v2018, %v2056
        %v2073 = vadd.f32 %v2019, %v2057
        %v2074 = vadd.f32 %v2020, %v2058
        %v2075 = vadd.f32 %v2021, %v2059
        %v2076 = vadd.f32 %v2022, %v2060
        %v2077 = vld [vmem:[%s860 + $0x1] sm:$0xff]
        %v2078 = vld [vmem:[%s860 + $0x9] sm:$0xff]
        %v2079 = vld [vmem:[%s860 + $0x19] sm:$0xff]
        %v2080 = vld [vmem:[%s860 + $0x21] sm:$0xff]
        %v2081 = vld [vmem:[%s860 + $0x31] sm:$0xff]
        %v2082 = vld [vmem:[%s860 + $0x39] sm:$0xff]
        %v2083 = vld [vmem:[%s860 + $0x49] sm:$0xff]
        %v2084 = vld [vmem:[%s860 + $0x51] sm:$0xff]
        %v2085 = vld [vmem:[%s860 + $0x61] sm:$0xff]
        %v2086 = vld [vmem:[%s860 + $0x69] sm:$0xff]
        %v2087 = vld [vmem:[%s860 + $0x79] sm:$0xff]
        %v2088 = vld [vmem:[%s860 + $0x81] sm:$0xff]
        %v2089 = vld [vmem:[%s860 + $0x91] sm:$0xff]
        %v2090 = vld [vmem:[%s860 + $0x99] sm:$0xff]
        %v2091 = vld [vmem:[%s860 + $0xa9] sm:$0xff]
        %v2092 = vld [vmem:[%s860 + $0xb1] sm:$0xff]
        %v2093 = vld [vmem:[%s2039 + $0x1] sm:$0x1]
        %v2094 = vlaneseq
        %v2095 = vshrl.u32 %v2094, 7
        %v2096 = vsub.s32 0, %v2095
        %v2097 = vrot.slane %v2093, %v2096
        %v2098 = vmul.f32 %v2077, %v2097
        %v2099 = vmul.f32 %v2078, %v2097
        %v2100 = vmul.f32 %v2079, %v2097
        %v2101 = vmul.f32 %v2080, %v2097
        %v2102 = vmul.f32 %v2081, %v2097
        %v2103 = vmul.f32 %v2082, %v2097
        %v2104 = vmul.f32 %v2083, %v2097
        %v2105 = vmul.f32 %v2084, %v2097
        %v2106 = vmul.f32 %v2085, %v2097
        %v2107 = vmul.f32 %v2086, %v2097
        %v2108 = vmul.f32 %v2087, %v2097
        %v2109 = vmul.f32 %v2088, %v2097
        %v2110 = vmul.f32 %v2089, %v2097
        %v2111 = vmul.f32 %v2090, %v2097
        %v2112 = vmul.f32 %v2091, %v2097
        %v2113 = vmul.f32 %v2092, %v2097
        %v2114 = vadd.f32 %v2061, %v2098
        %v2115 = vadd.f32 %v2062, %v2099
        %v2116 = vadd.f32 %v2063, %v2100
        %v2117 = vadd.f32 %v2064, %v2101
        %v2118 = vadd.f32 %v2065, %v2102
        %v2119 = vadd.f32 %v2066, %v2103
        %v2120 = vadd.f32 %v2067, %v2104
        %v2121 = vadd.f32 %v2068, %v2105
        %v2122 = vadd.f32 %v2069, %v2106
        %v2123 = vadd.f32 %v2070, %v2107
        %v2124 = vadd.f32 %v2071, %v2108
        %v2125 = vadd.f32 %v2072, %v2109
        %v2126 = vadd.f32 %v2073, %v2110
        %v2127 = vadd.f32 %v2074, %v2111
        %v2128 = vadd.f32 %v2075, %v2112
        %v2129 = vadd.f32 %v2076, %v2113
        %v2130 = vld [vmem:[%s860 + $0x2] sm:$0xff]
        %v2131 = vld [vmem:[%s860 + $0xa] sm:$0xff]
        %v2132 = vld [vmem:[%s860 + $0x1a] sm:$0xff]
        %v2133 = vld [vmem:[%s860 + $0x22] sm:$0xff]
        %v2134 = vld [vmem:[%s860 + $0x32] sm:$0xff]
        %v2135 = vld [vmem:[%s860 + $0x3a] sm:$0xff]
        %v2136 = vld [vmem:[%s860 + $0x4a] sm:$0xff]
        %v2137 = vld [vmem:[%s860 + $0x52] sm:$0xff]
        %v2138 = vld [vmem:[%s860 + $0x62] sm:$0xff]
        %v2139 = vld [vmem:[%s860 + $0x6a] sm:$0xff]
        %v2140 = vld [vmem:[%s860 + $0x7a] sm:$0xff]
        %v2141 = vld [vmem:[%s860 + $0x82] sm:$0xff]
        %v2142 = vld [vmem:[%s860 + $0x92] sm:$0xff]
        %v2143 = vld [vmem:[%s860 + $0x9a] sm:$0xff]
        %v2144 = vld [vmem:[%s860 + $0xaa] sm:$0xff]
        %v2145 = vld [vmem:[%s860 + $0xb2] sm:$0xff]
        %v2146 = vld [vmem:[%s2039 + $0x2] sm:$0x1]
        %v2147 = vlaneseq
        %v2148 = vshrl.u32 %v2147, 7
        %v2149 = vsub.s32 0, %v2148
        %v2150 = vrot.slane %v2146, %v2149
        %v2151 = vmul.f32 %v2130, %v2150
        %v2152 = vmul.f32 %v2131, %v2150
        %v2153 = vmul.f32 %v2132, %v2150
        %v2154 = vmul.f32 %v2133, %v2150
        %v2155 = vmul.f32 %v2134, %v2150
        %v2156 = vmul.f32 %v2135, %v2150
        %v2157 = vmul.f32 %v2136, %v2150
        %v2158 = vmul.f32 %v2137, %v2150
        %v2159 = vmul.f32 %v2138, %v2150
        %v2160 = vmul.f32 %v2139, %v2150
        %v2161 = vmul.f32 %v2140, %v2150
        %v2162 = vmul.f32 %v2141, %v2150
        %v2163 = vmul.f32 %v2142, %v2150
        %v2164 = vmul.f32 %v2143, %v2150
        %v2165 = vmul.f32 %v2144, %v2150
        %v2166 = vmul.f32 %v2145, %v2150
        %v2167 = vadd.f32 %v2114, %v2151
        %v2168 = vadd.f32 %v2115, %v2152
        %v2169 = vadd.f32 %v2116, %v2153
        %v2170 = vadd.f32 %v2117, %v2154
        %v2171 = vadd.f32 %v2118, %v2155
        %v2172 = vadd.f32 %v2119, %v2156
        %v2173 = vadd.f32 %v2120, %v2157
        %v2174 = vadd.f32 %v2121, %v2158
        %v2175 = vadd.f32 %v2122, %v2159
        %v2176 = vadd.f32 %v2123, %v2160
        %v2177 = vadd.f32 %v2124, %v2161
        %v2178 = vadd.f32 %v2125, %v2162
        %v2179 = vadd.f32 %v2126, %v2163
        %v2180 = vadd.f32 %v2127, %v2164
        %v2181 = vadd.f32 %v2128, %v2165
        %v2182 = vadd.f32 %v2129, %v2166
        %v2183 = vld [vmem:[%s5] sm:$0x1]
        %v2185 = vlaneseq
        %v2186 = vshrl.u32 %v2185, 7
        %v2187 = vsub.s32 0, %v2186
        %v2188 = vrot.slane %v2183, %v2187
        %v2190 = vmul.f32 %v2167, %v2188
        %v2191 = vmul.f32 %v2168, %v2188
        %v2192 = vmul.f32 %v2169, %v2188
        %v2193 = vmul.f32 %v2170, %v2188
        %v2194 = vmul.f32 %v2171, %v2188
        %v2195 = vmul.f32 %v2172, %v2188
        %v2196 = vmul.f32 %v2173, %v2188
        %v2197 = vmul.f32 %v2174, %v2188
        %v2198 = vmul.f32 %v2175, %v2188
        %v2199 = vmul.f32 %v2176, %v2188
        %v2200 = vmul.f32 %v2177, %v2188
        %v2201 = vmul.f32 %v2178, %v2188
        %v2202 = vmul.f32 %v2179, %v2188
        %v2203 = vmul.f32 %v2180, %v2188
        %v2204 = vmul.f32 %v2181, %v2188
        %v2205 = vmul.f32 %v2182, %v2188
        %v2206 = vld [vmem:[%s6] sm:$0x1]
        %v2208 = vlaneseq
        %v2209 = vshrl.u32 %v2208, 7
        %v2210 = vsub.s32 0, %v2209
        %v2211 = vrot.slane %v2206, %v2210
        %v2213 = vadd.f32 %v2190, %v2211
        %v2214 = vadd.f32 %v2191, %v2211
        %v2215 = vadd.f32 %v2192, %v2211
        %v2216 = vadd.f32 %v2193, %v2211
        %v2217 = vadd.f32 %v2194, %v2211
        %v2218 = vadd.f32 %v2195, %v2211
        %v2219 = vadd.f32 %v2196, %v2211
        %v2220 = vadd.f32 %v2197, %v2211
        %v2221 = vadd.f32 %v2198, %v2211
        %v2222 = vadd.f32 %v2199, %v2211
        %v2223 = vadd.f32 %v2200, %v2211
        %v2224 = vadd.f32 %v2201, %v2211
        %v2225 = vadd.f32 %v2202, %v2211
        %v2226 = vadd.f32 %v2203, %v2211
        %v2227 = vadd.f32 %v2204, %v2211
        %v2228 = vadd.f32 %v2205, %v2211
        %v2229 = vmax.f32 %v2213, 0.0
        %v2230 = vmax.f32 %v2214, 0.0
        %v2231 = vmax.f32 %v2215, 0.0
        %v2232 = vmax.f32 %v2216, 0.0
        %v2233 = vmax.f32 %v2217, 0.0
        %v2234 = vmax.f32 %v2218, 0.0
        %v2235 = vmax.f32 %v2219, 0.0
        %v2236 = vmax.f32 %v2220, 0.0
        %v2237 = vmax.f32 %v2221, 0.0
        %v2238 = vmax.f32 %v2222, 0.0
        %v2239 = vmax.f32 %v2223, 0.0
        %v2240 = vmax.f32 %v2224, 0.0
        %v2241 = vmax.f32 %v2225, 0.0
        %v2242 = vmax.f32 %v2226, 0.0
        %v2243 = vmax.f32 %v2227, 0.0
        %v2244 = vmax.f32 %v2228, 0.0
        %v2245 = vmin.f32 %v2229, 6.0
        %v2246 = vmin.f32 %v2230, 6.0
        %v2247 = vmin.f32 %v2231, 6.0
        %v2248 = vmin.f32 %v2232, 6.0
        %v2249 = vmin.f32 %v2233, 6.0
        %v2250 = vmin.f32 %v2234, 6.0
        %v2251 = vmin.f32 %v2235, 6.0
        %v2252 = vmin.f32 %v2236, 6.0
        %v2253 = vmin.f32 %v2237, 6.0
        %v2254 = vmin.f32 %v2238, 6.0
        %v2255 = vmin.f32 %v2239, 6.0
        %v2256 = vmin.f32 %v2240, 6.0
        %v2257 = vmin.f32 %v2241, 6.0
        %v2258 = vmin.f32 %v2242, 6.0
        %v2259 = vmin.f32 %v2243, 6.0
        %v2260 = vmin.f32 %v2244, 6.0
        %v2261 = vld [vmem:[%s7] sm:$0xff]
        %v2262 = vld [vmem:[%s7 + $0x8] sm:$0xff]
        %v2263 = vld [vmem:[%s7 + $0x10] sm:$0xff]
        %v2264 = vld [vmem:[%s7 + $0x18] sm:$0xff]
        %v2265 = vld [vmem:[%s7 + $0x20] sm:$0xff]
        %v2266 = vld [vmem:[%s7 + $0x28] sm:$0xff]
        %v2267 = vld [vmem:[%s7 + $0x30] sm:$0xff]
        %v2268 = vld [vmem:[%s7 + $0x38] sm:$0xff]
        %v2269 = vld [vmem:[%s7 + $0x40] sm:$0xff]
        %v2270 = vld [vmem:[%s7 + $0x48] sm:$0xff]
        %v2271 = vld [vmem:[%s7 + $0x50] sm:$0xff]
        %v2272 = vld [vmem:[%s7 + $0x58] sm:$0xff]
        %v2273 = vld [vmem:[%s7 + $0x60] sm:$0xff]
        %v2274 = vld [vmem:[%s7 + $0x68] sm:$0xff]
        %v2275 = vld [vmem:[%s7 + $0x70] sm:$0xff]
        %v2276 = vld [vmem:[%s7 + $0x78] sm:$0xff]
        %v2277 = vld [vmem:[%s8] sm:$0x1]
        %v2278 = vld [vmem:[%s9] sm:$0x1]
        %2279 = vmatprep.subr.mxu0 0.0
        %2280 = vmatpush1.msra.mxu0 %v2261
        %2281 = vmatprep.subr.mxu0 0.0
        %2282 = vmatpush1.msra.mxu0 %v2262
        %2283 = vmatprep.subr.mxu0 0.0
        %2284 = vmatpush1.msra.mxu0 %v2263
        %2285 = vmatprep.subr.mxu0 0.0
        %2286 = vmatpush1.msra.mxu0 %v2264
        %2287 = vmatprep.subr.mxu0 0.0
        %2288 = vmatpush1.msra.mxu0 %v2265
        %2289 = vmatprep.subr.mxu0 0.0
        %2290 = vmatpush1.msra.mxu0 %v2266
        %2291 = vmatprep.subr.mxu0 0.0
        %2292 = vmatpush1.msra.mxu0 %v2267
        %2293 = vmatprep.subr.mxu0 0.0
        %2294 = vmatpush1.msra.mxu0 %v2268
        %2295 = vmatprep.subr.mxu0 0.0
        %2296 = vmatpush1.msra.mxu0 %v2269
        %2297 = vmatprep.subr.mxu0 0.0
        %2298 = vmatpush1.msra.mxu0 %v2270
        %2299 = vmatprep.subr.mxu0 0.0
        %2300 = vmatpush1.msra.mxu0 %v2271
        %2301 = vmatprep.subr.mxu0 0.0
        %2302 = vmatpush1.msra.mxu0 %v2272
        %2303 = vmatprep.subr.mxu0 0.0
        %2304 = vmatpush1.msra.mxu0 %v2273
        %2305 = vmatprep.subr.mxu0 0.0
        %2306 = vmatpush1.msra.mxu0 %v2274
        %2307 = vmatprep.subr.mxu0 0.0
        %2308 = vmatpush1.msra.mxu0 %v2275
        %2309 = vmatprep.subr.mxu0 0.0
        %2310 = vmatpush1.msra.mxu0 %v2276
        %2311 = vmatprep.subr.mxu0 0.0
        %2312 = vmatpush1.msra.mxu0 0.0
        %2313 = vmatprep.subr.mxu0 0.0
        %2314 = vmatpush1.msra.mxu0 0.0
        %2315 = vmatprep.subr.mxu0 0.0
        %2316 = vmatpush1.msra.mxu0 0.0
        %2317 = vmatprep.subr.mxu0 0.0
        %2318 = vmatpush1.msra.mxu0 0.0
        %2319 = vmatprep.subr.mxu0 0.0
        %2320 = vmatpush1.msra.mxu0 0.0
        %2321 = vmatprep.subr.mxu0 0.0
        %2322 = vmatpush1.msra.mxu0 0.0
        %2323 = vmatprep.subr.mxu0 0.0
        %2324 = vmatpush1.msra.mxu0 0.0
        %2325 = vmatprep.subr.mxu0 0.0
        %2326 = vmatpush1.msra.mxu0 0.0
        %2327 = vmatprep.subr.mxu0 0.0
        %2328 = vmatpush1.msra.mxu0 0.0
        %2329 = vmatprep.subr.mxu0 0.0
        %2330 = vmatpush1.msra.mxu0 0.0
        %2331 = vmatprep.subr.mxu0 0.0
        %2332 = vmatpush1.msra.mxu0 0.0
        %2333 = vmatprep.subr.mxu0 0.0
        %2334 = vmatpush1.msra.mxu0 0.0
        %2335 = vmatprep.subr.mxu0 0.0
        %2336 = vmatpush1.msra.mxu0 0.0
        %2337 = vmatprep.subr.mxu0 0.0
        %2338 = vmatpush1.msra.mxu0 0.0
        %2339 = vmatprep.subr.mxu0 0.0
        %2340 = vmatpush1.msra.mxu0 0.0
        %2341 = vmatprep.subr.mxu0 0.0
        %2342 = vmatpush1.msra.mxu0 0.0
        %2343 = vmatprep.mubr.f32.mxu0 0.0
        %2344 = vmatmul.mubr.f32.gmra.mrb[0].mxu0 %v2245
        %v2345 = vpop.f32.mrb[0].mxu0
        %v2346 = vadd.f32 0.0, %v2345
        %v2347 = vpop.f32.mrb[0].mxu0
        %2348 = vmatprep.mubr.f32.mxu0 0.0
        %2349 = vmatmul.mubr.f32.gmra.mrb[0].mxu0 %v2246
        %v2350 = vpop.f32.mrb[0].mxu0
        %v2351 = vadd.f32 0.0, %v2350
        %v2352 = vpop.f32.mrb[0].mxu0
        %2353 = vdwg.mxu0
        %v2355 = vlaneseq
        %v2356 = vshrl.u32 %v2355, 7
        %v2357 = vsub.s32 0, %v2356
        %v2358 = vrot.slane %v2277, %v2357
        %v2360 = vmul.f32 %v2346, %v2358
        %v2361 = vmul.f32 %v2351, %v2358
        %v2363 = vlaneseq
        %v2364 = vshrl.u32 %v2363, 7
        %v2365 = vsub.s32 0, %v2364
        %v2366 = vrot.slane %v2278, %v2365
        %v2368 = vadd.f32 %v2360, %v2366
        %v2369 = vadd.f32 %v2361, %v2366
        %v2370 = vld [vmem:[%s629 + $0x1] sm:$0xff]
        %v2371 = vld [vmem:[%s629 + $0x9] sm:$0xff]
        %v2372 = vadd.f32 %v2368, %v2370
        %v2373 = vadd.f32 %v2369, %v2371
        %2374 = vst [vmem:[%s325] sm:$0xff] %v2372
        %2375 = vst [vmem:[%s325 + $0x8] sm:$0xff] %v2373
        %2376 = vmatprep.subr.mxu0 0.0
        %2377 = vmatpush1.msra.mxu0 %v2261
        %2378 = vmatprep.subr.mxu0 0.0
        %2379 = vmatpush1.msra.mxu0 %v2262
        %2380 = vmatprep.subr.mxu0 0.0
        %2381 = vmatpush1.msra.mxu0 %v2263
        %2382 = vmatprep.subr.mxu0 0.0
        %2383 = vmatpush1.msra.mxu0 %v2264
        %2384 = vmatprep.subr.mxu0 0.0
        %2385 = vmatpush1.msra.mxu0 %v2265
        %2386 = vmatprep.subr.mxu0 0.0
        %2387 = vmatpush1.msra.mxu0 %v2266
        %2388 = vmatprep.subr.mxu0 0.0
        %2389 = vmatpush1.msra.mxu0 %v2267
        %2390 = vmatprep.subr.mxu0 0.0
        %2391 = vmatpush1.msra.mxu0 %v2268
        %2392 = vmatprep.subr.mxu0 0.0
        %2393 = vmatpush1.msra.mxu0 %v2269
        %2394 = vmatprep.subr.mxu0 0.0
        %2395 = vmatpush1.msra.mxu0 %v2270
        %2396 = vmatprep.subr.mxu0 0.0
        %2397 = vmatpush1.msra.mxu0 %v2271
        %2398 = vmatprep.subr.mxu0 0.0
        %2399 = vmatpush1.msra.mxu0 %v2272
        %2400 = vmatprep.subr.mxu0 0.0
        %2401 = vmatpush1.msra.mxu0 %v2273
        %2402 = vmatprep.subr.mxu0 0.0
        %2403 = vmatpush1.msra.mxu0 %v2274
        %2404 = vmatprep.subr.mxu0 0.0
        %2405 = vmatpush1.msra.mxu0 %v2275
        %2406 = vmatprep.subr.mxu0 0.0
        %2407 = vmatpush1.msra.mxu0 %v2276
        %2408 = vmatprep.subr.mxu0 0.0
        %2409 = vmatpush1.msra.mxu0 0.0
        %2410 = vmatprep.subr.mxu0 0.0
        %2411 = vmatpush1.msra.mxu0 0.0
        %2412 = vmatprep.subr.mxu0 0.0
        %2413 = vmatpush1.msra.mxu0 0.0
        %2414 = vmatprep.subr.mxu0 0.0
        %2415 = vmatpush1.msra.mxu0 0.0
        %2416 = vmatprep.subr.mxu0 0.0
        %2417 = vmatpush1.msra.mxu0 0.0
        %2418 = vmatprep.subr.mxu0 0.0
        %2419 = vmatpush1.msra.mxu0 0.0
        %2420 = vmatprep.subr.mxu0 0.0
        %2421 = vmatpush1.msra.mxu0 0.0
        %2422 = vmatprep.subr.mxu0 0.0
        %2423 = vmatpush1.msra.mxu0 0.0
        %2424 = vmatprep.subr.mxu0 0.0
        %2425 = vmatpush1.msra.mxu0 0.0
        %2426 = vmatprep.subr.mxu0 0.0
        %2427 = vmatpush1.msra.mxu0 0.0
        %2428 = vmatprep.subr.mxu0 0.0
        %2429 = vmatpush1.msra.mxu0 0.0
        %2430 = vmatprep.subr.mxu0 0.0
        %2431 = vmatpush1.msra.mxu0 0.0
        %2432 = vmatprep.subr.mxu0 0.0
        %2433 = vmatpush1.msra.mxu0 0.0
        %2434 = vmatprep.subr.mxu0 0.0
        %2435 = vmatpush1.msra.mxu0 0.0
        %2436 = vmatprep.subr.mxu0 0.0
        %2437 = vmatpush1.msra.mxu0 0.0
        %2438 = vmatprep.subr.mxu0 0.0
        %2439 = vmatpush1.msra.mxu0 0.0
        %2440 = vmatprep.mubr.f32.mxu0 0.0
        %2441 = vmatmul.mubr.f32.gmra.mrb[0].mxu0 %v2247
        %v2442 = vpop.f32.mrb[0].mxu0
        %v2443 = vadd.f32 0.0, %v2442
        %v2444 = vpop.f32.mrb[0].mxu0
        %2445 = vmatprep.mubr.f32.mxu0 0.0
        %2446 = vmatmul.mubr.f32.gmra.mrb[0].mxu0 %v2248
        %v2447 = vpop.f32.mrb[0].mxu0
        %v2448 = vadd.f32 0.0, %v2447
        %v2449 = vpop.f32.mrb[0].mxu0
        %2450 = vdwg.mxu0
        %v2451 = vmul.f32 %v2443, %v2358
        %v2452 = vmul.f32 %v2448, %v2358
        %v2453 = vadd.f32 %v2451, %v2366
        %v2454 = vadd.f32 %v2452, %v2366
        %v2455 = vld [vmem:[%s749 + $0x1] sm:$0xff]
        %v2456 = vld [vmem:[%s749 + $0x9] sm:$0xff]
        %v2457 = vadd.f32 %v2453, %v2455
        %v2458 = vadd.f32 %v2454, %v2456
        %s2459 = scalar_lea.vmem %s325, 16 [#allocation5]
        %2460 = vst [vmem:[%s2459] sm:$0xff] %v2457
        %2461 = vst [vmem:[%s2459 + $0x8] sm:$0xff] %v2458
        %2462 = vmatprep.subr.mxu0 0.0
        %2463 = vmatpush1.msra.mxu0 %v2261
        %2464 = vmatprep.subr.mxu0 0.0
        %2465 = vmatpush1.msra.mxu0 %v2262
        %2466 = vmatprep.subr.mxu0 0.0
        %2467 = vmatpush1.msra.mxu0 %v2263
        %2468 = vmatprep.subr.mxu0 0.0
        %2469 = vmatpush1.msra.mxu0 %v2264
        %2470 = vmatprep.subr.mxu0 0.0
        %2471 = vmatpush1.msra.mxu0 %v2265
        %2472 = vmatprep.subr.mxu0 0.0
        %2473 = vmatpush1.msra.mxu0 %v2266
        %2474 = vmatprep.subr.mxu0 0.0
        %2475 = vmatpush1.msra.mxu0 %v2267
        %2476 = vmatprep.subr.mxu0 0.0
        %2477 = vmatpush1.msra.mxu0 %v2268
        %2478 = vmatprep.subr.mxu0 0.0
        %2479 = vmatpush1.msra.mxu0 %v2269
        %2480 = vmatprep.subr.mxu0 0.0
        %2481 = vmatpush1.msra.mxu0 %v2270
        %2482 = vmatprep.subr.mxu0 0.0
        %2483 = vmatpush1.msra.mxu0 %v2271
        %2484 = vmatprep.subr.mxu0 0.0
        %2485 = vmatpush1.msra.mxu0 %v2272
        %2486 = vmatprep.subr.mxu0 0.0
        %2487 = vmatpush1.msra.mxu0 %v2273
        %2488 = vmatprep.subr.mxu0 0.0
        %2489 = vmatpush1.msra.mxu0 %v2274
        %2490 = vmatprep.subr.mxu0 0.0
        %2491 = vmatpush1.msra.mxu0 %v2275
        %2492 = vmatprep.subr.mxu0 0.0
        %2493 = vmatpush1.msra.mxu0 %v2276
        %2494 = vmatprep.subr.mxu0 0.0
        %2495 = vmatpush1.msra.mxu0 0.0
        %2496 = vmatprep.subr.mxu0 0.0
        %2497 = vmatpush1.msra.mxu0 0.0
        %2498 = vmatprep.subr.mxu0 0.0
        %2499 = vmatpush1.msra.mxu0 0.0
        %2500 = vmatprep.subr.mxu0 0.0
        %2501 = vmatpush1.msra.mxu0 0.0
        %2502 = vmatprep.subr.mxu0 0.0
        %2503 = vmatpush1.msra.mxu0 0.0
        %2504 = vmatprep.subr.mxu0 0.0
        %2505 = vmatpush1.msra.mxu0 0.0
        %2506 = vmatprep.subr.mxu0 0.0
        %2507 = vmatpush1.msra.mxu0 0.0
        %2508 = vmatprep.subr.mxu0 0.0
        %2509 = vmatpush1.msra.mxu0 0.0
        %2510 = vmatprep.subr.mxu0 0.0
        %2511 = vmatpush1.msra.mxu0 0.0
        %2512 = vmatprep.subr.mxu0 0.0
        %2513 = vmatpush1.msra.mxu0 0.0
        %2514 = vmatprep.subr.mxu0 0.0
        %2515 = vmatpush1.msra.mxu0 0.0
        %2516 = vmatprep.subr.mxu0 0.0
        %2517 = vmatpush1.msra.mxu0 0.0
        %2518 = vmatprep.subr.mxu0 0.0
        %2519 = vmatpush1.msra.mxu0 0.0
        %2520 = vmatprep.subr.mxu0 0.0
        %2521 = vmatpush1.msra.mxu0 0.0
        %2522 = vmatprep.subr.mxu0 0.0
        %2523 = vmatpush1.msra.mxu0 0.0
        %2524 = vmatprep.subr.mxu0 0.0
        %2525 = vmatpush1.msra.mxu0 0.0
        %2526 = vmatprep.mubr.f32.mxu0 0.0
        %2527 = vmatmul.mubr.f32.gmra.mrb[0].mxu0 %v2249
        %v2528 = vpop.f32.mrb[0].mxu0
        %v2529 = vadd.f32 0.0, %v2528
        %v2530 = vpop.f32.mrb[0].mxu0
        %2531 = vmatprep.mubr.f32.mxu0 0.0
        %2532 = vmatmul.mubr.f32.gmra.mrb[0].mxu0 %v2250
        %v2533 = vpop.f32.mrb[0].mxu0
        %v2534 = vadd.f32 0.0, %v2533
        %v2535 = vpop.f32.mrb[0].mxu0
        %2536 = vdwg.mxu0
        %v2537 = vmul.f32 %v2529, %v2358
        %v2538 = vmul.f32 %v2534, %v2358
        %v2539 = vadd.f32 %v2537, %v2366
        %v2540 = vadd.f32 %v2538, %v2366
        %v2541 = vld [vmem:[%s869 + $0x1] sm:$0xff]
        %v2542 = vld [vmem:[%s869 + $0x9] sm:$0xff]
        %v2543 = vadd.f32 %v2539, %v2541
        %v2544 = vadd.f32 %v2540, %v2542
        %s2545 = scalar_lea.vmem %s325, 32 [#allocation5]
        %2546 = vst [vmem:[%s2545] sm:$0xff] %v2543
        %2547 = vst [vmem:[%s2545 + $0x8] sm:$0xff] %v2544
        %2548 = vmatprep.subr.mxu0 0.0
        %2549 = vmatpush1.msra.mxu0 %v2261
        %2550 = vmatprep.subr.mxu0 0.0
        %2551 = vmatpush1.msra.mxu0 %v2262
        %2552 = vmatprep.subr.mxu0 0.0
        %2553 = vmatpush1.msra.mxu0 %v2263
        %2554 = vmatprep.subr.mxu0 0.0
        %2555 = vmatpush1.msra.mxu0 %v2264
        %2556 = vmatprep.subr.mxu0 0.0
        %2557 = vmatpush1.msra.mxu0 %v2265
        %2558 = vmatprep.subr.mxu0 0.0
        %2559 = vmatpush1.msra.mxu0 %v2266
        %2560 = vmatprep.subr.mxu0 0.0
        %2561 = vmatpush1.msra.mxu0 %v2267
        %2562 = vmatprep.subr.mxu0 0.0
        %2563 = vmatpush1.msra.mxu0 %v2268
        %2564 = vmatprep.subr.mxu0 0.0
        %2565 = vmatpush1.msra.mxu0 %v2269
        %2566 = vmatprep.subr.mxu0 0.0
        %2567 = vmatpush1.msra.mxu0 %v2270
        %2568 = vmatprep.subr.mxu0 0.0
        %2569 = vmatpush1.msra.mxu0 %v2271
        %2570 = vmatprep.subr.mxu0 0.0
        %2571 = vmatpush1.msra.mxu0 %v2272
        %2572 = vmatprep.subr.mxu0 0.0
        %2573 = vmatpush1.msra.mxu0 %v2273
        %2574 = vmatprep.subr.mxu0 0.0
        %2575 = vmatpush1.msra.mxu0 %v2274
        %2576 = vmatprep.subr.mxu0 0.0
        %2577 = vmatpush1.msra.mxu0 %v2275
        %2578 = vmatprep.subr.mxu0 0.0
        %2579 = vmatpush1.msra.mxu0 %v2276
        %2580 = vmatprep.subr.mxu0 0.0
        %2581 = vmatpush1.msra.mxu0 0.0
        %2582 = vmatprep.subr.mxu0 0.0
        %2583 = vmatpush1.msra.mxu0 0.0
        %2584 = vmatprep.subr.mxu0 0.0
        %2585 = vmatpush1.msra.mxu0 0.0
        %2586 = vmatprep.subr.mxu0 0.0
        %2587 = vmatpush1.msra.mxu0 0.0
        %2588 = vmatprep.subr.mxu0 0.0
        %2589 = vmatpush1.msra.mxu0 0.0
        %2590 = vmatprep.subr.mxu0 0.0
        %2591 = vmatpush1.msra.mxu0 0.0
        %2592 = vmatprep.subr.mxu0 0.0
        %2593 = vmatpush1.msra.mxu0 0.0
        %2594 = vmatprep.subr.mxu0 0.0
        %2595 = vmatpush1.msra.mxu0 0.0
        %2596 = vmatprep.subr.mxu0 0.0
        %2597 = vmatpush1.msra.mxu0 0.0
        %2598 = vmatprep.subr.mxu0 0.0
        %2599 = vmatpush1.msra.mxu0 0.0
        %2600 = vmatprep.subr.mxu0 0.0
        %2601 = vmatpush1.msra.mxu0 0.0
        %2602 = vmatprep.subr.mxu0 0.0
        %2603 = vmatpush1.msra.mxu0 0.0
        %2604 = vmatprep.subr.mxu0 0.0
        %2605 = vmatpush1.msra.mxu0 0.0
        %2606 = vmatprep.subr.mxu0 0.0
        %2607 = vmatpush1.msra.mxu0 0.0
        %2608 = vmatprep.subr.mxu0 0.0
        %2609 = vmatpush1.msra.mxu0 0.0
        %2610 = vmatprep.subr.mxu0 0.0
        %2611 = vmatpush1.msra.mxu0 0.0
        %2612 = vmatprep.mubr.f32.mxu0 0.0
        %2613 = vmatmul.mubr.f32.gmra.mrb[0].mxu0 %v2251
        %v2614 = vpop.f32.mrb[0].mxu0
        %v2615 = vadd.f32 0.0, %v2614
        %v2616 = vpop.f32.mrb[0].mxu0
        %2617 = vmatprep.mubr.f32.mxu0 0.0
        %2618 = vmatmul.mubr.f32.gmra.mrb[0].mxu0 %v2252
        %v2619 = vpop.f32.mrb[0].mxu0
        %v2620 = vadd.f32 0.0, %v2619
        %v2621 = vpop.f32.mrb[0].mxu0
        %2622 = vdwg.mxu0
        %v2623 = vmul.f32 %v2615, %v2358
        %v2624 = vmul.f32 %v2620, %v2358
        %v2625 = vadd.f32 %v2623, %v2366
        %v2626 = vadd.f32 %v2624, %v2366
        %v2627 = vld [vmem:[%s989 + $0x1] sm:$0xff]
        %v2628 = vld [vmem:[%s989 + $0x9] sm:$0xff]
        %v2629 = vadd.f32 %v2625, %v2627
        %v2630 = vadd.f32 %v2626, %v2628
        %s2631 = scalar_lea.vmem %s325, 48 [#allocation5]
        %2632 = vst [vmem:[%s2631] sm:$0xff] %v2629
        %2633 = vst [vmem:[%s2631 + $0x8] sm:$0xff] %v2630
        %2634 = vmatprep.subr.mxu0 0.0
        %2635 = vmatpush1.msra.mxu0 %v2261
        %2636 = vmatprep.subr.mxu0 0.0
        %2637 = vmatpush1.msra.mxu0 %v2262
        %2638 = vmatprep.subr.mxu0 0.0
        %2639 = vmatpush1.msra.mxu0 %v2263
        %2640 = vmatprep.subr.mxu0 0.0
        %2641 = vmatpush1.msra.mxu0 %v2264
        %2642 = vmatprep.subr.mxu0 0.0
        %2643 = vmatpush1.msra.mxu0 %v2265
        %2644 = vmatprep.subr.mxu0 0.0
        %2645 = vmatpush1.msra.mxu0 %v2266
        %2646 = vmatprep.subr.mxu0 0.0
        %2647 = vmatpush1.msra.mxu0 %v2267
        %2648 = vmatprep.subr.mxu0 0.0
        %2649 = vmatpush1.msra.mxu0 %v2268
        %2650 = vmatprep.subr.mxu0 0.0
        %2651 = vmatpush1.msra.mxu0 %v2269
        %2652 = vmatprep.subr.mxu0 0.0
        %2653 = vmatpush1.msra.mxu0 %v2270
        %2654 = vmatprep.subr.mxu0 0.0
        %2655 = vmatpush1.msra.mxu0 %v2271
        %2656 = vmatprep.subr.mxu0 0.0
        %2657 = vmatpush1.msra.mxu0 %v2272
        %2658 = vmatprep.subr.mxu0 0.0
        %2659 = vmatpush1.msra.mxu0 %v2273
        %2660 = vmatprep.subr.mxu0 0.0
        %2661 = vmatpush1.msra.mxu0 %v2274
        %2662 = vmatprep.subr.mxu0 0.0
        %2663 = vmatpush1.msra.mxu0 %v2275
        %2664 = vmatprep.subr.mxu0 0.0
        %2665 = vmatpush1.msra.mxu0 %v2276
        %2666 = vmatprep.subr.mxu0 0.0
        %2667 = vmatpush1.msra.mxu0 0.0
        %2668 = vmatprep.subr.mxu0 0.0
        %2669 = vmatpush1.msra.mxu0 0.0
        %2670 = vmatprep.subr.mxu0 0.0
        %2671 = vmatpush1.msra.mxu0 0.0
        %2672 = vmatprep.subr.mxu0 0.0
        %2673 = vmatpush1.msra.mxu0 0.0
        %2674 = vmatprep.subr.mxu0 0.0
        %2675 = vmatpush1.msra.mxu0 0.0
        %2676 = vmatprep.subr.mxu0 0.0
        %2677 = vmatpush1.msra.mxu0 0.0
        %2678 = vmatprep.subr.mxu0 0.0
        %2679 = vmatpush1.msra.mxu0 0.0
        %2680 = vmatprep.subr.mxu0 0.0
        %2681 = vmatpush1.msra.mxu0 0.0
        %2682 = vmatprep.subr.mxu0 0.0
        %2683 = vmatpush1.msra.mxu0 0.0
        %2684 = vmatprep.subr.mxu0 0.0
        %2685 = vmatpush1.msra.mxu0 0.0
        %2686 = vmatprep.subr.mxu0 0.0
        %2687 = vmatpush1.msra.mxu0 0.0
        %2688 = vmatprep.subr.mxu0 0.0
        %2689 = vmatpush1.msra.mxu0 0.0
        %2690 = vmatprep.subr.mxu0 0.0
        %2691 = vmatpush1.msra.mxu0 0.0
        %2692 = vmatprep.subr.mxu0 0.0
        %2693 = vmatpush1.msra.mxu0 0.0
        %2694 = vmatprep.subr.mxu0 0.0
        %2695 = vmatpush1.msra.mxu0 0.0
        %2696 = vmatprep.subr.mxu0 0.0
        %2697 = vmatpush1.msra.mxu0 0.0
        %2698 = vmatprep.mubr.f32.mxu0 0.0
        %2699 = vmatmul.mubr.f32.gmra.mrb[0].mxu0 %v2253
        %v2700 = vpop.f32.mrb[0].mxu0
        %v2701 = vadd.f32 0.0, %v2700
        %v2702 = vpop.f32.mrb[0].mxu0
        %2703 = vmatprep.mubr.f32.mxu0 0.0
        %2704 = vmatmul.mubr.f32.gmra.mrb[0].mxu0 %v2254
        %v2705 = vpop.f32.mrb[0].mxu0
        %v2706 = vadd.f32 0.0, %v2705
        %v2707 = vpop.f32.mrb[0].mxu0
        %2708 = vdwg.mxu0
        %v2709 = vmul.f32 %v2701, %v2358
        %v2710 = vmul.f32 %v2706, %v2358
        %v2711 = vadd.f32 %v2709, %v2366
        %v2712 = vadd.f32 %v2710, %v2366
        %v2713 = vld [vmem:[%s1109 + $0x1] sm:$0xff]
        %v2714 = vld [vmem:[%s1109 + $0x9] sm:$0xff]
        %v2715 = vadd.f32 %v2711, %v2713
        %v2716 = vadd.f32 %v2712, %v2714
        %s2717 = scalar_lea.vmem %s325, 64 [#allocation5]
        %2718 = vst [vmem:[%s2717] sm:$0xff] %v2715
        %2719 = vst [vmem:[%s2717 + $0x8] sm:$0xff] %v2716
        %2720 = vmatprep.subr.mxu0 0.0
        %2721 = vmatpush1.msra.mxu0 %v2261
        %2722 = vmatprep.subr.mxu0 0.0
        %2723 = vmatpush1.msra.mxu0 %v2262
        %2724 = vmatprep.subr.mxu0 0.0
        %2725 = vmatpush1.msra.mxu0 %v2263
        %2726 = vmatprep.subr.mxu0 0.0
        %2727 = vmatpush1.msra.mxu0 %v2264
        %2728 = vmatprep.subr.mxu0 0.0
        %2729 = vmatpush1.msra.mxu0 %v2265
        %2730 = vmatprep.subr.mxu0 0.0
        %2731 = vmatpush1.msra.mxu0 %v2266
        %2732 = vmatprep.subr.mxu0 0.0
        %2733 = vmatpush1.msra.mxu0 %v2267
        %2734 = vmatprep.subr.mxu0 0.0
        %2735 = vmatpush1.msra.mxu0 %v2268
        %2736 = vmatprep.subr.mxu0 0.0
        %2737 = vmatpush1.msra.mxu0 %v2269
        %2738 = vmatprep.subr.mxu0 0.0
        %2739 = vmatpush1.msra.mxu0 %v2270
        %2740 = vmatprep.subr.mxu0 0.0
        %2741 = vmatpush1.msra.mxu0 %v2271
        %2742 = vmatprep.subr.mxu0 0.0
        %2743 = vmatpush1.msra.mxu0 %v2272
        %2744 = vmatprep.subr.mxu0 0.0
        %2745 = vmatpush1.msra.mxu0 %v2273
        %2746 = vmatprep.subr.mxu0 0.0
        %2747 = vmatpush1.msra.mxu0 %v2274
        %2748 = vmatprep.subr.mxu0 0.0
        %2749 = vmatpush1.msra.mxu0 %v2275
        %2750 = vmatprep.subr.mxu0 0.0
        %2751 = vmatpush1.msra.mxu0 %v2276
        %2752 = vmatprep.subr.mxu0 0.0
        %2753 = vmatpush1.msra.mxu0 0.0
        %2754 = vmatprep.subr.mxu0 0.0
        %2755 = vmatpush1.msra.mxu0 0.0
        %2756 = vmatprep.subr.mxu0 0.0
        %2757 = vmatpush1.msra.mxu0 0.0
        %2758 = vmatprep.subr.mxu0 0.0
        %2759 = vmatpush1.msra.mxu0 0.0
        %2760 = vmatprep.subr.mxu0 0.0
        %2761 = vmatpush1.msra.mxu0 0.0
        %2762 = vmatprep.subr.mxu0 0.0
        %2763 = vmatpush1.msra.mxu0 0.0
        %2764 = vmatprep.subr.mxu0 0.0
        %2765 = vmatpush1.msra.mxu0 0.0
        %2766 = vmatprep.subr.mxu0 0.0
        %2767 = vmatpush1.msra.mxu0 0.0
        %2768 = vmatprep.subr.mxu0 0.0
        %2769 = vmatpush1.msra.mxu0 0.0
        %2770 = vmatprep.subr.mxu0 0.0
        %2771 = vmatpush1.msra.mxu0 0.0
        %2772 = vmatprep.subr.mxu0 0.0
        %2773 = vmatpush1.msra.mxu0 0.0
        %2774 = vmatprep.subr.mxu0 0.0
        %2775 = vmatpush1.msra.mxu0 0.0
        %2776 = vmatprep.subr.mxu0 0.0
        %2777 = vmatpush1.msra.mxu0 0.0
        %2778 = vmatprep.subr.mxu0 0.0
        %2779 = vmatpush1.msra.mxu0 0.0
        %2780 = vmatprep.subr.mxu0 0.0
        %2781 = vmatpush1.msra.mxu0 0.0
        %2782 = vmatprep.subr.mxu0 0.0
        %2783 = vmatpush1.msra.mxu0 0.0
        %2784 = vmatprep.mubr.f32.mxu0 0.0
        %2785 = vmatmul.mubr.f32.gmra.mrb[0].mxu0 %v2255
        %v2786 = vpop.f32.mrb[0].mxu0
        %v2787 = vadd.f32 0.0, %v2786
        %v2788 = vpop.f32.mrb[0].mxu0
        %2789 = vmatprep.mubr.f32.mxu0 0.0
        %2790 = vmatmul.mubr.f32.gmra.mrb[0].mxu0 %v2256
        %v2791 = vpop.f32.mrb[0].mxu0
        %v2792 = vadd.f32 0.0, %v2791
        %v2793 = vpop.f32.mrb[0].mxu0
        %2794 = vdwg.mxu0
        %v2795 = vmul.f32 %v2787, %v2358
        %v2796 = vmul.f32 %v2792, %v2358
        %v2797 = vadd.f32 %v2795, %v2366
        %v2798 = vadd.f32 %v2796, %v2366
        %v2799 = vld [vmem:[%s1229 + $0x1] sm:$0xff]
        %v2800 = vld [vmem:[%s1229 + $0x9] sm:$0xff]
        %v2801 = vadd.f32 %v2797, %v2799
        %v2802 = vadd.f32 %v2798, %v2800
        %s2803 = scalar_lea.vmem %s325, 80 [#allocation5]
        %2804 = vst [vmem:[%s2803] sm:$0xff] %v2801
        %2805 = vst [vmem:[%s2803 + $0x8] sm:$0xff] %v2802
        %2806 = vmatprep.subr.mxu0 0.0
        %2807 = vmatpush1.msra.mxu0 %v2261
        %2808 = vmatprep.subr.mxu0 0.0
        %2809 = vmatpush1.msra.mxu0 %v2262
        %2810 = vmatprep.subr.mxu0 0.0
        %2811 = vmatpush1.msra.mxu0 %v2263
        %2812 = vmatprep.subr.mxu0 0.0
        %2813 = vmatpush1.msra.mxu0 %v2264
        %2814 = vmatprep.subr.mxu0 0.0
        %2815 = vmatpush1.msra.mxu0 %v2265
        %2816 = vmatprep.subr.mxu0 0.0
        %2817 = vmatpush1.msra.mxu0 %v2266
        %2818 = vmatprep.subr.mxu0 0.0
        %2819 = vmatpush1.msra.mxu0 %v2267
        %2820 = vmatprep.subr.mxu0 0.0
        %2821 = vmatpush1.msra.mxu0 %v2268
        %2822 = vmatprep.subr.mxu0 0.0
        %2823 = vmatpush1.msra.mxu0 %v2269
        %2824 = vmatprep.subr.mxu0 0.0
        %2825 = vmatpush1.msra.mxu0 %v2270
        %2826 = vmatprep.subr.mxu0 0.0
        %2827 = vmatpush1.msra.mxu0 %v2271
        %2828 = vmatprep.subr.mxu0 0.0
        %2829 = vmatpush1.msra.mxu0 %v2272
        %2830 = vmatprep.subr.mxu0 0.0
        %2831 = vmatpush1.msra.mxu0 %v2273
        %2832 = vmatprep.subr.mxu0 0.0
        %2833 = vmatpush1.msra.mxu0 %v2274
        %2834 = vmatprep.subr.mxu0 0.0
        %2835 = vmatpush1.msra.mxu0 %v2275
        %2836 = vmatprep.subr.mxu0 0.0
        %2837 = vmatpush1.msra.mxu0 %v2276
        %2838 = vmatprep.subr.mxu0 0.0
        %2839 = vmatpush1.msra.mxu0 0.0
        %2840 = vmatprep.subr.mxu0 0.0
        %2841 = vmatpush1.msra.mxu0 0.0
        %2842 = vmatprep.subr.mxu0 0.0
        %2843 = vmatpush1.msra.mxu0 0.0
        %2844 = vmatprep.subr.mxu0 0.0
        %2845 = vmatpush1.msra.mxu0 0.0
        %2846 = vmatprep.subr.mxu0 0.0
        %2847 = vmatpush1.msra.mxu0 0.0
        %2848 = vmatprep.subr.mxu0 0.0
        %2849 = vmatpush1.msra.mxu0 0.0
        %2850 = vmatprep.subr.mxu0 0.0
        %2851 = vmatpush1.msra.mxu0 0.0
        %2852 = vmatprep.subr.mxu0 0.0
        %2853 = vmatpush1.msra.mxu0 0.0
        %2854 = vmatprep.subr.mxu0 0.0
        %2855 = vmatpush1.msra.mxu0 0.0
        %2856 = vmatprep.subr.mxu0 0.0
        %2857 = vmatpush1.msra.mxu0 0.0
        %2858 = vmatprep.subr.mxu0 0.0
        %2859 = vmatpush1.msra.mxu0 0.0
        %2860 = vmatprep.subr.mxu0 0.0
        %2861 = vmatpush1.msra.mxu0 0.0
        %2862 = vmatprep.subr.mxu0 0.0
        %2863 = vmatpush1.msra.mxu0 0.0
        %2864 = vmatprep.subr.mxu0 0.0
        %2865 = vmatpush1.msra.mxu0 0.0
        %2866 = vmatprep.subr.mxu0 0.0
        %2867 = vmatpush1.msra.mxu0 0.0
        %2868 = vmatprep.subr.mxu0 0.0
        %2869 = vmatpush1.msra.mxu0 0.0
        %2870 = vmatprep.mubr.f32.mxu0 0.0
        %2871 = vmatmul.mubr.f32.gmra.mrb[0].mxu0 %v2257
        %v2872 = vpop.f32.mrb[0].mxu0
        %v2873 = vadd.f32 0.0, %v2872
        %v2874 = vpop.f32.mrb[0].mxu0
        %2875 = vmatprep.mubr.f32.mxu0 0.0
        %2876 = vmatmul.mubr.f32.gmra.mrb[0].mxu0 %v2258
        %v2877 = vpop.f32.mrb[0].mxu0
        %v2878 = vadd.f32 0.0, %v2877
        %v2879 = vpop.f32.mrb[0].mxu0
        %2880 = vdwg.mxu0
        %v2881 = vmul.f32 %v2873, %v2358
        %v2882 = vmul.f32 %v2878, %v2358
        %v2883 = vadd.f32 %v2881, %v2366
        %v2884 = vadd.f32 %v2882, %v2366
        %v2885 = vld [vmem:[%s1349 + $0x1] sm:$0xff]
        %v2886 = vld [vmem:[%s1349 + $0x9] sm:$0xff]
        %v2887 = vadd.f32 %v2883, %v2885
        %v2888 = vadd.f32 %v2884, %v2886
        %s2889 = scalar_lea.vmem %s325, 96 [#allocation5]
        %2890 = vst [vmem:[%s2889] sm:$0xff] %v2887
        %2891 = vst [vmem:[%s2889 + $0x8] sm:$0xff] %v2888
        %2892 = vmatprep.subr.mxu0 0.0
        %2893 = vmatpush1.msra.mxu0 %v2261
        %2894 = vmatprep.subr.mxu0 0.0
        %2895 = vmatpush1.msra.mxu0 %v2262
        %2896 = vmatprep.subr.mxu0 0.0
        %2897 = vmatpush1.msra.mxu0 %v2263
        %2898 = vmatprep.subr.mxu0 0.0
        %2899 = vmatpush1.msra.mxu0 %v2264
        %2900 = vmatprep.subr.mxu0 0.0
        %2901 = vmatpush1.msra.mxu0 %v2265
        %2902 = vmatprep.subr.mxu0 0.0
        %2903 = vmatpush1.msra.mxu0 %v2266
        %2904 = vmatprep.subr.mxu0 0.0
        %2905 = vmatpush1.msra.mxu0 %v2267
        %2906 = vmatprep.subr.mxu0 0.0
        %2907 = vmatpush1.msra.mxu0 %v2268
        %2908 = vmatprep.subr.mxu0 0.0
        %2909 = vmatpush1.msra.mxu0 %v2269
        %2910 = vmatprep.subr.mxu0 0.0
        %2911 = vmatpush1.msra.mxu0 %v2270
        %2912 = vmatprep.subr.mxu0 0.0
        %2913 = vmatpush1.msra.mxu0 %v2271
        %2914 = vmatprep.subr.mxu0 0.0
        %2915 = vmatpush1.msra.mxu0 %v2272
        %2916 = vmatprep.subr.mxu0 0.0
        %2917 = vmatpush1.msra.mxu0 %v2273
        %2918 = vmatprep.subr.mxu0 0.0
        %2919 = vmatpush1.msra.mxu0 %v2274
        %2920 = vmatprep.subr.mxu0 0.0
        %2921 = vmatpush1.msra.mxu0 %v2275
        %2922 = vmatprep.subr.mxu0 0.0
        %2923 = vmatpush1.msra.mxu0 %v2276
        %2924 = vmatprep.subr.mxu0 0.0
        %2925 = vmatpush1.msra.mxu0 0.0
        %2926 = vmatprep.subr.mxu0 0.0
        %2927 = vmatpush1.msra.mxu0 0.0
        %2928 = vmatprep.subr.mxu0 0.0
        %2929 = vmatpush1.msra.mxu0 0.0
        %2930 = vmatprep.subr.mxu0 0.0
        %2931 = vmatpush1.msra.mxu0 0.0
        %2932 = vmatprep.subr.mxu0 0.0
        %2933 = vmatpush1.msra.mxu0 0.0
        %2934 = vmatprep.subr.mxu0 0.0
        %2935 = vmatpush1.msra.mxu0 0.0
        %2936 = vmatprep.subr.mxu0 0.0
        %2937 = vmatpush1.msra.mxu0 0.0
        %2938 = vmatprep.subr.mxu0 0.0
        %2939 = vmatpush1.msra.mxu0 0.0
        %2940 = vmatprep.subr.mxu0 0.0
        %2941 = vmatpush1.msra.mxu0 0.0
        %2942 = vmatprep.subr.mxu0 0.0
        %2943 = vmatpush1.msra.mxu0 0.0
        %2944 = vmatprep.subr.mxu0 0.0
        %2945 = vmatpush1.msra.mxu0 0.0
        %2946 = vmatprep.subr.mxu0 0.0
        %2947 = vmatpush1.msra.mxu0 0.0
        %2948 = vmatprep.subr.mxu0 0.0
        %2949 = vmatpush1.msra.mxu0 0.0
        %2950 = vmatprep.subr.mxu0 0.0
        %2951 = vmatpush1.msra.mxu0 0.0
        %2952 = vmatprep.subr.mxu0 0.0
        %2953 = vmatpush1.msra.mxu0 0.0
        %2954 = vmatprep.subr.mxu0 0.0
        %2955 = vmatpush1.msra.mxu0 0.0
        %2956 = vmatprep.mubr.f32.mxu0 0.0
        %2957 = vmatmul.mubr.f32.gmra.mrb[0].mxu0 %v2259
        %v2958 = vpop.f32.mrb[0].mxu0
        %v2959 = vadd.f32 0.0, %v2958
        %v2960 = vpop.f32.mrb[0].mxu0
        %2961 = vmatprep.mubr.f32.mxu0 0.0
        %2962 = vmatmul.mubr.f32.gmra.mrb[0].mxu0 %v2260
        %v2963 = vpop.f32.mrb[0].mxu0
        %v2964 = vadd.f32 0.0, %v2963
        %v2965 = vpop.f32.mrb[0].mxu0
        %2966 = vdwg.mxu0
        %v2967 = vmul.f32 %v2959, %v2358
        %v2968 = vmul.f32 %v2964, %v2358
        %v2969 = vadd.f32 %v2967, %v2366
        %v2970 = vadd.f32 %v2968, %v2366
        %v2971 = vld [vmem:[%s1469 + $0x1] sm:$0xff]
        %v2972 = vld [vmem:[%s1469 + $0x9] sm:$0xff]
        %v2973 = vadd.f32 %v2969, %v2971
        %v2974 = vadd.f32 %v2970, %v2972
        %s2975 = scalar_lea.vmem %s325, 112 [#allocation5]
        %2976 = vst [vmem:[%s2975] sm:$0xff] %v2973
        %2977 = vst [vmem:[%s2975 + $0x8] sm:$0xff] %v2974
        %s2978 = sand.u32 %s235, 1
        %s2979 = scalar_lea.sflag [#allocation6], %s2978
        %s2980 = sand.u32 %s235, 1
        %s2981 = smul.addr %s2980, 128
        %s2982 = scalar_lea.vmem [#allocation5], %s2981
        // Predicated region
        $region94: #{tpu_custom_call.1} parent=55 // pred_check
          %p2983 = pneg %p245
        $region95: #{tpu_custom_call.1} parent=55 // pred_check_branch
          %2985 = sbr.rel (%p2983) target = $region97
        $region96: #{tpu_custom_call.1} parent=55 // pred_region
          %s2986 = smul.u32 8, %s29
          %s2988 = ssub.s32 2048, 2048
          %2989 = vsyncadd %s2979, %s2988
          %s2990 = smul.addr %s2986, 2
          %s2991 = smul.addr %s28, 32
          %s2992 = sadd.s32 %s2990, %s2991
          %s2993 = smul.addr %s2992, 128
          %s2994 = scalar_lea.hbm %s10, %s2993
          %s2995 = sshll.u32 %s2982, 4
          %s2996 = int_to_ptr.vmem [resolvable:$true] %s2995
          %3001 = dma.vmem_to_hbm [thread:$0]  %s2996, 2048, %s2994, %s2979, 128, 128, 8
        $region97: #{tpu_custom_call.1} parent=55 // pred_fallthru
          _
      $region56: #{tpu_custom_call.1} parent=5 // pred_fallthru
        _
      %p3002 = scmp.le.s32.totalorder 2, %s19
      // Predicated region
      $region98: #{tpu_custom_call.1} parent=5 // pred_check
        %p3003 = pneg %p3002
      $region99: #{tpu_custom_call.1} parent=5 // pred_check_branch
        %3005 = sbr.rel (%p3003) target = $region101
      $region100: #{tpu_custom_call.1} parent=5 // pred_region
        %s3006 = ssub.s32 %s19, 2
        // Predicated region
        $region102: #{tpu_custom_call.1} parent=100 // pred_check
          %p3007 = pneg %p251
        $region103: #{tpu_custom_call.1} parent=100 // pred_check_branch
          %3009 = sbr.rel (%p3007) target = $region105
        $region104: #{tpu_custom_call.1} parent=100 // pred_region
          %s3010 = sand.u32 %s236, 1
          %s3011 = scalar_lea.sflag [#allocation6], %s3010
          %s3012 = sand.u32 %s236, 1
          %s3013 = smul.addr %s3012, 128
          %s3014 = scalar_lea.vmem [#allocation5], %s3013
          %3015 = dma.done %s3011, 2048
        $region105: #{tpu_custom_call.1} parent=100 // pred_fallthru
          _
      $region101: #{tpu_custom_call.1} parent=5 // pred_fallthru
        _
    $region6: #{tpu_custom_call.1} parent=1 // loop_footer
      %s23 = sadd.s32 1, %s19
    $region7: #{tpu_custom_call.1} parent=1 // loop_footer_branch
      %18 = sbr.rel target = $region3
    $region8: #{tpu_custom_call.1} parent=1 // loop_exit
      _
    %3016 = vsyncpa [#allocation6], 1
    %s3017 = scalar_lea.sflag [#allocation6], 1
    %3018 = vsyncpa %s3017, 1
  %3019 = vsyncmov [#allocation4]
  %s3020 = vpop.sfrf %3019
  %p3021 = scmp.eq.s32.totalorder %s3020, 0
  %p3022 = pneg %p3021
  %3024 = shalt.err (%p3022)

</llo_original>
